<compile_context>
chip_gen: v6e
topology: v6e:2x2x1
jax: 0.10.0
libtpu: 0.0.40
codegen_flags: <defaults>
</compile_context>

<pallas_src>
import math
import jax
import jax.numpy as jnp
from jax import lax
from jax.experimental import pallas as pl
from jax.experimental.pallas import tpu as pltpu


# ---------------------------------------------------------------------------
# helpers
# ---------------------------------------------------------------------------
def _sigmoid(x):
    return 1.0 / (1.0 + jnp.exp(-x))


def _softplus(x):
    return jnp.maximum(x, 0.0) + jnp.log(1.0 + jnp.exp(-jnp.abs(x)))


def _gelu_tanh(x):
    # TODO(synk): reference nn.GELU() is exact (erf); tanh approximation used in-kernel
    #             (EUP tanh), expect ~1e-3 numerical difference vs erf GELU.
    c = 0.7978845608028654  # sqrt(2/pi)
    return 0.5 * x * (1.0 + jnp.tanh(c * (x + 0.044715 * x * x * x)))


def _pick_tb(bsz, seqlen, target_rows=256):
    """Largest divisor of bsz such that tb*seqlen stays within a modest row budget."""
    tb = 1
    for cand in range(1, bsz + 1):
        if bsz % cand == 0 and cand * seqlen <= max(seqlen, target_rows):
            tb = cand
    return tb


# ---------------------------------------------------------------------------
# fused block-stack kernel: one grid step = (batch tile, layer)
# ---------------------------------------------------------------------------
def _mamba_stack_kernel(x_ref, ln_g_ref, ln_b_ref, in_w_ref, conv_w_ref,
                        conv_b_ref, comb_w_ref, dt_b_ref, a_t_ref, d_ref,
                        out_w_ref, glu_w_ref, glu_b_ref, pool_ref,
                        act_scr, da_scr, dbu_scr, c_scr, y_scr):
    layer = pl.program_id(1)
    n_layers = pl.num_programs(1)

    tb, seqlen, hdim = x_ref.shape
    kconv, d_inner = conv_w_ref.shape[1], conv_w_ref.shape[2]
    nstate = a_t_ref.shape[1]
    m_rows = tb * seqlen

    # ---- layer 0: load this batch tile into the resident f32 activation scratch ----
    @pl.when(layer == 0)
    def _():
        act_scr[...] = x_ref[...].reshape(m_rows, hdim).astype(jnp.float32)

    x = act_scr[...]                                              # (M, H) f32 - residual skip

    # ---- LayerNorm (prenorm=True) ----
    mu = jnp.mean(x, axis=-1, keepdims=True)
    var = jnp.mean(jnp.square(x - mu), axis=-1, keepdims=True)
    xn = (x - mu) * lax.rsqrt(var + 1e-5)
    xn = xn * ln_g_ref[0].astype(jnp.float32) + ln_b_ref[0].astype(jnp.float32)

    # ---- in_proj (bf16 MXU), split x / z, gate computed early to shorten live range ----
    xz = jnp.dot(xn.astype(jnp.bfloat16), in_w_ref[0],
                 preferred_element_type=jnp.float32)              # (M, 2*Din)
    x_in = xz[:, :d_inner]
    silu_z = xz[:, d_inner:] * _sigmoid(xz[:, d_inner:])

    # ---- causal depthwise conv: K XLU rolls + iota mask (no concatenate copies), + SiLU ----
    w = conv_w_ref[0].astype(jnp.float32)                         # (K, Din)
    l_pos = lax.broadcasted_iota(jnp.int32, (tb, seqlen, d_inner), 1).reshape(m_rows, d_inner)
    acc = x_in * w[kconv - 1:kconv, :]                            # shift-0 tap
    for j in range(kconv - 1):
        shift = kconv - 1 - j
        if shift >= seqlen:
            continue
        xs = pltpu.roll(x_in, shift, axis=0)
        xs = jnp.where(l_pos >= shift, xs, 0.0)                   # causal pad / no batch leakage
        acc = acc + xs * w[j:j + 1, :]
    acc = acc + conv_b_ref[0].astype(jnp.float32)
    xc = acc * _sigmoid(acc)                                      # (M, Din)

    # ---- fused x_proj + dt_proj matmul (dt_proj folded into the weight offline) ----
    dtbc = jnp.dot(xc.astype(jnp.bfloat16), comb_w_ref[0],
                   preferred_element_type=jnp.float32)            # (M, Din + 2N)
    dt = _softplus(dtbc[:, :d_inner] + dt_b_ref[0].astype(jnp.float32))

    # ---- hoist everything that does not depend on h off the serial chain (vectorized) ----
    a_t = a_t_ref[0].astype(jnp.float32)                          # (N, Din) == A.T
    b3 = dtbc[:, d_inner:d_inner + nstate].reshape(tb, seqlen, nstate)
    c3 = dtbc[:, d_inner + nstate:].reshape(tb, seqlen, nstate)
    eye_n = (lax.broadcasted_iota(jnp.int32, (nstate, nstate), 0) ==
             lax.broadcasted_iota(jnp.int32, (nstate, nstate), 1)).astype(jnp.float32)
    # row -> column transpose of B/C (once for the whole sequence)
    b_col = jnp.sum(b3[:, :, None, :] * eye_n, axis=-1, keepdims=True)   # (TB, L, N, 1)
    c_col = jnp.sum(c3[:, :, None, :] * eye_n, axis=-1, keepdims=True)   # (TB, L, N, 1)

    da_scr[...] = jnp.exp(dt.reshape(tb, seqlen, 1, d_inner)
                          * a_t.reshape(1, 1, nstate, d_inner))          # (TB, L, N, Din)
    dbu_scr[...] = (dt * xc).reshape(tb, seqlen, 1, d_inner) * b_col     # (TB, L, N, Din)
    c_scr[...] = c_col

    # ---- selective scan: serial loop is only h = da*h + dbu ; y_t = sum_n h*C ----
    def scan_body(t, h):
        da_t = da_scr[:, pl.ds(t, 1), :, :]                       # (TB, 1, N, Din)
        dbu_t = dbu_scr[:, pl.ds(t, 1), :, :]
        h = da_t * h + dbu_t
        c_t = c_scr[:, pl.ds(t, 1), :, :]                         # (TB, 1, N, 1)
        y_scr[:, pl.ds(t, 1), :] = jnp.sum(h * c_t, axis=2)       # (TB, 1, Din)
        return h

    h0 = jnp.zeros((tb, 1, nstate, d_inner), jnp.float32)
    lax.fori_loop(0, seqlen, scan_body, h0, unroll=min(seqlen, 8))

    # ---- epilogue: +D*u, gate, out_proj, GELU, GLU, residual ----
    y = y_scr[...].reshape(m_rows, d_inner) + xc * d_ref[0].astype(jnp.float32)
    y = y * silu_z
    out = _gelu_tanh(jnp.dot(y.astype(jnp.bfloat16), out_w_ref[0],
                             preferred_element_type=jnp.float32))        # (M, H)
    g = jnp.dot(out.astype(jnp.bfloat16), glu_w_ref[0],
                preferred_element_type=jnp.float32) + glu_b_ref[0].astype(jnp.float32)
    new_act = g[:, :hdim] * _sigmoid(g[:, hdim:]) + x
    act_scr[...] = new_act                                        # carried to the next layer

    # ---- last layer: fused mean pooling, only (TB, 1, H) goes back to HBM ----
    @pl.when(layer == n_layers - 1)
    def _():
        pool_ref[...] = jnp.mean(new_act.reshape(tb, seqlen, hdim),
                                 axis=1, keepdims=True).astype(pool_ref.dtype)


def _stack_blocks(blocks):
    """Stack per-layer weights with a leading layer axis; fold dt_proj into x_proj; cast MXU weights to bf16."""
    dt_rank = blocks[0]["dt_w"].shape[0]

    def stk(fn):
        return jnp.stack([fn(b) for b in blocks], axis=0)

    return {
        "ln_g": stk(lambda b: b["ln_g"].reshape(1, -1)),
        "ln_b": stk(lambda b: b["ln_b"].reshape(1, -1)),
        "in_w": stk(lambda b: b["in_w"].astype(jnp.bfloat16)),
        "conv_w": stk(lambda b: b["conv_w"]),
        "conv_b": stk(lambda b: b["conv_b"].reshape(1, -1)),
        # dt = softplus(xc @ (Wx[:, :r] @ Wdt) + b_dt); B,C from Wx[:, r:]
        "comb_w": stk(lambda b: jnp.concatenate(
            [b["xproj_w"][:, :dt_rank] @ b["dt_w"], b["xproj_w"][:, dt_rank:]],
            axis=1).astype(jnp.bfloat16)),
        "dt_b": stk(lambda b: b["dt_b"].reshape(1, -1)),
        "a_t": stk(lambda b: jnp.transpose(-jnp.exp(b["A_log"]))),
        "D": stk(lambda b: b["D"].reshape(1, -1)),
        "out_w": stk(lambda b: b["out_w"].astype(jnp.bfloat16)),
        "glu_w": stk(lambda b: b["glu_w"].astype(jnp.bfloat16)),
        "glu_b": stk(lambda b: b["glu_b"].reshape(1, -1)),
    }


def mamba_stack(stacked, x):
    """Run the whole block stack fused; returns the mean-pooled (B, H) activations."""
    bsz, seqlen, hdim = x.shape
    n_layers, _, d_inner = stacked["conv_w"].shape
    nstate = stacked["a_t"].shape[1]
    tb = _pick_tb(bsz, seqlen)

    weights = (stacked["ln_g"], stacked["ln_b"], stacked["in_w"], stacked["conv_w"],
               stacked["conv_b"], stacked["comb_w"], stacked["dt_b"], stacked["a_t"],
               stacked["D"], stacked["out_w"], stacked["glu_w"], stacked["glu_b"])

    def wspec(a):
        nd = a.ndim
        return pl.BlockSpec((1,) + a.shape[1:],
                            lambda b, l, _nd=nd: (l,) + (0,) * (_nd - 1))

    pooled = pl.pallas_call(
        _mamba_stack_kernel,
        out_shape=jax.ShapeDtypeStruct((bsz, 1, hdim), jnp.float32),
        grid_spec=pltpu.PrefetchScalarGridSpec(
            num_scalar_prefetch=0,
            grid=(bsz // tb, n_layers),
            in_specs=[pl.BlockSpec((tb, seqlen, hdim), lambda b, l: (b, 0, 0))]
                     + [wspec(wt) for wt in weights],
            out_specs=pl.BlockSpec((tb, 1, hdim), lambda b, l: (b, 0, 0)),
            scratch_shapes=[
                pltpu.VMEM((tb * seqlen, hdim), jnp.float32),            # resident activations
                pltpu.VMEM((tb, seqlen, nstate, d_inner), jnp.float32),  # exp(A*dt)
                pltpu.VMEM((tb, seqlen, nstate, d_inner), jnp.float32),  # dt*u*B
                pltpu.VMEM((tb, seqlen, nstate, 1), jnp.float32),        # C (column layout)
                pltpu.VMEM((tb, seqlen, d_inner), jnp.float32),          # scan output y
            ]),
        compiler_params=pltpu.CompilerParams(
            dimension_semantics=("parallel", "arbitrary"),
            vmem_limit_bytes=48 * 1024 * 1024),
    )(x, *weights)
    return pooled.reshape(bsz, hdim)


# ---------------------------------------------------------------------------
# encoder linear (row-tiled, gridded) and pooled decoder head
# ---------------------------------------------------------------------------
def _linear_bias_kernel(x_ref, w_ref, b_ref, o_ref):
    o_ref[...] = (jnp.dot(x_ref[...].astype(jnp.bfloat16), w_ref[...],
                          preferred_element_type=jnp.float32)
                  + b_ref[...].astype(jnp.float32)).astype(o_ref.dtype)


def linear_rows(x2d, w, b, max_rows=512):
    r, d_in = x2d.shape
    d_out = w.shape[1]
    tm = r
    if r > max_rows:
        for cand in range(max_rows, 7, -8):   # largest multiple-of-8 row tile that divides r
            if r % cand == 0:
                tm = cand
                break
    return pl.pallas_call(
        _linear_bias_kernel,
        out_shape=jax.ShapeDtypeStruct((r, d_out), x2d.dtype),
        grid_spec=pltpu.PrefetchScalarGridSpec(
            num_scalar_prefetch=0, grid=(r // tm,),
            in_specs=[pl.BlockSpec((tm, d_in), lambda i: (i, 0)),
                      pl.BlockSpec((d_in, d_out), lambda i: (0, 0)),
                      pl.BlockSpec((1, d_out), lambda i: (0, 0))],
            out_specs=pl.BlockSpec((tm, d_out), lambda i: (i, 0))),
        compiler_params=pltpu.CompilerParams(dimension_semantics=("parallel",)),
    )(x2d, w.astype(jnp.bfloat16), b.reshape(1, d_out))


def _head_kernel(p_ref, w_ref, b_ref, o_ref):
    logits = (jnp.dot(p_ref[...].astype(jnp.float32), w_ref[...].astype(jnp.float32),
                      preferred_element_type=jnp.float32)
              + b_ref[...].astype(jnp.float32))
    m = jnp.max(logits, axis=-1, keepdims=True)
    e = jnp.exp(logits - m)
    o_ref[...] = (e / jnp.sum(e, axis=-1, keepdims=True)).astype(o_ref.dtype)


def head(pooled, w, b):
    bsz = pooled.shape[0]
    d_out = w.shape[1]
    return pl.pallas_call(
        _head_kernel,
        out_shape=jax.ShapeDtypeStruct((bsz, d_out), jnp.float32),
        in_specs=[pl.BlockSpec(memory_space=pltpu.MemorySpace.VMEM)] * 3,
        out_specs=pl.BlockSpec(memory_space=pltpu.MemorySpace.VMEM),
    )(pooled, w, b.reshape(1, d_out))


# ---------------------------------------------------------------------------
# model forward
# ---------------------------------------------------------------------------
def mamba_forward(params, x):
    bsz, seqlen, in_dim = x.shape
    hdim = params["enc_w"].shape[1]
    h = linear_rows(x.reshape(bsz * seqlen, in_dim), params["enc_w"], params["enc_b"])
    h = h.reshape(bsz, seqlen, hdim)
    stacked = _stack_blocks(params["blocks"])
    pooled = mamba_stack(stacked, h)                    # all blocks + mean pooling, fused
    return head(pooled, params["dec_w"], params["dec_b"])   # decoder linear + softmax


# ---------------------------------------------------------------------------
# deterministic parameter init (synthetic weights, shapes match the module)
# ---------------------------------------------------------------------------
def init_params(key, *, input_dim, hidden_dim, output_dim, state_dim, conv_dim,
                expansion, num_blocks):
    d_inner = expansion * hidden_dim
    dt_rank = max(1, math.ceil(hidden_dim / 16))

    def w_init(k, shape, scale=0.1):
        return jax.random.normal(k, shape, jnp.float32) * scale

    keys = jax.random.split(key, 4 + num_blocks)
    params = {
        "enc_w": w_init(keys[0], (input_dim, hidden_dim)),
        "enc_b": w_init(keys[1], (hidden_dim,)),
        "dec_w": w_init(keys[2], (hidden_dim, output_dim)),
        "dec_b": w_init(keys[3], (output_dim,)),
        "blocks": [],
    }
    for i in range(num_blocks):
        bk = jax.random.split(keys[4 + i], 9)
        blk = {
            "ln_g": jnp.ones((hidden_dim,), jnp.float32),
            "ln_b": jnp.zeros((hidden_dim,), jnp.float32),
            "in_w": w_init(bk[0], (hidden_dim, 2 * d_inner)),
            "conv_w": w_init(bk[1], (conv_dim, d_inner), 0.2),
            "conv_b": w_init(bk[2], (d_inner,), 0.05),
            "xproj_w": w_init(bk[3], (d_inner, dt_rank + 2 * state_dim)),
            "dt_w": w_init(bk[4], (dt_rank, d_inner), 0.5),
            "dt_b": w_init(bk[5], (d_inner,), 0.1) + 0.5,
            "A_log": jnp.log(jnp.tile(
                jnp.arange(1, state_dim + 1, dtype=jnp.float32)[None, :], (d_inner, 1))),
            "D": jnp.ones((d_inner,), jnp.float32),
            "out_w": w_init(bk[6], (d_inner, hidden_dim)),
            "glu_w": w_init(bk[7], (hidden_dim, 2 * hidden_dim)),
            "glu_b": w_init(bk[8], (2 * hidden_dim,)),
        }
        params["blocks"].append(blk)
    return params


# ---------------------------------------------------------------------------
if __name__ == "__main__":
    key = jax.random.PRNGKey(0)
    k_params, k_x = jax.random.split(key)

    BATCH, SEQ, INPUT_DIM = 2, 8, 4
    HIDDEN_DIM, STATE_DIM, CONV_DIM, EXPANSION = 32, 4, 4, 2
    OUTPUT_DIM, NUM_BLOCKS = 4, 2

    params = init_params(
        k_params,
        input_dim=INPUT_DIM, hidden_dim=HIDDEN_DIM, output_dim=OUTPUT_DIM,
        state_dim=STATE_DIM, conv_dim=CONV_DIM, expansion=EXPANSION,
        num_blocks=NUM_BLOCKS,
    )
    x = jax.random.normal(k_x, (BATCH, SEQ, INPUT_DIM), jnp.float32)

    fwd = jax.jit(mamba_forward)
    out = jax.block_until_ready(fwd(params, x))

    assert out.shape == (BATCH, OUTPUT_DIM)
    assert bool(jnp.all(jnp.isfinite(out)))
    assert bool(jnp.allclose(jnp.sum(out, axis=1), 1.0, atol=1e-5))  # softmax rows sum to 1
    print("KERNEL_OK")
</pallas_src>

<mosaic_0001>
module attributes {stable_mosaic.version = 11 : i64} {
  func.func @_linear_bias_kernel(%arg0: i32, %arg1: memref<16x4xf32, #tpu.memory_space<vmem>>, %arg2: memref<4x32xbf16, #tpu.memory_space<vmem>>, %arg3: memref<1x32xf32, #tpu.memory_space<vmem>>, %arg4: memref<16x32xf32, #tpu.memory_space<vmem>>) attributes {dimension_semantics = [#tpu.dimension_semantics<parallel>], iteration_bounds = array<i64: 1>, scalar_prefetch = 0 : i64, scratch_operands = 0 : i64, tpu.core_type = #tpu.core_type<tc>, window_params = [{transform_indices = @transform_0, window_bounds = array<i64: 16, 4>}, {pipeline_mode = #tpu.pipeline_mode<synchronous>, transform_indices = @transform_1, window_bounds = array<i64: 4, 32>}, {pipeline_mode = #tpu.pipeline_mode<synchronous>, transform_indices = @transform_2, window_bounds = array<i64: 1, 32>}, {transform_indices = @transform_3, window_bounds = array<i64: 16, 32>}]} {
    %c0 = arith.constant 0 : index
    %c0_0 = arith.constant 0 : index
    %0 = vector.load %arg1[%c0, %c0_0] : memref<16x4xf32, #tpu.memory_space<vmem>>, vector<16x4xf32>
    %1 = arith.truncf %0 : vector<16x4xf32> to vector<16x4xbf16>
    %c0_1 = arith.constant 0 : index
    %c0_2 = arith.constant 0 : index
    %2 = vector.load %arg2[%c0_1, %c0_2] : memref<4x32xbf16, #tpu.memory_space<vmem>>, vector<4x32xbf16>
    %cst = arith.constant dense<0.000000e+00> : vector<16x32xf32>
    %3 = tpu.matmul %1, %2, %cst {dimension_numbers = #tpu.dot_dimension_numbers<[1], [0], [0], [1], [0, 0, 1, 1], [], []>} : vector<16x4xbf16>, vector<4x32xbf16>, vector<16x32xf32> -> vector<16x32xf32>
    %c0_3 = arith.constant 0 : index
    %c0_4 = arith.constant 0 : index
    %4 = vector.load %arg3[%c0_3, %c0_4] : memref<1x32xf32, #tpu.memory_space<vmem>>, vector<1x32xf32>
    %5 = vector.broadcast %4 : vector<1x32xf32> to vector<16x32xf32>
    %6 = arith.addf %3, %5 : vector<16x32xf32>
    %c0_5 = arith.constant 0 : index
    %c0_6 = arith.constant 0 : index
    %7 = vector.load %arg4[%c0_5, %c0_6] : memref<16x32xf32, #tpu.memory_space<vmem>>, vector<16x32xf32>
    tpu.vector_store %arg4[%c0_5, %c0_6], %6 {strides = array<i32>} : memref<16x32xf32, #tpu.memory_space<vmem>>, vector<16x32xf32>,
    return
  }
  func.func @transform_0(%arg0: i32) -> (i32, i32) {
    %c0_i32 = arith.constant 0 : i32
    %c0_i32_0 = arith.constant 0 : i32
    return %arg0, %c0_i32 : i32, i32
  }
  func.func @transform_1(%arg0: i32) -> (i32, i32) {
    %c0_i32 = arith.constant 0 : i32
    %c0_i32_0 = arith.constant 0 : i32
    %c0_i32_1 = arith.constant 0 : i32
    return %c0_i32, %c0_i32_0 : i32, i32
  }
  func.func @transform_2(%arg0: i32) -> (i32, i32) {
    %c0_i32 = arith.constant 0 : i32
    %c0_i32_0 = arith.constant 0 : i32
    %c0_i32_1 = arith.constant 0 : i32
    return %c0_i32, %c0_i32_0 : i32, i32
  }
  func.func @transform_3(%arg0: i32) -> (i32, i32) {
    %c0_i32 = arith.constant 0 : i32
    %c0_i32_0 = arith.constant 0 : i32
    return %arg0, %c0_i32 : i32, i32
  }
}

module attributes {stable_mosaic.version = 11 : i64} {
  func.func @_head_kernel(%arg0: memref<2x32xf32, #tpu.memory_space<vmem>>, %arg1: memref<32x4xf32, #tpu.memory_space<vmem>>, %arg2: memref<1x4xf32, #tpu.memory_space<vmem>>, %arg3: memref<2x4xf32, #tpu.memory_space<vmem>>) attributes {dimension_semantics = [], scalar_prefetch = 0 : i64, scratch_operands = 0 : i64, tpu.core_type = #tpu.core_type<tc>} {
    %c0 = arith.constant 0 : index
    %c0_0 = arith.constant 0 : index
    %0 = vector.load %arg0[%c0, %c0_0] : memref<2x32xf32, #tpu.memory_space<vmem>>, vector<2x32xf32>
    %c0_1 = arith.constant 0 : index
    %c0_2 = arith.constant 0 : index
    %1 = vector.load %arg1[%c0_1, %c0_2] : memref<32x4xf32, #tpu.memory_space<vmem>>, vector<32x4xf32>
    %cst = arith.constant dense<0.000000e+00> : vector<2x4xf32>
    %2 = tpu.matmul %0, %1, %cst {dimension_numbers = #tpu.dot_dimension_numbers<[1], [0], [0], [1], [0, 0, 1, 1], [], []>} : vector<2x32xf32>, vector<32x4xf32>, vector<2x4xf32> -> vector<2x4xf32>
    %c0_3 = arith.constant 0 : index
    %c0_4 = arith.constant 0 : index
    %3 = vector.load %arg2[%c0_3, %c0_4] : memref<1x4xf32, #tpu.memory_space<vmem>>, vector<1x4xf32>
    %4 = vector.broadcast %3 : vector<1x4xf32> to vector<2x4xf32>
    %5 = arith.addf %2, %4 : vector<2x4xf32>
    %cst_5 = arith.constant dense<0xFF800000> : vector<2xf32>
    %6 = vector.multi_reduction <maximumf>, %5, %cst_5 [1] : vector<2x4xf32> to vector<2xf32>
    %7 = vector.shape_cast %6 : vector<2xf32> to vector<2x1xf32>
    %8 = vector.broadcast %7 : vector<2x1xf32> to vector<2x4xf32>
    %9 = arith.subf %5, %8 : vector<2x4xf32>
    %10 = math.exp %9 : vector<2x4xf32>
    %cst_6 = arith.constant dense<0.000000e+00> : vector<2xf32>
    %11 = vector.multi_reduction <add>, %10, %cst_6 [1] : vector<2x4xf32> to vector<2xf32>
    %12 = vector.shape_cast %11 : vector<2xf32> to vector<2x1xf32>
    %13 = vector.broadcast %12 : vector<2x1xf32> to vector<2x4xf32>
    %14 = arith.divf %10, %13 : vector<2x4xf32>
    %c0_7 = arith.constant 0 : index
    %c0_8 = arith.constant 0 : index
    %15 = vector.load %arg3[%c0_7, %c0_8] : memref<2x4xf32, #tpu.memory_space<vmem>>, vector<2x4xf32>
    tpu.vector_store %arg3[%c0_7, %c0_8], %14 {strides = array<i32>} : memref<2x4xf32, #tpu.memory_space<vmem>>, vector<2x4xf32>,
    return
  }
}

module attributes {stable_mosaic.version = 11 : i64} {
  func.func @_mamba_stack_kernel(%arg0: i32, %arg1: i32, %arg2: memref<2x8x32xf32, #tpu.memory_space<vmem>>, %arg3: memref<1x1x32xf32, #tpu.memory_space<vmem>>, %arg4: memref<1x1x32xf32, #tpu.memory_space<vmem>>, %arg5: memref<1x32x128xbf16, #tpu.memory_space<vmem>>, %arg6: memref<1x4x64xf32, #tpu.memory_space<vmem>>, %arg7: memref<1x1x64xf32, #tpu.memory_space<vmem>>, %arg8: memref<1x64x72xbf16, #tpu.memory_space<vmem>>, %arg9: memref<1x1x64xf32, #tpu.memory_space<vmem>>, %arg10: memref<1x4x64xf32, #tpu.memory_space<vmem>>, %arg11: memref<1x1x64xf32, #tpu.memory_space<vmem>>, %arg12: memref<1x64x32xbf16, #tpu.memory_space<vmem>>, %arg13: memref<1x32x64xbf16, #tpu.memory_space<vmem>>, %arg14: memref<1x1x64xf32, #tpu.memory_space<vmem>>, %arg15: memref<2x1x32xf32, #tpu.memory_space<vmem>>, %arg16: memref<16x32xf32, #tpu.memory_space<vmem>>, %arg17: memref<2x8x4x64xf32, #tpu.memory_space<vmem>>, %arg18: memref<2x8x4x64xf32, #tpu.memory_space<vmem>>, %arg19: memref<2x8x4x1xf32, #tpu.memory_space<vmem>>, %arg20: memref<2x8x64xf32, #tpu.memory_space<vmem>>) attributes {dimension_semantics = [#tpu.dimension_semantics<parallel>, #tpu.dimension_semantics<arbitrary>], iteration_bounds = array<i64: 1, 2>, scalar_prefetch = 0 : i64, scratch_operands = 5 : i64, tpu.core_type = #tpu.core_type<tc>, window_params = [{transform_indices = @transform_0, window_bounds = array<i64: 2, 8, 32>}, {transform_indices = @transform_1, window_bounds = array<i64: 1, 1, 32>}, {transform_indices = @transform_2, window_bounds = array<i64: 1, 1, 32>}, {transform_indices = @transform_3, window_bounds = array<i64: 1, 32, 128>}, {transform_indices = @transform_4, window_bounds = array<i64: 1, 4, 64>}, {transform_indices = @transform_5, window_bounds = array<i64: 1, 1, 64>}, {transform_indices = @transform_6, window_bounds = array<i64: 1, 64, 72>}, {transform_indices = @transform_7, window_bounds = array<i64: 1, 1, 64>}, {transform_indices = @transform_8, window_bounds = array<i64: 1, 4, 64>}, {transform_indices = @transform_9, window_bounds = array<i64: 1, 1, 64>}, {transform_indices = @transform_10, window_bounds = array<i64: 1, 64, 32>}, {transform_indices = @transform_11, window_bounds = array<i64: 1, 32, 64>}, {transform_indices = @transform_12, window_bounds = array<i64: 1, 1, 64>}, {transform_indices = @transform_13, window_bounds = array<i64: 2, 1, 32>}]} {
    %c0_i32 = arith.constant 0 : i32
    %0 = arith.cmpi eq, %arg1, %c0_i32 : i32
    %1 = arith.extui %0 : i1 to i32
    %c0_i32_0 = arith.constant 0 : i32
    %2 = arith.cmpi ne, %1, %c0_i32_0 : i32
    scf.if %2 {
      %c0_190 = arith.constant 0 : index
      %c0_191 = arith.constant 0 : index
      %c0_192 = arith.constant 0 : index
      %302 = vector.load %arg2[%c0_190, %c0_191, %c0_192] : memref<2x8x32xf32, #tpu.memory_space<vmem>>, vector<2x8x32xf32>
      %303 = vector.shape_cast %302 : vector<2x8x32xf32> to vector<16x32xf32>
      %c0_193 = arith.constant 0 : index
      %c0_194 = arith.constant 0 : index
      %304 = vector.load %arg16[%c0_193, %c0_194] : memref<16x32xf32, #tpu.memory_space<vmem>>, vector<16x32xf32>
      tpu.vector_store %arg16[%c0_193, %c0_194], %303 {strides = array<i32>} : memref<16x32xf32, #tpu.memory_space<vmem>>, vector<16x32xf32>,
    } else {
    }
    %c0 = arith.constant 0 : index
    %c0_1 = arith.constant 0 : index
    %3 = vector.load %arg16[%c0, %c0_1] : memref<16x32xf32, #tpu.memory_space<vmem>>, vector<16x32xf32>
    %cst = arith.constant dense<0.000000e+00> : vector<16xf32>
    %4 = vector.multi_reduction <add>, %3, %cst [1] : vector<16x32xf32> to vector<16xf32>
    %5 = vector.shape_cast %4 : vector<16xf32> to vector<16x1xf32>
    %cst_2 = arith.constant 3.200000e+01 : f32
    %6 = vector.broadcast %cst_2 : f32 to vector<16x1xf32>
    %7 = arith.divf %5, %6 : vector<16x1xf32>
    %8 = vector.broadcast %7 : vector<16x1xf32> to vector<16x32xf32>
    %9 = arith.subf %3, %8 : vector<16x32xf32>
    %10 = arith.mulf %9, %9 : vector<16x32xf32>
    %cst_3 = arith.constant dense<0.000000e+00> : vector<16xf32>
    %11 = vector.multi_reduction <add>, %10, %cst_3 [1] : vector<16x32xf32> to vector<16xf32>
    %12 = vector.shape_cast %11 : vector<16xf32> to vector<16x1xf32>
    %cst_4 = arith.constant 3.200000e+01 : f32
    %13 = vector.broadcast %cst_4 : f32 to vector<16x1xf32>
    %14 = arith.divf %12, %13 : vector<16x1xf32>
    %15 = vector.broadcast %7 : vector<16x1xf32> to vector<16x32xf32>
    %16 = arith.subf %3, %15 : vector<16x32xf32>
    %cst_5 = arith.constant 9.99999974E-6 : f32
    %17 = vector.broadcast %cst_5 : f32 to vector<16x1xf32>
    %18 = arith.addf %14, %17 : vector<16x1xf32>
    %19 = math.rsqrt %18 : vector<16x1xf32>
    %20 = vector.broadcast %19 : vector<16x1xf32> to vector<16x32xf32>
    %21 = arith.mulf %16, %20 : vector<16x32xf32>
    %c0_6 = arith.constant 0 : index
    %c0_7 = arith.constant 0 : index
    %c0_8 = arith.constant 0 : index
    %22 = vector.load %arg3[%c0_6, %c0_7, %c0_8] : memref<1x1x32xf32, #tpu.memory_space<vmem>>, vector<1x1x32xf32>
    %23 = vector.shape_cast %22 : vector<1x1x32xf32> to vector<1x32xf32>
    %24 = vector.broadcast %23 : vector<1x32xf32> to vector<16x32xf32>
    %25 = arith.mulf %21, %24 : vector<16x32xf32>
    %c0_9 = arith.constant 0 : index
    %c0_10 = arith.constant 0 : index
    %c0_11 = arith.constant 0 : index
    %26 = vector.load %arg4[%c0_9, %c0_10, %c0_11] : memref<1x1x32xf32, #tpu.memory_space<vmem>>, vector<1x1x32xf32>
    %27 = vector.shape_cast %26 : vector<1x1x32xf32> to vector<1x32xf32>
    %28 = vector.broadcast %27 : vector<1x32xf32> to vector<16x32xf32>
    %29 = arith.addf %25, %28 : vector<16x32xf32>
    %30 = arith.truncf %29 : vector<16x32xf32> to vector<16x32xbf16>
    %c0_12 = arith.constant 0 : index
    %c0_13 = arith.constant 0 : index
    %c0_14 = arith.constant 0 : index
    %31 = vector.load %arg5[%c0_12, %c0_13, %c0_14] : memref<1x32x128xbf16, #tpu.memory_space<vmem>>, vector<1x32x128xbf16>
    %32 = vector.shape_cast %31 : vector<1x32x128xbf16> to vector<32x128xbf16>
    %cst_15 = arith.constant dense<0.000000e+00> : vector<16x128xf32>
    %33 = tpu.matmul %30, %32, %cst_15 {dimension_numbers = #tpu.dot_dimension_numbers<[1], [0], [0], [1], [0, 0, 1, 1], [], []>} : vector<16x32xbf16>, vector<32x128xbf16>, vector<16x128xf32> -> vector<16x128xf32>
    %34 = vector.extract_strided_slice %33 {offsets = [0, 0], sizes = [16, 64], strides = [1, 1]} : vector<16x128xf32> to vector<16x64xf32>
    %35 = vector.extract_strided_slice %33 {offsets = [0, 64], sizes = [16, 64], strides = [1, 1]} : vector<16x128xf32> to vector<16x64xf32>
    %36 = vector.extract_strided_slice %33 {offsets = [0, 64], sizes = [16, 64], strides = [1, 1]} : vector<16x128xf32> to vector<16x64xf32>
    %cst_16 = arith.constant 0.000000e+00 : f32
    %37 = vector.broadcast %cst_16 : f32 to vector<16x64xf32>
    %38 = arith.subf %37, %36 : vector<16x64xf32>
    %39 = math.exp %38 : vector<16x64xf32>
    %cst_17 = arith.constant 1.000000e+00 : f32
    %40 = vector.broadcast %cst_17 : f32 to vector<16x64xf32>
    %41 = arith.addf %40, %39 : vector<16x64xf32>
    %cst_18 = arith.constant 1.000000e+00 : f32
    %42 = vector.broadcast %cst_18 : f32 to vector<16x64xf32>
    %43 = arith.divf %42, %41 : vector<16x64xf32>
    %44 = arith.mulf %35, %43 : vector<16x64xf32>
    %c0_19 = arith.constant 0 : index
    %c0_20 = arith.constant 0 : index
    %c0_21 = arith.constant 0 : index
    %45 = vector.load %arg6[%c0_19, %c0_20, %c0_21] : memref<1x4x64xf32, #tpu.memory_space<vmem>>, vector<1x4x64xf32>
    %46 = vector.shape_cast %45 : vector<1x4x64xf32> to vector<4x64xf32>
    %47 = tpu.iota {dimensions = array<i32: 1>} : vector<2x8x64xi32>
    %48 = vector.shape_cast %47 : vector<2x8x64xi32> to vector<16x64xi32>
    %49 = vector.extract_strided_slice %46 {offsets = [3, 0], sizes = [1, 64], strides = [1, 1]} : vector<4x64xf32> to vector<1x64xf32>
    %50 = vector.broadcast %49 : vector<1x64xf32> to vector<16x64xf32>
    %51 = arith.mulf %34, %50 : vector<16x64xf32>
    %c3_i32 = arith.constant 3 : i32
    %52 = tpu.dynamic_rotate %34 by %c3_i32 dim 0 : vector<16x64xf32>, i32 -> vector<16x64xf32>
    %c3_i32_22 = arith.constant 3 : i32
    %53 = vector.broadcast %c3_i32_22 : i32 to vector<16x64xi32>
    %54 = arith.cmpi sge, %48, %53 : vector<16x64xi32>
    %cst_23 = arith.constant 0.000000e+00 : f32
    %55 = vector.broadcast %cst_23 : f32 to vector<16x64xf32>
    %56 = arith.select %54, %52, %55 : vector<16x64xi1>, vector<16x64xf32>
    %57 = vector.extract_strided_slice %46 {offsets = [0, 0], sizes = [1, 64], strides = [1, 1]} : vector<4x64xf32> to vector<1x64xf32>
    %58 = vector.broadcast %57 : vector<1x64xf32> to vector<16x64xf32>
    %59 = arith.mulf %56, %58 : vector<16x64xf32>
    %60 = arith.addf %51, %59 : vector<16x64xf32>
    %c2_i32 = arith.constant 2 : i32
    %61 = tpu.dynamic_rotate %34 by %c2_i32 dim 0 : vector<16x64xf32>, i32 -> vector<16x64xf32>
    %c2_i32_24 = arith.constant 2 : i32
    %62 = vector.broadcast %c2_i32_24 : i32 to vector<16x64xi32>
    %63 = arith.cmpi sge, %48, %62 : vector<16x64xi32>
    %cst_25 = arith.constant 0.000000e+00 : f32
    %64 = vector.broadcast %cst_25 : f32 to vector<16x64xf32>
    %65 = arith.select %63, %61, %64 : vector<16x64xi1>, vector<16x64xf32>
    %66 = vector.extract_strided_slice %46 {offsets = [1, 0], sizes = [1, 64], strides = [1, 1]} : vector<4x64xf32> to vector<1x64xf32>
    %67 = vector.broadcast %66 : vector<1x64xf32> to vector<16x64xf32>
    %68 = arith.mulf %65, %67 : vector<16x64xf32>
    %69 = arith.addf %60, %68 : vector<16x64xf32>
    %c1_i32 = arith.constant 1 : i32
    %70 = tpu.dynamic_rotate %34 by %c1_i32 dim 0 : vector<16x64xf32>, i32 -> vector<16x64xf32>
    %c1_i32_26 = arith.constant 1 : i32
    %71 = vector.broadcast %c1_i32_26 : i32 to vector<16x64xi32>
    %72 = arith.cmpi sge, %48, %71 : vector<16x64xi32>
    %cst_27 = arith.constant 0.000000e+00 : f32
    %73 = vector.broadcast %cst_27 : f32 to vector<16x64xf32>
    %74 = arith.select %72, %70, %73 : vector<16x64xi1>, vector<16x64xf32>
    %75 = vector.extract_strided_slice %46 {offsets = [2, 0], sizes = [1, 64], strides = [1, 1]} : vector<4x64xf32> to vector<1x64xf32>
    %76 = vector.broadcast %75 : vector<1x64xf32> to vector<16x64xf32>
    %77 = arith.mulf %74, %76 : vector<16x64xf32>
    %78 = arith.addf %69, %77 : vector<16x64xf32>
    %c0_28 = arith.constant 0 : index
    %c0_29 = arith.constant 0 : index
    %c0_30 = arith.constant 0 : index
    %79 = vector.load %arg7[%c0_28, %c0_29, %c0_30] : memref<1x1x64xf32, #tpu.memory_space<vmem>>, vector<1x1x64xf32>
    %80 = vector.shape_cast %79 : vector<1x1x64xf32> to vector<1x64xf32>
    %81 = vector.broadcast %80 : vector<1x64xf32> to vector<16x64xf32>
    %82 = arith.addf %78, %81 : vector<16x64xf32>
    %cst_31 = arith.constant 0.000000e+00 : f32
    %83 = vector.broadcast %cst_31 : f32 to vector<16x64xf32>
    %84 = arith.subf %83, %82 : vector<16x64xf32>
    %85 = math.exp %84 : vector<16x64xf32>
    %cst_32 = arith.constant 1.000000e+00 : f32
    %86 = vector.broadcast %cst_32 : f32 to vector<16x64xf32>
    %87 = arith.addf %86, %85 : vector<16x64xf32>
    %cst_33 = arith.constant 1.000000e+00 : f32
    %88 = vector.broadcast %cst_33 : f32 to vector<16x64xf32>
    %89 = arith.divf %88, %87 : vector<16x64xf32>
    %90 = arith.mulf %82, %89 : vector<16x64xf32>
    %91 = arith.truncf %90 : vector<16x64xf32> to vector<16x64xbf16>
    %c0_34 = arith.constant 0 : index
    %c0_35 = arith.constant 0 : index
    %c0_36 = arith.constant 0 : index
    %92 = vector.load %arg8[%c0_34, %c0_35, %c0_36] : memref<1x64x72xbf16, #tpu.memory_space<vmem>>, vector<1x64x72xbf16>
    %93 = vector.shape_cast %92 : vector<1x64x72xbf16> to vector<64x72xbf16>
    %cst_37 = arith.constant dense<0.000000e+00> : vector<16x72xf32>
    %94 = tpu.matmul %91, %93, %cst_37 {dimension_numbers = #tpu.dot_dimension_numbers<[1], [0], [0], [1], [0, 0, 1, 1], [], []>} : vector<16x64xbf16>, vector<64x72xbf16>, vector<16x72xf32> -> vector<16x72xf32>
    %95 = vector.extract_strided_slice %94 {offsets = [0, 0], sizes = [16, 64], strides = [1, 1]} : vector<16x72xf32> to vector<16x64xf32>
    %c0_38 = arith.constant 0 : index
    %c0_39 = arith.constant 0 : index
    %c0_40 = arith.constant 0 : index
    %96 = vector.load %arg9[%c0_38, %c0_39, %c0_40] : memref<1x1x64xf32, #tpu.memory_space<vmem>>, vector<1x1x64xf32>
    %97 = vector.shape_cast %96 : vector<1x1x64xf32> to vector<1x64xf32>
    %98 = vector.broadcast %97 : vector<1x64xf32> to vector<16x64xf32>
    %99 = arith.addf %95, %98 : vector<16x64xf32>
    %cst_41 = arith.constant 0.000000e+00 : f32
    %100 = vector.broadcast %cst_41 : f32 to vector<16x64xf32>
    %101 = arith.maximumf %99, %100 : vector<16x64xf32>
    %102 = math.absf %99 : vector<16x64xf32>
    %cst_42 = arith.constant 0.000000e+00 : f32
    %103 = vector.broadcast %cst_42 : f32 to vector<16x64xf32>
    %104 = arith.subf %103, %102 : vector<16x64xf32>
    %105 = math.exp %104 : vector<16x64xf32>
    %cst_43 = arith.constant 1.000000e+00 : f32
    %106 = vector.broadcast %cst_43 : f32 to vector<16x64xf32>
    %107 = arith.addf %106, %105 : vector<16x64xf32>
    %108 = math.log %107 : vector<16x64xf32>
    %109 = arith.addf %101, %108 : vector<16x64xf32>
    %c0_44 = arith.constant 0 : index
    %c0_45 = arith.constant 0 : index
    %c0_46 = arith.constant 0 : index
    %110 = vector.load %arg10[%c0_44, %c0_45, %c0_46] : memref<1x4x64xf32, #tpu.memory_space<vmem>>, vector<1x4x64xf32>
    %111 = vector.shape_cast %110 : vector<1x4x64xf32> to vector<4x64xf32>
    %112 = vector.extract_strided_slice %94 {offsets = [0, 64], sizes = [16, 4], strides = [1, 1]} : vector<16x72xf32> to vector<16x4xf32>
    %113 = vector.shape_cast %112 : vector<16x4xf32> to vector<2x8x4xf32>
    %114 = vector.extract_strided_slice %94 {offsets = [0, 68], sizes = [16, 4], strides = [1, 1]} : vector<16x72xf32> to vector<16x4xf32>
    %115 = vector.shape_cast %114 : vector<16x4xf32> to vector<2x8x4xf32>
    %116 = tpu.iota {dimensions = array<i32: 0>} : vector<4x4xi32>
    %117 = tpu.iota {dimensions = array<i32: 1>} : vector<4x4xi32>
    %118 = arith.cmpi eq, %116, %117 : vector<4x4xi32>
    %119 = arith.extui %118 : vector<4x4xi1> to vector<4x4xi32>
    %120 = arith.sitofp %119 : vector<4x4xi32> to vector<4x4xf32>
    %121 = vector.shape_cast %113 : vector<2x8x4xf32> to vector<2x8x1x4xf32>
    %122 = vector.shape_cast %120 : vector<4x4xf32> to vector<1x1x4x4xf32>
    %123 = vector.broadcast %121 : vector<2x8x1x4xf32> to vector<2x8x4x4xf32>
    %124 = vector.broadcast %122 : vector<1x1x4x4xf32> to vector<2x8x4x4xf32>
    %125 = arith.mulf %123, %124 : vector<2x8x4x4xf32>
    %cst_47 = arith.constant dense<0.000000e+00> : vector<2x8x4xf32>
    %126 = vector.multi_reduction <add>, %125, %cst_47 [3] : vector<2x8x4x4xf32> to vector<2x8x4xf32>
    %127 = vector.shape_cast %126 : vector<2x8x4xf32> to vector<2x8x4x1xf32>
    %128 = vector.shape_cast %115 : vector<2x8x4xf32> to vector<2x8x1x4xf32>
    %129 = vector.shape_cast %120 : vector<4x4xf32> to vector<1x1x4x4xf32>
    %130 = vector.broadcast %128 : vector<2x8x1x4xf32> to vector<2x8x4x4xf32>
    %131 = vector.broadcast %129 : vector<1x1x4x4xf32> to vector<2x8x4x4xf32>
    %132 = arith.mulf %130, %131 : vector<2x8x4x4xf32>
    %cst_48 = arith.constant dense<0.000000e+00> : vector<2x8x4xf32>
    %133 = vector.multi_reduction <add>, %132, %cst_48 [3] : vector<2x8x4x4xf32> to vector<2x8x4xf32>
    %134 = vector.shape_cast %133 : vector<2x8x4xf32> to vector<2x8x4x1xf32>
    %135 = vector.shape_cast %109 : vector<16x64xf32> to vector<2x8x1x64xf32>
    %136 = vector.shape_cast %111 : vector<4x64xf32> to vector<1x1x4x64xf32>
    %137 = vector.broadcast %135 : vector<2x8x1x64xf32> to vector<2x8x4x64xf32>
    %138 = vector.broadcast %136 : vector<1x1x4x64xf32> to vector<2x8x4x64xf32>
    %139 = arith.mulf %137, %138 : vector<2x8x4x64xf32>
    %140 = math.exp %139 : vector<2x8x4x64xf32>
    %c0_49 = arith.constant 0 : index
    %c0_50 = arith.constant 0 : index
    %c0_51 = arith.constant 0 : index
    %c0_52 = arith.constant 0 : index
    %141 = vector.load %arg17[%c0_49, %c0_50, %c0_51, %c0_52] : memref<2x8x4x64xf32, #tpu.memory_space<vmem>>, vector<2x8x4x64xf32>
    tpu.vector_store %arg17[%c0_49, %c0_50, %c0_51, %c0_52], %140 {strides = array<i32>} : memref<2x8x4x64xf32, #tpu.memory_space<vmem>>, vector<2x8x4x64xf32>,
    %142 = arith.mulf %109, %90 : vector<16x64xf32>
    %143 = vector.shape_cast %142 : vector<16x64xf32> to vector<2x8x1x64xf32>
    %144 = vector.broadcast %143 : vector<2x8x1x64xf32> to vector<2x8x4x64xf32>
    %145 = vector.broadcast %127 : vector<2x8x4x1xf32> to vector<2x8x4x64xf32>
    %146 = arith.mulf %144, %145 : vector<2x8x4x64xf32>
    %c0_53 = arith.constant 0 : index
    %c0_54 = arith.constant 0 : index
    %c0_55 = arith.constant 0 : index
    %c0_56 = arith.constant 0 : index
    %147 = vector.load %arg18[%c0_53, %c0_54, %c0_55, %c0_56] : memref<2x8x4x64xf32, #tpu.memory_space<vmem>>, vector<2x8x4x64xf32>
    tpu.vector_store %arg18[%c0_53, %c0_54, %c0_55, %c0_56], %146 {strides = array<i32>} : memref<2x8x4x64xf32, #tpu.memory_space<vmem>>, vector<2x8x4x64xf32>,
    %c0_57 = arith.constant 0 : index
    %c0_58 = arith.constant 0 : index
    %c0_59 = arith.constant 0 : index
    %c0_60 = arith.constant 0 : index
    %148 = vector.load %arg19[%c0_57, %c0_58, %c0_59, %c0_60] : memref<2x8x4x1xf32, #tpu.memory_space<vmem>>, vector<2x8x4x1xf32>
    tpu.vector_store %arg19[%c0_57, %c0_58, %c0_59, %c0_60], %134 {strides = array<i32>} : memref<2x8x4x1xf32, #tpu.memory_space<vmem>>, vector<2x8x4x1xf32>,
    %cst_61 = arith.constant 0.000000e+00 : f32
    %149 = vector.broadcast %cst_61 : f32 to vector<2x1x4x64xf32>
    %c0_i32_62 = arith.constant 0 : i32
    %c0_63 = arith.constant 0 : index
    %150 = arith.index_cast %c0_i32_62 : i32 to index
    %c0_64 = arith.constant 0 : index
    %c0_65 = arith.constant 0 : index
    %151 = vector.load %arg17[%c0_63, %150, %c0_64, %c0_65] : memref<2x8x4x64xf32, #tpu.memory_space<vmem>>, vector<2x1x4x64xf32>
    %c0_66 = arith.constant 0 : index
    %152 = arith.index_cast %c0_i32_62 : i32 to index
    %c0_67 = arith.constant 0 : index
    %c0_68 = arith.constant 0 : index
    %153 = vector.load %arg18[%c0_66, %152, %c0_67, %c0_68] : memref<2x8x4x64xf32, #tpu.memory_space<vmem>>, vector<2x1x4x64xf32>
    %154 = arith.mulf %151, %149 : vector<2x1x4x64xf32>
    %155 = arith.addf %154, %153 : vector<2x1x4x64xf32>
    %c0_69 = arith.constant 0 : index
    %156 = arith.index_cast %c0_i32_62 : i32 to index
    %c0_70 = arith.constant 0 : index
    %c0_71 = arith.constant 0 : index
    %157 = vector.load %arg19[%c0_69, %156, %c0_70, %c0_71] : memref<2x8x4x1xf32, #tpu.memory_space<vmem>>, vector<2x1x4x1xf32>
    %158 = vector.broadcast %157 : vector<2x1x4x1xf32> to vector<2x1x4x64xf32>
    %159 = arith.mulf %155, %158 : vector<2x1x4x64xf32>
    %cst_72 = arith.constant dense<0.000000e+00> : vector<2x1x64xf32>
    %160 = vector.multi_reduction <add>, %159, %cst_72 [2] : vector<2x1x4x64xf32> to vector<2x1x64xf32>
    %c0_73 = arith.constant 0 : index
    %161 = arith.index_cast %c0_i32_62 : i32 to index
    %c0_74 = arith.constant 0 : index
    %162 = vector.load %arg20[%c0_73, %161, %c0_74] : memref<2x8x64xf32, #tpu.memory_space<vmem>>, vector<2x1x64xf32>
    tpu.vector_store %arg20[%c0_73, %161, %c0_74], %160 {strides = array<i32>} : memref<2x8x64xf32, #tpu.memory_space<vmem>>, vector<2x1x64xf32>,
    %c1_i32_75 = arith.constant 1 : i32
    %c0_76 = arith.constant 0 : index
    %163 = arith.index_cast %c1_i32_75 : i32 to index
    %c0_77 = arith.constant 0 : index
    %c0_78 = arith.constant 0 : index
    %164 = vector.load %arg17[%c0_76, %163, %c0_77, %c0_78] : memref<2x8x4x64xf32, #tpu.memory_space<vmem>>, vector<2x1x4x64xf32>
    %c0_79 = arith.constant 0 : index
    %165 = arith.index_cast %c1_i32_75 : i32 to index
    %c0_80 = arith.constant 0 : index
    %c0_81 = arith.constant 0 : index
    %166 = vector.load %arg18[%c0_79, %165, %c0_80, %c0_81] : memref<2x8x4x64xf32, #tpu.memory_space<vmem>>, vector<2x1x4x64xf32>
    %167 = arith.mulf %164, %155 : vector<2x1x4x64xf32>
    %168 = arith.addf %167, %166 : vector<2x1x4x64xf32>
    %c0_82 = arith.constant 0 : index
    %169 = arith.index_cast %c1_i32_75 : i32 to index
    %c0_83 = arith.constant 0 : index
    %c0_84 = arith.constant 0 : index
    %170 = vector.load %arg19[%c0_82, %169, %c0_83, %c0_84] : memref<2x8x4x1xf32, #tpu.memory_space<vmem>>, vector<2x1x4x1xf32>
    %171 = vector.broadcast %170 : vector<2x1x4x1xf32> to vector<2x1x4x64xf32>
    %172 = arith.mulf %168, %171 : vector<2x1x4x64xf32>
    %cst_85 = arith.constant dense<0.000000e+00> : vector<2x1x64xf32>
    %173 = vector.multi_reduction <add>, %172, %cst_85 [2] : vector<2x1x4x64xf32> to vector<2x1x64xf32>
    %c0_86 = arith.constant 0 : index
    %174 = arith.index_cast %c1_i32_75 : i32 to index
    %c0_87 = arith.constant 0 : index
    %175 = vector.load %arg20[%c0_86, %174, %c0_87] : memref<2x8x64xf32, #tpu.memory_space<vmem>>, vector<2x1x64xf32>
    tpu.vector_store %arg20[%c0_86, %174, %c0_87], %173 {strides = array<i32>} : memref<2x8x64xf32, #tpu.memory_space<vmem>>, vector<2x1x64xf32>,
    %c2_i32_88 = arith.constant 2 : i32
    %c0_89 = arith.constant 0 : index
    %176 = arith.index_cast %c2_i32_88 : i32 to index
    %c0_90 = arith.constant 0 : index
    %c0_91 = arith.constant 0 : index
    %177 = vector.load %arg17[%c0_89, %176, %c0_90, %c0_91] : memref<2x8x4x64xf32, #tpu.memory_space<vmem>>, vector<2x1x4x64xf32>
    %c0_92 = arith.constant 0 : index
    %178 = arith.index_cast %c2_i32_88 : i32 to index
    %c0_93 = arith.constant 0 : index
    %c0_94 = arith.constant 0 : index
    %179 = vector.load %arg18[%c0_92, %178, %c0_93, %c0_94] : memref<2x8x4x64xf32, #tpu.memory_space<vmem>>, vector<2x1x4x64xf32>
    %180 = arith.mulf %177, %168 : vector<2x1x4x64xf32>
    %181 = arith.addf %180, %179 : vector<2x1x4x64xf32>
    %c0_95 = arith.constant 0 : index
    %182 = arith.index_cast %c2_i32_88 : i32 to index
    %c0_96 = arith.constant 0 : index
    %c0_97 = arith.constant 0 : index
    %183 = vector.load %arg19[%c0_95, %182, %c0_96, %c0_97] : memref<2x8x4x1xf32, #tpu.memory_space<vmem>>, vector<2x1x4x1xf32>
    %184 = vector.broadcast %183 : vector<2x1x4x1xf32> to vector<2x1x4x64xf32>
    %185 = arith.mulf %181, %184 : vector<2x1x4x64xf32>
    %cst_98 = arith.constant dense<0.000000e+00> : vector<2x1x64xf32>
    %186 = vector.multi_reduction <add>, %185, %cst_98 [2] : vector<2x1x4x64xf32> to vector<2x1x64xf32>
    %c0_99 = arith.constant 0 : index
    %187 = arith.index_cast %c2_i32_88 : i32 to index
    %c0_100 = arith.constant 0 : index
    %188 = vector.load %arg20[%c0_99, %187, %c0_100] : memref<2x8x64xf32, #tpu.memory_space<vmem>>, vector<2x1x64xf32>
    tpu.vector_store %arg20[%c0_99, %187, %c0_100], %186 {strides = array<i32>} : memref<2x8x64xf32, #tpu.memory_space<vmem>>, vector<2x1x64xf32>,
    %c3_i32_101 = arith.constant 3 : i32
    %c0_102 = arith.constant 0 : index
    %189 = arith.index_cast %c3_i32_101 : i32 to index
    %c0_103 = arith.constant 0 : index
    %c0_104 = arith.constant 0 : index
    %190 = vector.load %arg17[%c0_102, %189, %c0_103, %c0_104] : memref<2x8x4x64xf32, #tpu.memory_space<vmem>>, vector<2x1x4x64xf32>
    %c0_105 = arith.constant 0 : index
    %191 = arith.index_cast %c3_i32_101 : i32 to index
    %c0_106 = arith.constant 0 : index
    %c0_107 = arith.constant 0 : index
    %192 = vector.load %arg18[%c0_105, %191, %c0_106, %c0_107] : memref<2x8x4x64xf32, #tpu.memory_space<vmem>>, vector<2x1x4x64xf32>
    %193 = arith.mulf %190, %181 : vector<2x1x4x64xf32>
    %194 = arith.addf %193, %192 : vector<2x1x4x64xf32>
    %c0_108 = arith.constant 0 : index
    %195 = arith.index_cast %c3_i32_101 : i32 to index
    %c0_109 = arith.constant 0 : index
    %c0_110 = arith.constant 0 : index
    %196 = vector.load %arg19[%c0_108, %195, %c0_109, %c0_110] : memref<2x8x4x1xf32, #tpu.memory_space<vmem>>, vector<2x1x4x1xf32>
    %197 = vector.broadcast %196 : vector<2x1x4x1xf32> to vector<2x1x4x64xf32>
    %198 = arith.mulf %194, %197 : vector<2x1x4x64xf32>
    %cst_111 = arith.constant dense<0.000000e+00> : vector<2x1x64xf32>
    %199 = vector.multi_reduction <add>, %198, %cst_111 [2] : vector<2x1x4x64xf32> to vector<2x1x64xf32>
    %c0_112 = arith.constant 0 : index
    %200 = arith.index_cast %c3_i32_101 : i32 to index
    %c0_113 = arith.constant 0 : index
    %201 = vector.load %arg20[%c0_112, %200, %c0_113] : memref<2x8x64xf32, #tpu.memory_space<vmem>>, vector<2x1x64xf32>
    tpu.vector_store %arg20[%c0_112, %200, %c0_113], %199 {strides = array<i32>} : memref<2x8x64xf32, #tpu.memory_space<vmem>>, vector<2x1x64xf32>,
    %c4_i32 = arith.constant 4 : i32
    %c0_114 = arith.constant 0 : index
    %202 = arith.index_cast %c4_i32 : i32 to index
    %c0_115 = arith.constant 0 : index
    %c0_116 = arith.constant 0 : index
    %203 = vector.load %arg17[%c0_114, %202, %c0_115, %c0_116] : memref<2x8x4x64xf32, #tpu.memory_space<vmem>>, vector<2x1x4x64xf32>
    %c0_117 = arith.constant 0 : index
    %204 = arith.index_cast %c4_i32 : i32 to index
    %c0_118 = arith.constant 0 : index
    %c0_119 = arith.constant 0 : index
    %205 = vector.load %arg18[%c0_117, %204, %c0_118, %c0_119] : memref<2x8x4x64xf32, #tpu.memory_space<vmem>>, vector<2x1x4x64xf32>
    %206 = arith.mulf %203, %194 : vector<2x1x4x64xf32>
    %207 = arith.addf %206, %205 : vector<2x1x4x64xf32>
    %c0_120 = arith.constant 0 : index
    %208 = arith.index_cast %c4_i32 : i32 to index
    %c0_121 = arith.constant 0 : index
    %c0_122 = arith.constant 0 : index
    %209 = vector.load %arg19[%c0_120, %208, %c0_121, %c0_122] : memref<2x8x4x1xf32, #tpu.memory_space<vmem>>, vector<2x1x4x1xf32>
    %210 = vector.broadcast %209 : vector<2x1x4x1xf32> to vector<2x1x4x64xf32>
    %211 = arith.mulf %207, %210 : vector<2x1x4x64xf32>
    %cst_123 = arith.constant dense<0.000000e+00> : vector<2x1x64xf32>
    %212 = vector.multi_reduction <add>, %211, %cst_123 [2] : vector<2x1x4x64xf32> to vector<2x1x64xf32>
    %c0_124 = arith.constant 0 : index
    %213 = arith.index_cast %c4_i32 : i32 to index
    %c0_125 = arith.constant 0 : index
    %214 = vector.load %arg20[%c0_124, %213, %c0_125] : memref<2x8x64xf32, #tpu.memory_space<vmem>>, vector<2x1x64xf32>
    tpu.vector_store %arg20[%c0_124, %213, %c0_125], %212 {strides = array<i32>} : memref<2x8x64xf32, #tpu.memory_space<vmem>>, vector<2x1x64xf32>,
    %c5_i32 = arith.constant 5 : i32
    %c0_126 = arith.constant 0 : index
    %215 = arith.index_cast %c5_i32 : i32 to index
    %c0_127 = arith.constant 0 : index
    %c0_128 = arith.constant 0 : index
    %216 = vector.load %arg17[%c0_126, %215, %c0_127, %c0_128] : memref<2x8x4x64xf32, #tpu.memory_space<vmem>>, vector<2x1x4x64xf32>
    %c0_129 = arith.constant 0 : index
    %217 = arith.index_cast %c5_i32 : i32 to index
    %c0_130 = arith.constant 0 : index
    %c0_131 = arith.constant 0 : index
    %218 = vector.load %arg18[%c0_129, %217, %c0_130, %c0_131] : memref<2x8x4x64xf32, #tpu.memory_space<vmem>>, vector<2x1x4x64xf32>
    %219 = arith.mulf %216, %207 : vector<2x1x4x64xf32>
    %220 = arith.addf %219, %218 : vector<2x1x4x64xf32>
    %c0_132 = arith.constant 0 : index
    %221 = arith.index_cast %c5_i32 : i32 to index
    %c0_133 = arith.constant 0 : index
    %c0_134 = arith.constant 0 : index
    %222 = vector.load %arg19[%c0_132, %221, %c0_133, %c0_134] : memref<2x8x4x1xf32, #tpu.memory_space<vmem>>, vector<2x1x4x1xf32>
    %223 = vector.broadcast %222 : vector<2x1x4x1xf32> to vector<2x1x4x64xf32>
    %224 = arith.mulf %220, %223 : vector<2x1x4x64xf32>
    %cst_135 = arith.constant dense<0.000000e+00> : vector<2x1x64xf32>
    %225 = vector.multi_reduction <add>, %224, %cst_135 [2] : vector<2x1x4x64xf32> to vector<2x1x64xf32>
    %c0_136 = arith.constant 0 : index
    %226 = arith.index_cast %c5_i32 : i32 to index
    %c0_137 = arith.constant 0 : index
    %227 = vector.load %arg20[%c0_136, %226, %c0_137] : memref<2x8x64xf32, #tpu.memory_space<vmem>>, vector<2x1x64xf32>
    tpu.vector_store %arg20[%c0_136, %226, %c0_137], %225 {strides = array<i32>} : memref<2x8x64xf32, #tpu.memory_space<vmem>>, vector<2x1x64xf32>,
    %c6_i32 = arith.constant 6 : i32
    %c0_138 = arith.constant 0 : index
    %228 = arith.index_cast %c6_i32 : i32 to index
    %c0_139 = arith.constant 0 : index
    %c0_140 = arith.constant 0 : index
    %229 = vector.load %arg17[%c0_138, %228, %c0_139, %c0_140] : memref<2x8x4x64xf32, #tpu.memory_space<vmem>>, vector<2x1x4x64xf32>
    %c0_141 = arith.constant 0 : index
    %230 = arith.index_cast %c6_i32 : i32 to index
    %c0_142 = arith.constant 0 : index
    %c0_143 = arith.constant 0 : index
    %231 = vector.load %arg18[%c0_141, %230, %c0_142, %c0_143] : memref<2x8x4x64xf32, #tpu.memory_space<vmem>>, vector<2x1x4x64xf32>
    %232 = arith.mulf %229, %220 : vector<2x1x4x64xf32>
    %233 = arith.addf %232, %231 : vector<2x1x4x64xf32>
    %c0_144 = arith.constant 0 : index
    %234 = arith.index_cast %c6_i32 : i32 to index
    %c0_145 = arith.constant 0 : index
    %c0_146 = arith.constant 0 : index
    %235 = vector.load %arg19[%c0_144, %234, %c0_145, %c0_146] : memref<2x8x4x1xf32, #tpu.memory_space<vmem>>, vector<2x1x4x1xf32>
    %236 = vector.broadcast %235 : vector<2x1x4x1xf32> to vector<2x1x4x64xf32>
    %237 = arith.mulf %233, %236 : vector<2x1x4x64xf32>
    %cst_147 = arith.constant dense<0.000000e+00> : vector<2x1x64xf32>
    %238 = vector.multi_reduction <add>, %237, %cst_147 [2] : vector<2x1x4x64xf32> to vector<2x1x64xf32>
    %c0_148 = arith.constant 0 : index
    %239 = arith.index_cast %c6_i32 : i32 to index
    %c0_149 = arith.constant 0 : index
    %240 = vector.load %arg20[%c0_148, %239, %c0_149] : memref<2x8x64xf32, #tpu.memory_space<vmem>>, vector<2x1x64xf32>
    tpu.vector_store %arg20[%c0_148, %239, %c0_149], %238 {strides = array<i32>} : memref<2x8x64xf32, #tpu.memory_space<vmem>>, vector<2x1x64xf32>,
    %c7_i32 = arith.constant 7 : i32
    %c0_150 = arith.constant 0 : index
    %241 = arith.index_cast %c7_i32 : i32 to index
    %c0_151 = arith.constant 0 : index
    %c0_152 = arith.constant 0 : index
    %242 = vector.load %arg17[%c0_150, %241, %c0_151, %c0_152] : memref<2x8x4x64xf32, #tpu.memory_space<vmem>>, vector<2x1x4x64xf32>
    %c0_153 = arith.constant 0 : index
    %243 = arith.index_cast %c7_i32 : i32 to index
    %c0_154 = arith.constant 0 : index
    %c0_155 = arith.constant 0 : index
    %244 = vector.load %arg18[%c0_153, %243, %c0_154, %c0_155] : memref<2x8x4x64xf32, #tpu.memory_space<vmem>>, vector<2x1x4x64xf32>
    %245 = arith.mulf %242, %233 : vector<2x1x4x64xf32>
    %246 = arith.addf %245, %244 : vector<2x1x4x64xf32>
    %c0_156 = arith.constant 0 : index
    %247 = arith.index_cast %c7_i32 : i32 to index
    %c0_157 = arith.constant 0 : index
    %c0_158 = arith.constant 0 : index
    %248 = vector.load %arg19[%c0_156, %247, %c0_157, %c0_158] : memref<2x8x4x1xf32, #tpu.memory_space<vmem>>, vector<2x1x4x1xf32>
    %249 = vector.broadcast %248 : vector<2x1x4x1xf32> to vector<2x1x4x64xf32>
    %250 = arith.mulf %246, %249 : vector<2x1x4x64xf32>
    %cst_159 = arith.constant dense<0.000000e+00> : vector<2x1x64xf32>
    %251 = vector.multi_reduction <add>, %250, %cst_159 [2] : vector<2x1x4x64xf32> to vector<2x1x64xf32>
    %c0_160 = arith.constant 0 : index
    %252 = arith.index_cast %c7_i32 : i32 to index
    %c0_161 = arith.constant 0 : index
    %253 = vector.load %arg20[%c0_160, %252, %c0_161] : memref<2x8x64xf32, #tpu.memory_space<vmem>>, vector<2x1x64xf32>
    tpu.vector_store %arg20[%c0_160, %252, %c0_161], %251 {strides = array<i32>} : memref<2x8x64xf32, #tpu.memory_space<vmem>>, vector<2x1x64xf32>,
    %c8_i32 = arith.constant 8 : i32
    %c0_162 = arith.constant 0 : index
    %c0_163 = arith.constant 0 : index
    %c0_164 = arith.constant 0 : index
    %254 = vector.load %arg20[%c0_162, %c0_163, %c0_164] : memref<2x8x64xf32, #tpu.memory_space<vmem>>, vector<2x8x64xf32>
    %255 = vector.shape_cast %254 : vector<2x8x64xf32> to vector<16x64xf32>
    %c0_165 = arith.constant 0 : index
    %c0_166 = arith.constant 0 : index
    %c0_167 = arith.constant 0 : index
    %256 = vector.load %arg11[%c0_165, %c0_166, %c0_167] : memref<1x1x64xf32, #tpu.memory_space<vmem>>, vector<1x1x64xf32>
    %257 = vector.shape_cast %256 : vector<1x1x64xf32> to vector<1x64xf32>
    %258 = vector.broadcast %257 : vector<1x64xf32> to vector<16x64xf32>
    %259 = arith.mulf %90, %258 : vector<16x64xf32>
    %260 = arith.addf %255, %259 : vector<16x64xf32>
    %261 = arith.mulf %260, %44 : vector<16x64xf32>
    %262 = arith.truncf %261 : vector<16x64xf32> to vector<16x64xbf16>
    %c0_168 = arith.constant 0 : index
    %c0_169 = arith.constant 0 : index
    %c0_170 = arith.constant 0 : index
    %263 = vector.load %arg12[%c0_168, %c0_169, %c0_170] : memref<1x64x32xbf16, #tpu.memory_space<vmem>>, vector<1x64x32xbf16>
    %264 = vector.shape_cast %263 : vector<1x64x32xbf16> to vector<64x32xbf16>
    %cst_171 = arith.constant dense<0.000000e+00> : vector<16x32xf32>
    %265 = tpu.matmul %262, %264, %cst_171 {dimension_numbers = #tpu.dot_dimension_numbers<[1], [0], [0], [1], [0, 0, 1, 1], [], []>} : vector<16x64xbf16>, vector<64x32xbf16>, vector<16x32xf32> -> vector<16x32xf32>
    %cst_172 = arith.constant 5.000000e-01 : f32
    %266 = vector.broadcast %cst_172 : f32 to vector<16x32xf32>
    %267 = arith.mulf %266, %265 : vector<16x32xf32>
    %cst_173 = arith.constant 4.471500e-02 : f32
    %268 = vector.broadcast %cst_173 : f32 to vector<16x32xf32>
    %269 = arith.mulf %268, %265 : vector<16x32xf32>
    %270 = arith.mulf %269, %265 : vector<16x32xf32>
    %271 = arith.mulf %270, %265 : vector<16x32xf32>
    %272 = arith.addf %265, %271 : vector<16x32xf32>
    %cst_174 = arith.constant 0.797884583 : f32
    %273 = vector.broadcast %cst_174 : f32 to vector<16x32xf32>
    %274 = arith.mulf %273, %272 : vector<16x32xf32>
    %275 = math.tanh %274 : vector<16x32xf32>
    %cst_175 = arith.constant 1.000000e+00 : f32
    %276 = vector.broadcast %cst_175 : f32 to vector<16x32xf32>
    %277 = arith.addf %276, %275 : vector<16x32xf32>
    %278 = arith.mulf %267, %277 : vector<16x32xf32>
    %279 = arith.truncf %278 : vector<16x32xf32> to vector<16x32xbf16>
    %c0_176 = arith.constant 0 : index
    %c0_177 = arith.constant 0 : index
    %c0_178 = arith.constant 0 : index
    %280 = vector.load %arg13[%c0_176, %c0_177, %c0_178] : memref<1x32x64xbf16, #tpu.memory_space<vmem>>, vector<1x32x64xbf16>
    %281 = vector.shape_cast %280 : vector<1x32x64xbf16> to vector<32x64xbf16>
    %cst_179 = arith.constant dense<0.000000e+00> : vector<16x64xf32>
    %282 = tpu.matmul %279, %281, %cst_179 {dimension_numbers = #tpu.dot_dimension_numbers<[1], [0], [0], [1], [0, 0, 1, 1], [], []>} : vector<16x32xbf16>, vector<32x64xbf16>, vector<16x64xf32> -> vector<16x64xf32>
    %c0_180 = arith.constant 0 : index
    %c0_181 = arith.constant 0 : index
    %c0_182 = arith.constant 0 : index
    %283 = vector.load %arg14[%c0_180, %c0_181, %c0_182] : memref<1x1x64xf32, #tpu.memory_space<vmem>>, vector<1x1x64xf32>
    %284 = vector.shape_cast %283 : vector<1x1x64xf32> to vector<1x64xf32>
    %285 = vector.broadcast %284 : vector<1x64xf32> to vector<16x64xf32>
    %286 = arith.addf %282, %285 : vector<16x64xf32>
    %287 = vector.extract_strided_slice %286 {offsets = [0, 0], sizes = [16, 32], strides = [1, 1]} : vector<16x64xf32> to vector<16x32xf32>
    %288 = vector.extract_strided_slice %286 {offsets = [0, 32], sizes = [16, 32], strides = [1, 1]} : vector<16x64xf32> to vector<16x32xf32>
    %cst_183 = arith.constant 0.000000e+00 : f32
    %289 = vector.broadcast %cst_183 : f32 to vector<16x32xf32>
    %290 = arith.subf %289, %288 : vector<16x32xf32>
    %291 = math.exp %290 : vector<16x32xf32>
    %cst_184 = arith.constant 1.000000e+00 : f32
    %292 = vector.broadcast %cst_184 : f32 to vector<16x32xf32>
    %293 = arith.addf %292, %291 : vector<16x32xf32>
    %cst_185 = arith.constant 1.000000e+00 : f32
    %294 = vector.broadcast %cst_185 : f32 to vector<16x32xf32>
    %295 = arith.divf %294, %293 : vector<16x32xf32>
    %296 = arith.mulf %287, %295 : vector<16x32xf32>
    %297 = arith.addf %296, %3 : vector<16x32xf32>
    %c0_186 = arith.constant 0 : index
    %c0_187 = arith.constant 0 : index
    %298 = vector.load %arg16[%c0_186, %c0_187] : memref<16x32xf32, #tpu.memory_space<vmem>>, vector<16x32xf32>
    tpu.vector_store %arg16[%c0_186, %c0_187], %297 {strides = array<i32>} : memref<16x32xf32, #tpu.memory_space<vmem>>, vector<16x32xf32>,
    %c1_i32_188 = arith.constant 1 : i32
    %299 = arith.cmpi eq, %arg1, %c1_i32_188 : i32
    %300 = arith.extui %299 : i1 to i32
    %c0_i32_189 = arith.constant 0 : i32
    %301 = arith.cmpi ne, %300, %c0_i32_189 : i32
    scf.if %301 {
      %302 = vector.shape_cast %297 : vector<16x32xf32> to vector<2x8x32xf32>
      %cst_190 = arith.constant dense<0.000000e+00> : vector<2x32xf32>
      %303 = vector.multi_reduction <add>, %302, %cst_190 [1] : vector<2x8x32xf32> to vector<2x32xf32>
      %304 = vector.shape_cast %303 : vector<2x32xf32> to vector<2x1x32xf32>
      %cst_191 = arith.constant 8.000000e+00 : f32
      %305 = vector.broadcast %cst_191 : f32 to vector<2x1x32xf32>
      %306 = arith.divf %304, %305 : vector<2x1x32xf32>
      %c0_192 = arith.constant 0 : index
      %c0_193 = arith.constant 0 : index
      %c0_194 = arith.constant 0 : index
      %307 = vector.load %arg15[%c0_192, %c0_193, %c0_194] : memref<2x1x32xf32, #tpu.memory_space<vmem>>, vector<2x1x32xf32>
      tpu.vector_store %arg15[%c0_192, %c0_193, %c0_194], %306 {strides = array<i32>} : memref<2x1x32xf32, #tpu.memory_space<vmem>>, vector<2x1x32xf32>,
    } else {
    }
    return
  }
  func.func @transform_0(%arg0: i32, %arg1: i32) -> (i32, i32, i32) {
    %c0_i32 = arith.constant 0 : i32
    %c0_i32_0 = arith.constant 0 : i32
    %c0_i32_1 = arith.constant 0 : i32
    return %arg0, %c0_i32, %c0_i32_0 : i32, i32, i32
  }
  func.func @transform_1(%arg0: i32, %arg1: i32) -> (i32, i32, i32) {
    %c0_i32 = arith.constant 0 : i32
    %c0_i32_0 = arith.constant 0 : i32
    %c0_i32_1 = arith.constant 0 : i32
    return %arg1, %c0_i32, %c0_i32_0 : i32, i32, i32
  }
  func.func @transform_2(%arg0: i32, %arg1: i32) -> (i32, i32, i32) {
    %c0_i32 = arith.constant 0 : i32
    %c0_i32_0 = arith.constant 0 : i32
    %c0_i32_1 = arith.constant 0 : i32
    return %arg1, %c0_i32, %c0_i32_0 : i32, i32, i32
  }
  func.func @transform_3(%arg0: i32, %arg1: i32) -> (i32, i32, i32) {
    %c0_i32 = arith.constant 0 : i32
    %c0_i32_0 = arith.constant 0 : i32
    %c0_i32_1 = arith.constant 0 : i32
    return %arg1, %c0_i32, %c0_i32_0 : i32, i32, i32
  }
  func.func @transform_4(%arg0: i32, %arg1: i32) -> (i32, i32, i32) {
    %c0_i32 = arith.constant 0 : i32
    %c0_i32_0 = arith.constant 0 : i32
    %c0_i32_1 = arith.constant 0 : i32
    return %arg1, %c0_i32, %c0_i32_0 : i32, i32, i32
  }
  func.func @transform_5(%arg0: i32, %arg1: i32) -> (i32, i32, i32) {
    %c0_i32 = arith.constant 0 : i32
    %c0_i32_0 = arith.constant 0 : i32
    %c0_i32_1 = arith.constant 0 : i32
    return %arg1, %c0_i32, %c0_i32_0 : i32, i32, i32
  }
  func.func @transform_6(%arg0: i32, %arg1: i32) -> (i32, i32, i32) {
    %c0_i32 = arith.constant 0 : i32
    %c0_i32_0 = arith.constant 0 : i32
    %c0_i32_1 = arith.constant 0 : i32
    return %arg1, %c0_i32, %c0_i32_0 : i32, i32, i32
  }
  func.func @transform_7(%arg0: i32, %arg1: i32) -> (i32, i32, i32) {
    %c0_i32 = arith.constant 0 : i32
    %c0_i32_0 = arith.constant 0 : i32
    %c0_i32_1 = arith.constant 0 : i32
    return %arg1, %c0_i32, %c0_i32_0 : i32, i32, i32
  }
  func.func @transform_8(%arg0: i32, %arg1: i32) -> (i32, i32, i32) {
    %c0_i32 = arith.constant 0 : i32
    %c0_i32_0 = arith.constant 0 : i32
    %c0_i32_1 = arith.constant 0 : i32
    return %arg1, %c0_i32, %c0_i32_0 : i32, i32, i32
  }
  func.func @transform_9(%arg0: i32, %arg1: i32) -> (i32, i32, i32) {
    %c0_i32 = arith.constant 0 : i32
    %c0_i32_0 = arith.constant 0 : i32
    %c0_i32_1 = arith.constant 0 : i32
    return %arg1, %c0_i32, %c0_i32_0 : i32, i32, i32
  }
  func.func @transform_10(%arg0: i32, %arg1: i32) -> (i32, i32, i32) {
    %c0_i32 = arith.constant 0 : i32
    %c0_i32_0 = arith.constant 0 : i32
    %c0_i32_1 = arith.constant 0 : i32
    return %arg1, %c0_i32, %c0_i32_0 : i32, i32, i32
  }
  func.func @transform_11(%arg0: i32, %arg1: i32) -> (i32, i32, i32) {
    %c0_i32 = arith.constant 0 : i32
    %c0_i32_0 = arith.constant 0 : i32
    %c0_i32_1 = arith.constant 0 : i32
    return %arg1, %c0_i32, %c0_i32_0 : i32, i32, i32
  }
  func.func @transform_12(%arg0: i32, %arg1: i32) -> (i32, i32, i32) {
    %c0_i32 = arith.constant 0 : i32
    %c0_i32_0 = arith.constant 0 : i32
    %c0_i32_1 = arith.constant 0 : i32
    return %arg1, %c0_i32, %c0_i32_0 : i32, i32, i32
  }
  func.func @transform_13(%arg0: i32, %arg1: i32) -> (i32, i32, i32) {
    %c0_i32 = arith.constant 0 : i32
    %c0_i32_0 = arith.constant 0 : i32
    %c0_i32_1 = arith.constant 0 : i32
    return %arg0, %c0_i32, %c0_i32_0 : i32, i32, i32
  }
}

</mosaic_0001>

<llo_original>
// kernel: mamba_forward.3
$region0: #{mamba_forward.3}
  #allocation0 [shape = 'u32[]', space=smem, size = 0x4, offset = 0x4, fixed_abs, tag = 'smem constant byte address 0x4 - core index']
  #allocation1 [shape = 'u32[144,128]{1,0:T(1,128)}', space=vmem, size = 0x12000, scoped, tag = 'internal scratch']
  %s0 = inlined_call_operand.vmem [shape: f32[16,4], index: 0, kind: input, shape index: {}]
  %s1 = inlined_call_operand.vmem [shape: bf16[4,32], index: 1, kind: input, shape index: {}]
  %s2 = inlined_call_operand.vmem [shape: f32[1,32], index: 2, kind: input, shape index: {}]
  %s3 = inlined_call_operand.vmem [shape: f32[16,32], index: 3, kind: output, shape index: {}]
  %s4 = sld [smem:[#allocation0]]
  $region22: #{mamba_forward.3} parent=0
    _
  %s6 = ssub.s32 1, %s4
  %s7 = scalar_select 0, %s6, %s4
  // Predicated region
  $region2: #{mamba_forward.3} parent=0 // pred_check
    _
  $region3: #{mamba_forward.3} parent=0 // pred_check_branch
    %9 = sbr.rel (0) target = $region5
  $region4: #{mamba_forward.3} parent=0 // pred_region
    _
  $region5: #{mamba_forward.3} parent=0 // pred_fallthru
    _
  // Predicated region
  $region6: #{mamba_forward.3} parent=0 // pred_check
    _
  $region7: #{mamba_forward.3} parent=0 // pred_check_branch
    %11 = sbr.rel (0) target = $region9
  $region8: #{mamba_forward.3} parent=0 // pred_region
    _
  $region9: #{mamba_forward.3} parent=0 // pred_fallthru
    _
  // Predicated region
  $region10: #{mamba_forward.3} parent=0 // pred_check
    _
  $region11: #{mamba_forward.3} parent=0 // pred_check_branch
    %13 = sbr.rel (0) target = $region13
  $region12: #{mamba_forward.3} parent=0 // pred_region
    _
  $region13: #{mamba_forward.3} parent=0 // pred_fallthru
    _
  %v15 = vld [vmem:[%s0] sm:$0xff]
  %v16 = vld [vmem:[%s0 + $0x8] sm:$0xff]
  %v17 = vpack.c.bf16 %v16, %v15
  %v18 = vld [vmem:[%s1] sm:$0x3]
  %v19 = vld [vmem:[%s2] sm:$0x1]
  %v21 = vlaneseq
  %v22 = vshrl.u32 %v21, 7
  %v23 = vsub.s32 0, %v22
  %v24 = vrot.slane %v19, %v23
  %vm26 = vcmask 31744
  %v28 = vsel %vm26, %v17, 0
  %vm30 = vcmask 1041408
  %v32 = vsel %vm30, %v18, 0
  %34 = vmatprep.subr.bf16.mxu0 0
  %35 = vmatpush1.bf16.msra.mxu0 0
  %36 = vmatprep.subr.bf16.mxu0 0
  %37 = vmatpush1.bf16.msra.mxu0 0
  %38 = vmatprep.subr.bf16.mxu0 0
  %39 = vmatpush1.bf16.msra.mxu0 0
  %40 = vmatprep.subr.bf16.mxu0 0
  %41 = vmatpush1.bf16.msra.mxu0 0
  %42 = vmatprep.subr.bf16.mxu0 0
  %43 = vmatpush1.bf16.msra.mxu0 0
  %44 = vmatprep.subr.bf16.mxu0 0
  %45 = vmatpush1.bf16.msra.mxu0 0
  %46 = vmatprep.subr.bf16.mxu0 0
  %47 = vmatpush1.bf16.msra.mxu0 0
  %48 = vmatprep.subr.bf16.mxu0 0
  %49 = vmatpush1.bf16.msra.mxu0 %v32
  %50 = vmatprep.subr.bf16.mxu0 0
  %51 = vmatpush2.bf16.msra.mxu0 0
  %52 = vmatprep.subr.bf16.mxu0 0
  %53 = vmatpush2.bf16.msra.mxu0 0
  %54 = vmatprep.subr.bf16.mxu0 0
  %55 = vmatpush2.bf16.msra.mxu0 0
  %56 = vmatprep.subr.bf16.mxu0 0
  %57 = vmatpush2.bf16.msra.mxu0 0
  %58 = vmatprep.subr.bf16.mxu0 0
  %59 = vmatpush2.bf16.msra.mxu0 0
  %60 = vmatprep.subr.bf16.mxu0 0
  %61 = vmatpush2.bf16.msra.mxu0 0
  %62 = vmatprep.subr.bf16.mxu0 0
  %63 = vmatpush2.bf16.msra.mxu0 0
  %64 = vmatprep.subr.bf16.mxu0 0
  %65 = vmatpush2.bf16.msra.mxu0 0
  %66 = vmatprep.mubr.bf16.mxu0 0
  %67 = vmatmul.mubr.bf16.gmra.mxu0 %v28
  %v68 = vpop.f32.mrf.mxu0
  %v69 = vadd.f32 %v24, %v68
  %v70 = vpop.f32.mrf.mxu0
  %v71 = vpop.f32.mrf.mxu0
  %v72 = vadd.f32 %v24, %v71
  %v73 = vpop.f32.mrf.mxu0
  %74 = vdwg.mxu0
  %vm75 = vcmask 261120
  %76 = vst.msk [vmem:[%s3] sm:$0xff] %vm75, %v69
  %77 = vst.msk [vmem:[%s3 + $0x8] sm:$0xff] %vm75, %v72
  // Predicated region
  $region14: #{mamba_forward.3} parent=0 // pred_check
    _
  $region15: #{mamba_forward.3} parent=0 // pred_check_branch
    %79 = sbr.rel (0) target = $region17
  $region16: #{mamba_forward.3} parent=0 // pred_region
    _
  $region17: #{mamba_forward.3} parent=0 // pred_fallthru
    _
  // Predicated region
  $region18: #{mamba_forward.3} parent=0 // pred_check
    _
  $region19: #{mamba_forward.3} parent=0 // pred_check_branch
    %81 = sbr.rel (0) target = $region21
  $region20: #{mamba_forward.3} parent=0 // pred_region
    _
  $region21: #{mamba_forward.3} parent=0 // pred_fallthru
    _

// kernel: mamba_forward.5
$region0: #{mamba_forward.5}
  #allocation0 [shape = 'u32[]', space=smem, size = 0x4, offset = 0x4, fixed_abs, tag = 'smem constant byte address 0x4 - core index']
  #allocation1 [shape = 'u32[144,128]{1,0:T(1,128)}', space=vmem, size = 0x12000, scoped, tag = 'internal scratch']
  %s0 = inlined_call_operand.vmem [shape: f32[2,32], index: 0, kind: input, shape index: {}]
  %s1 = inlined_call_operand.vmem [shape: f32[32,4], index: 1, kind: input, shape index: {}]
  %s2 = inlined_call_operand.vmem [shape: f32[1,4], index: 2, kind: input, shape index: {}]
  %s3 = inlined_call_operand.hbm [shape: f32[2,4], index: 3, kind: output, shape index: {}]
  %s4 = sld [smem:[#allocation0]]
  $region22: #{mamba_forward.5} parent=0
    _
  %s6 = ssub.s32 1, %s4
  %s7 = scalar_select 0, %s6, %s4
  $region1: #{mamba_forward.5} parent=0
    #allocation2 [shape = 'u8[1024]{0}', space=vmem, size = 0x400, scoped, tag = 'output window, operand 0, single buffered']
    #allocation3 [shape = 's32[1]{0}', space=sflag, size = 0x4, scoped, tag = 'scoped memory for mamba_forward.5']
    %8 = vsyncpa [#allocation3], 0
    // Predicated region
    $region2: #{mamba_forward.5} parent=1 // pred_check
      _
    $region3: #{mamba_forward.5} parent=1 // pred_check_branch
      %10 = sbr.rel (0) target = $region5
    $region4: #{mamba_forward.5} parent=1 // pred_region
      _
    $region5: #{mamba_forward.5} parent=1 // pred_fallthru
      _
    // Predicated region
    $region6: #{mamba_forward.5} parent=1 // pred_check
      _
    $region7: #{mamba_forward.5} parent=1 // pred_check_branch
      %12 = sbr.rel (0) target = $region9
    $region8: #{mamba_forward.5} parent=1 // pred_region
      _
    $region9: #{mamba_forward.5} parent=1 // pred_fallthru
      _
    // Predicated region
    $region10: #{mamba_forward.5} parent=1 // pred_check
      _
    $region11: #{mamba_forward.5} parent=1 // pred_check_branch
      %14 = sbr.rel (0) target = $region13
    $region12: #{mamba_forward.5} parent=1 // pred_region
      _
    $region13: #{mamba_forward.5} parent=1 // pred_fallthru
      _
    %v15 = vld [vmem:[%s0] sm:$0x3]
    %v16 = vld [vmem:[%s1] sm:$0xff]
    %v17 = vld [vmem:[%s1 + $0x8] sm:$0xff]
    %v18 = vld [vmem:[%s1 + $0x10] sm:$0xff]
    %v19 = vld [vmem:[%s1 + $0x18] sm:$0xff]
    %v20 = vld [vmem:[%s2] sm:$0x1]
    %v22 = vlaneseq
    %v23 = vshrl.u32 %v22, 7
    %v24 = vsub.s32 0, %v23
    %v25 = vrot.slane %v20, %v24
    %vm27 = vcmask 261120
    %v29 = vsel %vm27, %v15, 0
    %31 = vmatprep.subr.mxu0 0.0
    %32 = vmatpush1.msra.mxu0 0.0
    %33 = vmatprep.subr.mxu0 0.0
    %34 = vmatpush1.msra.mxu0 0.0
    %35 = vmatprep.subr.mxu0 0.0
    %36 = vmatpush1.msra.mxu0 0.0
    %37 = vmatprep.subr.mxu0 0.0
    %38 = vmatpush1.msra.mxu0 0.0
    %39 = vmatprep.subr.mxu0 0.0
    %40 = vmatpush1.msra.mxu0 0.0
    %41 = vmatprep.subr.mxu0 0.0
    %42 = vmatpush1.msra.mxu0 0.0
    %43 = vmatprep.subr.mxu0 0.0
    %44 = vmatpush1.msra.mxu0 0.0
    %45 = vmatprep.subr.mxu0 0.0
    %46 = vmatpush1.msra.mxu0 0.0
    %47 = vmatprep.subr.mxu0 0.0
    %48 = vmatpush1.msra.mxu0 0.0
    %49 = vmatprep.subr.mxu0 0.0
    %50 = vmatpush1.msra.mxu0 0.0
    %51 = vmatprep.subr.mxu0 0.0
    %52 = vmatpush1.msra.mxu0 0.0
    %53 = vmatprep.subr.mxu0 0.0
    %54 = vmatpush1.msra.mxu0 0.0
    %55 = vmatprep.subr.mxu0 0.0
    %56 = vmatpush1.msra.mxu0 %v19
    %57 = vmatprep.subr.mxu0 0.0
    %58 = vmatpush1.msra.mxu0 %v18
    %59 = vmatprep.subr.mxu0 0.0
    %60 = vmatpush1.msra.mxu0 %v17
    %61 = vmatprep.subr.mxu0 0.0
    %62 = vmatpush1.msra.mxu0 %v16
    %63 = vmatprep.subr.mxu0 0.0
    %64 = vmatpush2.msra.mxu0 0.0
    %65 = vmatprep.subr.mxu0 0.0
    %66 = vmatpush2.msra.mxu0 0.0
    %67 = vmatprep.subr.mxu0 0.0
    %68 = vmatpush2.msra.mxu0 0.0
    %69 = vmatprep.subr.mxu0 0.0
    %70 = vmatpush2.msra.mxu0 0.0
    %71 = vmatprep.subr.mxu0 0.0
    %72 = vmatpush2.msra.mxu0 0.0
    %73 = vmatprep.subr.mxu0 0.0
    %74 = vmatpush2.msra.mxu0 0.0
    %75 = vmatprep.subr.mxu0 0.0
    %76 = vmatpush2.msra.mxu0 0.0
    %77 = vmatprep.subr.mxu0 0.0
    %78 = vmatpush2.msra.mxu0 0.0
    %79 = vmatprep.subr.mxu0 0.0
    %80 = vmatpush2.msra.mxu0 0.0
    %81 = vmatprep.subr.mxu0 0.0
    %82 = vmatpush2.msra.mxu0 0.0
    %83 = vmatprep.subr.mxu0 0.0
    %84 = vmatpush2.msra.mxu0 0.0
    %85 = vmatprep.subr.mxu0 0.0
    %86 = vmatpush2.msra.mxu0 0.0
    %87 = vmatprep.subr.mxu0 0.0
    %88 = vmatpush2.msra.mxu0 0.0
    %89 = vmatprep.subr.mxu0 0.0
    %90 = vmatpush2.msra.mxu0 0.0
    %91 = vmatprep.subr.mxu0 0.0
    %92 = vmatpush2.msra.mxu0 0.0
    %93 = vmatprep.subr.mxu0 0.0
    %94 = vmatpush2.msra.mxu0 0.0
    %95 = vmatprep.mubr.f32.mxu0 0.0
    %96 = vmatmul.mubr.f32.gmra.mxu0 %v29
    %v97 = vpop.f32.mrf.mxu0
    %v98 = vadd.f32 %v25, %v97
    %v99 = vpop.f32.mrf.mxu0
    %100 = vdwg.mxu0
    %vm101 = vcmask 25600
    %v102 = vsel %vm101, %v98, -inf
    %103 = vmax.xlane.f32.xlu0 %v102
    %v104 = vpop.xlane.xlu0 %103
    %v105 = vsub.f32 %v98, %v104
    %v106 = vmul.f32 %v105, 1.442695
    %v107 = vpow.pop %v106
    %v108 = vsel %vm101, %v107, 0.0
    %109 = vadd.xlane.f32.xlu0 %v108
    %v110 = vpop.xlane.xlu0 %109
    %v111 = vrcp.pop %v110
    %v112 = vmul.f32 %v107, %v111
    %113 = vst.msk [vmem:[#allocation2] sm:$0x3] %vm101, %v112
    // Predicated region
    $region14: #{mamba_forward.5} parent=1 // pred_check
      _
    $region15: #{mamba_forward.5} parent=1 // pred_check_branch
      %115 = sbr.rel (0) target = $region17
    $region16: #{mamba_forward.5} parent=1 // pred_region
      %s117 = ssub.s32 32, 32
      %118 = vsyncadd [#allocation3], %s117
      %s120 = sshll.u32 [#allocation2], 4
      %s121 = int_to_ptr.vmem [resolvable:$true] %s120
      %123 = dma.vmem_to_hbm [thread:$0]  %s121, 32, %s3, [#allocation3]
    $region17: #{mamba_forward.5} parent=1 // pred_fallthru
      _
    // Predicated region
    $region18: #{mamba_forward.5} parent=1 // pred_check
      _
    $region19: #{mamba_forward.5} parent=1 // pred_check_branch
      %125 = sbr.rel (0) target = $region21
    $region20: #{mamba_forward.5} parent=1 // pred_region
      %126 = dma.done [#allocation3], 32
    $region21: #{mamba_forward.5} parent=1 // pred_fallthru
      _
    %127 = vsyncpa [#allocation3], 1

// kernel: mamba_forward.4
$region0: #{mamba_forward.4}
  #allocation0 [shape = 'u32[]', space=smem, size = 0x4, offset = 0x4, fixed_abs, tag = 'smem constant byte address 0x4 - core index']
  #allocation1 [shape = 'u32[144,128]{1,0:T(1,128)}', space=vmem, size = 0x12000, scoped, tag = 'internal scratch']
  #allocation2 [shape = 'f32[16,32]{1,0:T(8,128)}', space=vmem, size = 0x2000, scoped, tag = 'scratch operand']
  #allocation3 [shape = 'f32[2,8,4,64]{3,2,1,0:T(4,128)}', space=vmem, size = 0x8000, scoped, tag = 'scratch operand']
  #allocation4 [shape = 'f32[2,8,4,64]{3,2,1,0:T(4,128)}', space=vmem, size = 0x8000, scoped, tag = 'scratch operand']
  #allocation5 [shape = 'f32[2,8,4,1]{3,2,1,0:T(4,128)}', space=vmem, size = 0x8000, scoped, tag = 'scratch operand']
  #allocation6 [shape = 'f32[2,8,64]{2,1,0:T(8,128)}', space=vmem, size = 0x2000, scoped, tag = 'scratch operand']
  %s0 = inlined_call_operand.vmem [shape: f32[2,8,32], index: 0, kind: input, shape index: {}]
  %s1 = inlined_call_operand.vmem [shape: f32[2,1,32], index: 1, kind: input, shape index: {}]
  %s2 = inlined_call_operand.vmem [shape: f32[2,1,32], index: 2, kind: input, shape index: {}]
  %s3 = inlined_call_operand.vmem [shape: bf16[2,32,128], index: 3, kind: input, shape index: {}]
  %s4 = inlined_call_operand.vmem [shape: f32[2,4,64], index: 4, kind: input, shape index: {}]
  %s5 = inlined_call_operand.vmem [shape: f32[2,1,64], index: 5, kind: input, shape index: {}]
  %s6 = inlined_call_operand.vmem [shape: bf16[2,64,72], index: 6, kind: input, shape index: {}]
  %s7 = inlined_call_operand.vmem [shape: f32[2,1,64], index: 7, kind: input, shape index: {}]
  %s8 = inlined_call_operand.vmem [shape: f32[2,4,64], index: 8, kind: input, shape index: {}]
  %s9 = inlined_call_operand.vmem [shape: f32[2,1,64], index: 9, kind: input, shape index: {}]
  %s10 = inlined_call_operand.vmem [shape: bf16[2,64,32], index: 10, kind: input, shape index: {}]
  %s11 = inlined_call_operand.vmem [shape: bf16[2,32,64], index: 11, kind: input, shape index: {}]
  %s12 = inlined_call_operand.vmem [shape: f32[2,1,64], index: 12, kind: input, shape index: {}]
  %s13 = inlined_call_operand.vmem [shape: f32[2,1,32], index: 13, kind: output, shape index: {}]
  %s14 = sld [smem:[#allocation0]]
  $region93: #{mamba_forward.4} parent=0
    _
  %s16 = ssub.s32 1, %s14
  %s17 = scalar_select 0, %s16, %s14
  loop: start=0, step=1, limit=4
  $region2: #{mamba_forward.4} parent=0 // loop_pre_header
    _
  $region3: #{mamba_forward.4} parent=0 // loop_header
    %s19 = sphi 0, %s23
    %p20 = scmp.ge.s32.totalorder %s19, 4
    %s26 = sphi 0, %s38
    %s27 = sphi 0, %s34
    %s28 = sphi 0, %s26
    %s29 = sphi 0, %s27
    %s30 = sphi 0, %s28
    %s31 = sphi 0, %s29
    %s41 = sphi 0, %s43
    %s44 = sphi 0, %s41
    %s45 = sphi 0, %s44
    %s61 = sphi 0, %s45
    %s67 = sphi 0, %s69
    %s70 = sphi 0, %s67
    %s71 = sphi 0, %s70
    %s87 = sphi 0, %s71
    %s93 = sphi 0, %s95
    %s96 = sphi 0, %s93
    %s97 = sphi 0, %s96
    %s113 = sphi 0, %s97
    %s119 = sphi 0, %s121
    %s122 = sphi 0, %s119
    %s123 = sphi 0, %s122
    %s139 = sphi 0, %s123
    %s145 = sphi 0, %s147
    %s148 = sphi 0, %s145
    %s149 = sphi 0, %s148
    %s165 = sphi 0, %s149
    %s171 = sphi 0, %s173
    %s174 = sphi 0, %s171
    %s175 = sphi 0, %s174
    %s191 = sphi 0, %s175
    %s197 = sphi 0, %s199
    %s200 = sphi 0, %s197
    %s201 = sphi 0, %s200
    %s217 = sphi 0, %s201
    %s223 = sphi 0, %s225
    %s226 = sphi 0, %s223
    %s227 = sphi 0, %s226
    %s243 = sphi 0, %s227
    %s249 = sphi 0, %s251
    %s252 = sphi 0, %s249
    %s253 = sphi 0, %s252
    %s269 = sphi 0, %s253
    %s275 = sphi 0, %s277
    %s278 = sphi 0, %s275
    %s279 = sphi 0, %s278
    %s295 = sphi 0, %s279
    %s301 = sphi 0, %s303
    %s304 = sphi 0, %s301
    %s305 = sphi 0, %s304
    %s321 = sphi 0, %s305
    %s327 = sphi 0, %s329
    %s330 = sphi 0, %s327
    %s331 = sphi 0, %s330
    %s347 = sphi 0, %s331
    %s353 = sphi 0, %s355
    %s356 = sphi 0, %s353
    %s357 = sphi 0, %s356
    %s373 = sphi 0, %s357
    %s379 = sphi 0, %s381
    %s382 = sphi 0, %s379
    %s383 = sphi 0, %s382
    %s399 = sphi 0, %s383
  $region4: #{mamba_forward.4} parent=0 // loop_header_branch
    %22 = sbr.rel (%p20) target = $region8
  $region5: #{mamba_forward.4} parent=0 // loop_body
    %s24 = ssub.s32 %s19, 1
    %s25 = ssub.s32 %s19, 2
    %s32 = sadd.s32 1, %s27
    %p33 = scmp.ge.s32.totalorder %s32, 2
    %s34 = scalar_select %p33, 0, %s32
    %s35 = sadd.s32 1, %s26
    %s36 = scalar_select %p33, %s35, %s26
    %p37 = scmp.ge.s32.totalorder %s36, 1
    %s38 = scalar_select %p37, 0, %s36
    %s39 = ssub.s32 %s26, %s38
    %p40 = scmp.eq.s32.totalorder %s39, 0
    %s42 = sadd.s32 %s41, 1
    %s43 = scalar_select %p40, %s41, %s42
    %p46 = pneg %p40
    %p47 = scmp.eq.s32.totalorder %s19, 1
    %p48 = por %p46, %p47
    %p49 = scmp.ne.s32.totalorder %s41, %s44
    %p50 = scmp.eq.s32.totalorder %s19, 0
    %p51 = por %p49, %p50
    %p52 = scmp.ne.s32.totalorder %s41, %s44
    %p53 = scmp.eq.s32.totalorder %s24, 1
    %p54 = por %p52, %p53
    %p55 = scmp.ne.s32.totalorder %s44, %s45
    %p56 = scmp.eq.s32.totalorder %s24, 0
    %p57 = por %p55, %p56
    %p58 = scmp.ne.s32.totalorder %s44, %s45
    %p59 = scmp.eq.s32.totalorder %s25, 1
    %p60 = por %p58, %p59
    %p62 = scmp.ne.s32.totalorder %s45, %s61
    %p63 = scmp.eq.s32.totalorder %s25, 0
    %p64 = por %p62, %p63
    %s65 = ssub.s32 %s27, %s34
    %p66 = scmp.eq.s32.totalorder %s65, 0
    %s68 = sadd.s32 %s67, 1
    %s69 = scalar_select %p66, %s67, %s68
    %p72 = pneg %p66
    %p73 = scmp.eq.s32.totalorder %s19, 1
    %p74 = por %p72, %p73
    %p75 = scmp.ne.s32.totalorder %s67, %s70
    %p76 = scmp.eq.s32.totalorder %s19, 0
    %p77 = por %p75, %p76
    %p78 = scmp.ne.s32.totalorder %s67, %s70
    %p79 = scmp.eq.s32.totalorder %s24, 1
    %p80 = por %p78, %p79
    %p81 = scmp.ne.s32.totalorder %s70, %s71
    %p82 = scmp.eq.s32.totalorder %s24, 0
    %p83 = por %p81, %p82
    %p84 = scmp.ne.s32.totalorder %s70, %s71
    %p85 = scmp.eq.s32.totalorder %s25, 1
    %p86 = por %p84, %p85
    %p88 = scmp.ne.s32.totalorder %s71, %s87
    %p89 = scmp.eq.s32.totalorder %s25, 0
    %p90 = por %p88, %p89
    %s91 = ssub.s32 %s27, %s34
    %p92 = scmp.eq.s32.totalorder %s91, 0
    %s94 = sadd.s32 %s93, 1
    %s95 = scalar_select %p92, %s93, %s94
    %p98 = pneg %p92
    %p99 = scmp.eq.s32.totalorder %s19, 1
    %p100 = por %p98, %p99
    %p101 = scmp.ne.s32.totalorder %s93, %s96
    %p102 = scmp.eq.s32.totalorder %s19, 0
    %p103 = por %p101, %p102
    %p104 = scmp.ne.s32.totalorder %s93, %s96
    %p105 = scmp.eq.s32.totalorder %s24, 1
    %p106 = por %p104, %p105
    %p107 = scmp.ne.s32.totalorder %s96, %s97
    %p108 = scmp.eq.s32.totalorder %s24, 0
    %p109 = por %p107, %p108
    %p110 = scmp.ne.s32.totalorder %s96, %s97
    %p111 = scmp.eq.s32.totalorder %s25, 1
    %p112 = por %p110, %p111
    %p114 = scmp.ne.s32.totalorder %s97, %s113
    %p115 = scmp.eq.s32.totalorder %s25, 0
    %p116 = por %p114, %p115
    %s117 = ssub.s32 %s27, %s34
    %p118 = scmp.eq.s32.totalorder %s117, 0
    %s120 = sadd.s32 %s119, 1
    %s121 = scalar_select %p118, %s119, %s120
    %p124 = pneg %p118
    %p125 = scmp.eq.s32.totalorder %s19, 1
    %p126 = por %p124, %p125
    %p127 = scmp.ne.s32.totalorder %s119, %s122
    %p128 = scmp.eq.s32.totalorder %s19, 0
    %p129 = por %p127, %p128
    %p130 = scmp.ne.s32.totalorder %s119, %s122
    %p131 = scmp.eq.s32.totalorder %s24, 1
    %p132 = por %p130, %p131
    %p133 = scmp.ne.s32.totalorder %s122, %s123
    %p134 = scmp.eq.s32.totalorder %s24, 0
    %p135 = por %p133, %p134
    %p136 = scmp.ne.s32.totalorder %s122, %s123
    %p137 = scmp.eq.s32.totalorder %s25, 1
    %p138 = por %p136, %p137
    %p140 = scmp.ne.s32.totalorder %s123, %s139
    %p141 = scmp.eq.s32.totalorder %s25, 0
    %p142 = por %p140, %p141
    %s143 = ssub.s32 %s27, %s34
    %p144 = scmp.eq.s32.totalorder %s143, 0
    %s146 = sadd.s32 %s145, 1
    %s147 = scalar_select %p144, %s145, %s146
    %p150 = pneg %p144
    %p151 = scmp.eq.s32.totalorder %s19, 1
    %p152 = por %p150, %p151
    %p153 = scmp.ne.s32.totalorder %s145, %s148
    %p154 = scmp.eq.s32.totalorder %s19, 0
    %p155 = por %p153, %p154
    %p156 = scmp.ne.s32.totalorder %s145, %s148
    %p157 = scmp.eq.s32.totalorder %s24, 1
    %p158 = por %p156, %p157
    %p159 = scmp.ne.s32.totalorder %s148, %s149
    %p160 = scmp.eq.s32.totalorder %s24, 0
    %p161 = por %p159, %p160
    %p162 = scmp.ne.s32.totalorder %s148, %s149
    %p163 = scmp.eq.s32.totalorder %s25, 1
    %p164 = por %p162, %p163
    %p166 = scmp.ne.s32.totalorder %s149, %s165
    %p167 = scmp.eq.s32.totalorder %s25, 0
    %p168 = por %p166, %p167
    %s169 = ssub.s32 %s27, %s34
    %p170 = scmp.eq.s32.totalorder %s169, 0
    %s172 = sadd.s32 %s171, 1
    %s173 = scalar_select %p170, %s171, %s172
    %p176 = pneg %p170
    %p177 = scmp.eq.s32.totalorder %s19, 1
    %p178 = por %p176, %p177
    %p179 = scmp.ne.s32.totalorder %s171, %s174
    %p180 = scmp.eq.s32.totalorder %s19, 0
    %p181 = por %p179, %p180
    %p182 = scmp.ne.s32.totalorder %s171, %s174
    %p183 = scmp.eq.s32.totalorder %s24, 1
    %p184 = por %p182, %p183
    %p185 = scmp.ne.s32.totalorder %s174, %s175
    %p186 = scmp.eq.s32.totalorder %s24, 0
    %p187 = por %p185, %p186
    %p188 = scmp.ne.s32.totalorder %s174, %s175
    %p189 = scmp.eq.s32.totalorder %s25, 1
    %p190 = por %p188, %p189
    %p192 = scmp.ne.s32.totalorder %s175, %s191
    %p193 = scmp.eq.s32.totalorder %s25, 0
    %p194 = por %p192, %p193
    %s195 = ssub.s32 %s27, %s34
    %p196 = scmp.eq.s32.totalorder %s195, 0
    %s198 = sadd.s32 %s197, 1
    %s199 = scalar_select %p196, %s197, %s198
    %p202 = pneg %p196
    %p203 = scmp.eq.s32.totalorder %s19, 1
    %p204 = por %p202, %p203
    %p205 = scmp.ne.s32.totalorder %s197, %s200
    %p206 = scmp.eq.s32.totalorder %s19, 0
    %p207 = por %p205, %p206
    %p208 = scmp.ne.s32.totalorder %s197, %s200
    %p209 = scmp.eq.s32.totalorder %s24, 1
    %p210 = por %p208, %p209
    %p211 = scmp.ne.s32.totalorder %s200, %s201
    %p212 = scmp.eq.s32.totalorder %s24, 0
    %p213 = por %p211, %p212
    %p214 = scmp.ne.s32.totalorder %s200, %s201
    %p215 = scmp.eq.s32.totalorder %s25, 1
    %p216 = por %p214, %p215
    %p218 = scmp.ne.s32.totalorder %s201, %s217
    %p219 = scmp.eq.s32.totalorder %s25, 0
    %p220 = por %p218, %p219
    %s221 = ssub.s32 %s27, %s34
    %p222 = scmp.eq.s32.totalorder %s221, 0
    %s224 = sadd.s32 %s223, 1
    %s225 = scalar_select %p222, %s223, %s224
    %p228 = pneg %p222
    %p229 = scmp.eq.s32.totalorder %s19, 1
    %p230 = por %p228, %p229
    %p231 = scmp.ne.s32.totalorder %s223, %s226
    %p232 = scmp.eq.s32.totalorder %s19, 0
    %p233 = por %p231, %p232
    %p234 = scmp.ne.s32.totalorder %s223, %s226
    %p235 = scmp.eq.s32.totalorder %s24, 1
    %p236 = por %p234, %p235
    %p237 = scmp.ne.s32.totalorder %s226, %s227
    %p238 = scmp.eq.s32.totalorder %s24, 0
    %p239 = por %p237, %p238
    %p240 = scmp.ne.s32.totalorder %s226, %s227
    %p241 = scmp.eq.s32.totalorder %s25, 1
    %p242 = por %p240, %p241
    %p244 = scmp.ne.s32.totalorder %s227, %s243
    %p245 = scmp.eq.s32.totalorder %s25, 0
    %p246 = por %p244, %p245
    %s247 = ssub.s32 %s27, %s34
    %p248 = scmp.eq.s32.totalorder %s247, 0
    %s250 = sadd.s32 %s249, 1
    %s251 = scalar_select %p248, %s249, %s250
    %p254 = pneg %p248
    %p255 = scmp.eq.s32.totalorder %s19, 1
    %p256 = por %p254, %p255
    %p257 = scmp.ne.s32.totalorder %s249, %s252
    %p258 = scmp.eq.s32.totalorder %s19, 0
    %p259 = por %p257, %p258
    %p260 = scmp.ne.s32.totalorder %s249, %s252
    %p261 = scmp.eq.s32.totalorder %s24, 1
    %p262 = por %p260, %p261
    %p263 = scmp.ne.s32.totalorder %s252, %s253
    %p264 = scmp.eq.s32.totalorder %s24, 0
    %p265 = por %p263, %p264
    %p266 = scmp.ne.s32.totalorder %s252, %s253
    %p267 = scmp.eq.s32.totalorder %s25, 1
    %p268 = por %p266, %p267
    %p270 = scmp.ne.s32.totalorder %s253, %s269
    %p271 = scmp.eq.s32.totalorder %s25, 0
    %p272 = por %p270, %p271
    %s273 = ssub.s32 %s27, %s34
    %p274 = scmp.eq.s32.totalorder %s273, 0
    %s276 = sadd.s32 %s275, 1
    %s277 = scalar_select %p274, %s275, %s276
    %p280 = pneg %p274
    %p281 = scmp.eq.s32.totalorder %s19, 1
    %p282 = por %p280, %p281
    %p283 = scmp.ne.s32.totalorder %s275, %s278
    %p284 = scmp.eq.s32.totalorder %s19, 0
    %p285 = por %p283, %p284
    %p286 = scmp.ne.s32.totalorder %s275, %s278
    %p287 = scmp.eq.s32.totalorder %s24, 1
    %p288 = por %p286, %p287
    %p289 = scmp.ne.s32.totalorder %s278, %s279
    %p290 = scmp.eq.s32.totalorder %s24, 0
    %p291 = por %p289, %p290
    %p292 = scmp.ne.s32.totalorder %s278, %s279
    %p293 = scmp.eq.s32.totalorder %s25, 1
    %p294 = por %p292, %p293
    %p296 = scmp.ne.s32.totalorder %s279, %s295
    %p297 = scmp.eq.s32.totalorder %s25, 0
    %p298 = por %p296, %p297
    %s299 = ssub.s32 %s27, %s34
    %p300 = scmp.eq.s32.totalorder %s299, 0
    %s302 = sadd.s32 %s301, 1
    %s303 = scalar_select %p300, %s301, %s302
    %p306 = pneg %p300
    %p307 = scmp.eq.s32.totalorder %s19, 1
    %p308 = por %p306, %p307
    %p309 = scmp.ne.s32.totalorder %s301, %s304
    %p310 = scmp.eq.s32.totalorder %s19, 0
    %p311 = por %p309, %p310
    %p312 = scmp.ne.s32.totalorder %s301, %s304
    %p313 = scmp.eq.s32.totalorder %s24, 1
    %p314 = por %p312, %p313
    %p315 = scmp.ne.s32.totalorder %s304, %s305
    %p316 = scmp.eq.s32.totalorder %s24, 0
    %p317 = por %p315, %p316
    %p318 = scmp.ne.s32.totalorder %s304, %s305
    %p319 = scmp.eq.s32.totalorder %s25, 1
    %p320 = por %p318, %p319
    %p322 = scmp.ne.s32.totalorder %s305, %s321
    %p323 = scmp.eq.s32.totalorder %s25, 0
    %p324 = por %p322, %p323
    %s325 = ssub.s32 %s27, %s34
    %p326 = scmp.eq.s32.totalorder %s325, 0
    %s328 = sadd.s32 %s327, 1
    %s329 = scalar_select %p326, %s327, %s328
    %p332 = pneg %p326
    %p333 = scmp.eq.s32.totalorder %s19, 1
    %p334 = por %p332, %p333
    %p335 = scmp.ne.s32.totalorder %s327, %s330
    %p336 = scmp.eq.s32.totalorder %s19, 0
    %p337 = por %p335, %p336
    %p338 = scmp.ne.s32.totalorder %s327, %s330
    %p339 = scmp.eq.s32.totalorder %s24, 1
    %p340 = por %p338, %p339
    %p341 = scmp.ne.s32.totalorder %s330, %s331
    %p342 = scmp.eq.s32.totalorder %s24, 0
    %p343 = por %p341, %p342
    %p344 = scmp.ne.s32.totalorder %s330, %s331
    %p345 = scmp.eq.s32.totalorder %s25, 1
    %p346 = por %p344, %p345
    %p348 = scmp.ne.s32.totalorder %s331, %s347
    %p349 = scmp.eq.s32.totalorder %s25, 0
    %p350 = por %p348, %p349
    %s351 = ssub.s32 %s27, %s34
    %p352 = scmp.eq.s32.totalorder %s351, 0
    %s354 = sadd.s32 %s353, 1
    %s355 = scalar_select %p352, %s353, %s354
    %p358 = pneg %p352
    %p359 = scmp.eq.s32.totalorder %s19, 1
    %p360 = por %p358, %p359
    %p361 = scmp.ne.s32.totalorder %s353, %s356
    %p362 = scmp.eq.s32.totalorder %s19, 0
    %p363 = por %p361, %p362
    %p364 = scmp.ne.s32.totalorder %s353, %s356
    %p365 = scmp.eq.s32.totalorder %s24, 1
    %p366 = por %p364, %p365
    %p367 = scmp.ne.s32.totalorder %s356, %s357
    %p368 = scmp.eq.s32.totalorder %s24, 0
    %p369 = por %p367, %p368
    %p370 = scmp.ne.s32.totalorder %s356, %s357
    %p371 = scmp.eq.s32.totalorder %s25, 1
    %p372 = por %p370, %p371
    %p374 = scmp.ne.s32.totalorder %s357, %s373
    %p375 = scmp.eq.s32.totalorder %s25, 0
    %p376 = por %p374, %p375
    %s377 = ssub.s32 %s26, %s38
    %p378 = scmp.eq.s32.totalorder %s377, 0
    %s380 = sadd.s32 %s379, 1
    %s381 = scalar_select %p378, %s379, %s380
    %p384 = pneg %p378
    %p385 = scmp.eq.s32.totalorder %s19, 1
    %p386 = por %p384, %p385
    %p387 = scmp.ne.s32.totalorder %s379, %s382
    %p388 = scmp.eq.s32.totalorder %s19, 0
    %p389 = por %p387, %p388
    %p390 = scmp.ne.s32.totalorder %s379, %s382
    %p391 = scmp.eq.s32.totalorder %s24, 1
    %p392 = por %p390, %p391
    %p393 = scmp.ne.s32.totalorder %s382, %s383
    %p394 = scmp.eq.s32.totalorder %s24, 0
    %p395 = por %p393, %p394
    %p396 = scmp.ne.s32.totalorder %s382, %s383
    %p397 = scmp.eq.s32.totalorder %s25, 1
    %p398 = por %p396, %p397
    %p400 = scmp.ne.s32.totalorder %s383, %s399
    %p401 = scmp.eq.s32.totalorder %s25, 0
    %p402 = por %p400, %p401
    %p403 = scmp.le.s32.totalorder 1, %s19
    %p404 = scmp.lt.s32.totalorder %s19, 3
    %p405 = pnand %p403, %p404
    %p406 = pneg %p405
    // Predicated region
    $region9: #{mamba_forward.4} parent=5 // pred_check
      _
    $region10: #{mamba_forward.4} parent=5 // pred_check_branch
      %408 = sbr.rel (%p405) target = $region12
    $region11: #{mamba_forward.4} parent=5 // pred_region
      %s409 = ssub.s32 %s19, 1
      // Predicated region
      $region13: #{mamba_forward.4} parent=11 // pred_check
        %p410 = pneg %p57
      $region14: #{mamba_forward.4} parent=11 // pred_check_branch
        %412 = sbr.rel (%p410) target = $region16
      $region15: #{mamba_forward.4} parent=11 // pred_region
        %s413 = smul.u32 2, %s28
        %p414 = scmp.lt.s32.totalorder %s413, 1
        %s415 = scalar_select %p414, %s413, 1
        %s416 = smul.addr %s415, 8
        %s417 = scalar_lea.vmem %s0, %s416
        %s418 = smul.u32 2, %s28
      $region16: #{mamba_forward.4} parent=11 // pred_fallthru
        _
    $region12: #{mamba_forward.4} parent=5 // pred_fallthru
      _
    %p419 = scmp.lt.s32.totalorder %s19, 2
    // Predicated region
    $region17: #{mamba_forward.4} parent=5 // pred_check
      %p420 = pneg %p419
    $region18: #{mamba_forward.4} parent=5 // pred_check_branch
      %422 = sbr.rel (%p420) target = $region20
    $region19: #{mamba_forward.4} parent=5 // pred_region
      // Predicated region
      $region21: #{mamba_forward.4} parent=19 // pred_check
        %p423 = pneg %p77
      $region22: #{mamba_forward.4} parent=19 // pred_check_branch
        %425 = sbr.rel (%p423) target = $region24
      $region23: #{mamba_forward.4} parent=19 // pred_region
        %p426 = scmp.lt.s32.totalorder %s27, 1
        %s427 = scalar_select %p426, %s27, 1
        %s428 = scalar_lea.vmem %s1, %s427
      $region24: #{mamba_forward.4} parent=19 // pred_fallthru
        _
      // Predicated region
      $region25: #{mamba_forward.4} parent=19 // pred_check
        %p429 = pneg %p103
      $region26: #{mamba_forward.4} parent=19 // pred_check_branch
        %431 = sbr.rel (%p429) target = $region28
      $region27: #{mamba_forward.4} parent=19 // pred_region
        %p432 = scmp.lt.s32.totalorder %s27, 1
        %s433 = scalar_select %p432, %s27, 1
        %s434 = scalar_lea.vmem %s2, %s433
      $region28: #{mamba_forward.4} parent=19 // pred_fallthru
        _
      // Predicated region
      $region29: #{mamba_forward.4} parent=19 // pred_check
        %p435 = pneg %p129
      $region30: #{mamba_forward.4} parent=19 // pred_check_branch
        %437 = sbr.rel (%p435) target = $region32
      $region31: #{mamba_forward.4} parent=19 // pred_region
        %p438 = scmp.lt.s32.totalorder %s27, 1
        %s439 = scalar_select %p438, %s27, 1
        %s440 = smul.addr %s439, 4
        %s441 = smul.addr %s440, 4
        %s442 = scalar_lea.vmem %s3, %s441
      $region32: #{mamba_forward.4} parent=19 // pred_fallthru
        _
      // Predicated region
      $region33: #{mamba_forward.4} parent=19 // pred_check
        %p443 = pneg %p155
      $region34: #{mamba_forward.4} parent=19 // pred_check_branch
        %445 = sbr.rel (%p443) target = $region36
      $region35: #{mamba_forward.4} parent=19 // pred_region
        %p446 = scmp.lt.s32.totalorder %s27, 1
        %s447 = scalar_select %p446, %s27, 1
        %s448 = smul.addr %s447, 4
        %s449 = scalar_lea.vmem %s4, %s448
      $region36: #{mamba_forward.4} parent=19 // pred_fallthru
        _
      // Predicated region
      $region37: #{mamba_forward.4} parent=19 // pred_check
        %p450 = pneg %p181
      $region38: #{mamba_forward.4} parent=19 // pred_check_branch
        %452 = sbr.rel (%p450) target = $region40
      $region39: #{mamba_forward.4} parent=19 // pred_region
        %p453 = scmp.lt.s32.totalorder %s27, 1
        %s454 = scalar_select %p453, %s27, 1
        %s455 = scalar_lea.vmem %s5, %s454
      $region40: #{mamba_forward.4} parent=19 // pred_fallthru
        _
      // Predicated region
      $region41: #{mamba_forward.4} parent=19 // pred_check
        %p456 = pneg %p207
      $region42: #{mamba_forward.4} parent=19 // pred_check_branch
        %458 = sbr.rel (%p456) target = $region44
      $region43: #{mamba_forward.4} parent=19 // pred_region
        %p459 = scmp.lt.s32.totalorder %s27, 1
        %s460 = scalar_select %p459, %s27, 1
        %s461 = smul.addr %s460, 8
        %s462 = smul.addr %s461, 4
        %s463 = scalar_lea.vmem %s6, %s462
      $region44: #{mamba_forward.4} parent=19 // pred_fallthru
        _
      // Predicated region
      $region45: #{mamba_forward.4} parent=19 // pred_check
        %p464 = pneg %p233
      $region46: #{mamba_forward.4} parent=19 // pred_check_branch
        %466 = sbr.rel (%p464) target = $region48
      $region47: #{mamba_forward.4} parent=19 // pred_region
        %p467 = scmp.lt.s32.totalorder %s27, 1
        %s468 = scalar_select %p467, %s27, 1
        %s469 = scalar_lea.vmem %s7, %s468
      $region48: #{mamba_forward.4} parent=19 // pred_fallthru
        _
      // Predicated region
      $region49: #{mamba_forward.4} parent=19 // pred_check
        %p470 = pneg %p259
      $region50: #{mamba_forward.4} parent=19 // pred_check_branch
        %472 = sbr.rel (%p470) target = $region52
      $region51: #{mamba_forward.4} parent=19 // pred_region
        %p473 = scmp.lt.s32.totalorder %s27, 1
        %s474 = scalar_select %p473, %s27, 1
        %s475 = smul.addr %s474, 4
        %s476 = scalar_lea.vmem %s8, %s475
      $region52: #{mamba_forward.4} parent=19 // pred_fallthru
        _
      // Predicated region
      $region53: #{mamba_forward.4} parent=19 // pred_check
        %p477 = pneg %p285
      $region54: #{mamba_forward.4} parent=19 // pred_check_branch
        %479 = sbr.rel (%p477) target = $region56
      $region55: #{mamba_forward.4} parent=19 // pred_region
        %p480 = scmp.lt.s32.totalorder %s27, 1
        %s481 = scalar_select %p480, %s27, 1
        %s482 = scalar_lea.vmem %s9, %s481
      $region56: #{mamba_forward.4} parent=19 // pred_fallthru
        _
      // Predicated region
      $region57: #{mamba_forward.4} parent=19 // pred_check
        %p483 = pneg %p311
      $region58: #{mamba_forward.4} parent=19 // pred_check_branch
        %485 = sbr.rel (%p483) target = $region60
      $region59: #{mamba_forward.4} parent=19 // pred_region
        %p486 = scmp.lt.s32.totalorder %s27, 1
        %s487 = scalar_select %p486, %s27, 1
        %s488 = smul.addr %s487, 8
        %s489 = smul.addr %s488, 4
        %s490 = scalar_lea.vmem %s10, %s489
      $region60: #{mamba_forward.4} parent=19 // pred_fallthru
        _
      // Predicated region
      $region61: #{mamba_forward.4} parent=19 // pred_check
        %p491 = pneg %p337
      $region62: #{mamba_forward.4} parent=19 // pred_check_branch
        %493 = sbr.rel (%p491) target = $region64
      $region63: #{mamba_forward.4} parent=19 // pred_region
        %p494 = scmp.lt.s32.totalorder %s27, 1
        %s495 = scalar_select %p494, %s27, 1
        %s496 = smul.addr %s495, 4
        %s497 = smul.addr %s496, 4
        %s498 = scalar_lea.vmem %s11, %s497
      $region64: #{mamba_forward.4} parent=19 // pred_fallthru
        _
      // Predicated region
      $region65: #{mamba_forward.4} parent=19 // pred_check
        %p499 = pneg %p363
      $region66: #{mamba_forward.4} parent=19 // pred_check_branch
        %501 = sbr.rel (%p499) target = $region68
      $region67: #{mamba_forward.4} parent=19 // pred_region
        %p502 = scmp.lt.s32.totalorder %s27, 1
        %s503 = scalar_select %p502, %s27, 1
        %s504 = scalar_lea.vmem %s12, %s503
      $region68: #{mamba_forward.4} parent=19 // pred_fallthru
        _
    $region20: #{mamba_forward.4} parent=5 // pred_fallthru
      _
    %p505 = scmp.le.s32.totalorder 1, %s19
    %p506 = scmp.lt.s32.totalorder %s19, 3
    %p507 = pnand %p505, %p506
    %p508 = pneg %p507
    // Predicated region
    $region69: #{mamba_forward.4} parent=5 // pred_check
      _
    $region70: #{mamba_forward.4} parent=5 // pred_check_branch
      %510 = sbr.rel (%p507) target = $region72
    $region71: #{mamba_forward.4} parent=5 // pred_region
      %s511 = ssub.s32 %s19, 1
      %s512 = smul.u32 2, %s28
      %p513 = scmp.lt.s32.totalorder %s512, 1
      %s514 = scalar_select %p513, %s512, 1
      %s515 = smul.addr %s514, 8
      %s516 = scalar_lea.vmem %s0, %s515
      %p517 = pneg %p57
      %p518 = pneg %p54
      %p519 = scmp.lt.s32.totalorder %s29, 1
      %s520 = scalar_select %p519, %s29, 1
      %s521 = scalar_lea.vmem %s1, %s520
      %p522 = pneg %p83
      %p523 = pneg %p80
      %p524 = scmp.lt.s32.totalorder %s29, 1
      %s525 = scalar_select %p524, %s29, 1
      %s526 = scalar_lea.vmem %s2, %s525
      %p527 = pneg %p109
      %p528 = pneg %p106
      %p529 = scmp.lt.s32.totalorder %s29, 1
      %s530 = scalar_select %p529, %s29, 1
      %s531 = smul.addr %s530, 4
      %s532 = smul.addr %s531, 4
      %s533 = scalar_lea.vmem %s3, %s532
      %p534 = pneg %p135
      %p535 = pneg %p132
      %p536 = scmp.lt.s32.totalorder %s29, 1
      %s537 = scalar_select %p536, %s29, 1
      %s538 = smul.addr %s537, 4
      %s539 = scalar_lea.vmem %s4, %s538
      %p540 = pneg %p161
      %p541 = pneg %p158
      %p542 = scmp.lt.s32.totalorder %s29, 1
      %s543 = scalar_select %p542, %s29, 1
      %s544 = scalar_lea.vmem %s5, %s543
      %p545 = pneg %p187
      %p546 = pneg %p184
      %p547 = scmp.lt.s32.totalorder %s29, 1
      %s548 = scalar_select %p547, %s29, 1
      %s549 = smul.addr %s548, 8
      %s550 = smul.addr %s549, 4
      %s551 = scalar_lea.vmem %s6, %s550
      %p552 = pneg %p213
      %p553 = pneg %p210
      %p554 = scmp.lt.s32.totalorder %s29, 1
      %s555 = scalar_select %p554, %s29, 1
      %s556 = scalar_lea.vmem %s7, %s555
      %p557 = pneg %p239
      %p558 = pneg %p236
      %p559 = scmp.lt.s32.totalorder %s29, 1
      %s560 = scalar_select %p559, %s29, 1
      %s561 = smul.addr %s560, 4
      %s562 = scalar_lea.vmem %s8, %s561
      %p563 = pneg %p265
      %p564 = pneg %p262
      %p565 = scmp.lt.s32.totalorder %s29, 1
      %s566 = scalar_select %p565, %s29, 1
      %s567 = scalar_lea.vmem %s9, %s566
      %p568 = pneg %p291
      %p569 = pneg %p288
      %p570 = scmp.lt.s32.totalorder %s29, 1
      %s571 = scalar_select %p570, %s29, 1
      %s572 = smul.addr %s571, 8
      %s573 = smul.addr %s572, 4
      %s574 = scalar_lea.vmem %s10, %s573
      %p575 = pneg %p317
      %p576 = pneg %p314
      %p577 = scmp.lt.s32.totalorder %s29, 1
      %s578 = scalar_select %p577, %s29, 1
      %s579 = smul.addr %s578, 4
      %s580 = smul.addr %s579, 4
      %s581 = scalar_lea.vmem %s11, %s580
      %p582 = pneg %p343
      %p583 = pneg %p340
      %p584 = scmp.lt.s32.totalorder %s29, 1
      %s585 = scalar_select %p584, %s29, 1
      %s586 = scalar_lea.vmem %s12, %s585
      %p587 = pneg %p369
      %p588 = pneg %p366
      %p589 = pneg %p395
      %p590 = pneg %p392
      %s591 = smul.u32 2, %s28
      %p592 = scmp.lt.s32.totalorder %s591, 1
      %s593 = scalar_select %p592, %s591, 1
      %s594 = scalar_lea.vmem %s13, %s593
      %s595 = smul.u32 2, %s28
      %p596 = scmp.lt.s32.totalorder %s595, 1
      %s597 = scalar_select %p596, %s595, 1
      %s598 = smul.addr %s597, 8
      %s599 = scalar_lea.vmem %s0, %s598
      %s600 = smul.u32 2, %s28
      %p601 = scmp.lt.s32.totalorder %s29, 1
      %s602 = scalar_select %p601, %s29, 1
      %s603 = scalar_lea.vmem %s1, %s602
      %p604 = scmp.lt.s32.totalorder %s29, 1
      %s605 = scalar_select %p604, %s29, 1
      %s606 = scalar_lea.vmem %s2, %s605
      %p607 = scmp.lt.s32.totalorder %s29, 1
      %s608 = scalar_select %p607, %s29, 1
      %s609 = smul.addr %s608, 4
      %s610 = smul.addr %s609, 4
      %s611 = scalar_lea.vmem %s3, %s610
      %p612 = scmp.lt.s32.totalorder %s29, 1
      %s613 = scalar_select %p612, %s29, 1
      %s614 = smul.addr %s613, 4
      %s615 = scalar_lea.vmem %s4, %s614
      %p616 = scmp.lt.s32.totalorder %s29, 1
      %s617 = scalar_select %p616, %s29, 1
      %s618 = scalar_lea.vmem %s5, %s617
      %p619 = scmp.lt.s32.totalorder %s29, 1
      %s620 = scalar_select %p619, %s29, 1
      %s621 = smul.addr %s620, 8
      %s622 = smul.addr %s621, 4
      %s623 = scalar_lea.vmem %s6, %s622
      %p624 = scmp.lt.s32.totalorder %s29, 1
      %s625 = scalar_select %p624, %s29, 1
      %s626 = scalar_lea.vmem %s7, %s625
      %p627 = scmp.lt.s32.totalorder %s29, 1
      %s628 = scalar_select %p627, %s29, 1
      %s629 = smul.addr %s628, 4
      %s630 = scalar_lea.vmem %s8, %s629
      %p631 = scmp.lt.s32.totalorder %s29, 1
      %s632 = scalar_select %p631, %s29, 1
      %s633 = scalar_lea.vmem %s9, %s632
      %p634 = scmp.lt.s32.totalorder %s29, 1
      %s635 = scalar_select %p634, %s29, 1
      %s636 = smul.addr %s635, 8
      %s637 = smul.addr %s636, 4
      %s638 = scalar_lea.vmem %s10, %s637
      %p639 = scmp.lt.s32.totalorder %s29, 1
      %s640 = scalar_select %p639, %s29, 1
      %s641 = smul.addr %s640, 4
      %s642 = smul.addr %s641, 4
      %s643 = scalar_lea.vmem %s11, %s642
      %p644 = scmp.lt.s32.totalorder %s29, 1
      %s645 = scalar_select %p644, %s29, 1
      %s646 = scalar_lea.vmem %s12, %s645
      %s647 = smul.u32 2, %s28
      %p648 = scmp.lt.s32.totalorder %s647, 1
      %s649 = scalar_select %p648, %s647, 1
      %s650 = scalar_lea.vmem %s13, %s649
      %s651 = smul.u32 2, %s28
      %p653 = scmp.eq.s32.totalorder %s29, 0
      // Predicated region
      $region73: #{mamba_forward.4} parent=71 // pred_check
        %p654 = pneg %p653
      $region74: #{mamba_forward.4} parent=71 // pred_check_branch
        %656 = sbr.rel (%p654) target = $region76
      $region75: #{mamba_forward.4} parent=71 // pred_region
        %v657 = vld [vmem:[%s599] sm:$0xff]
        %v658 = vld [vmem:[%s599 + $0x8] sm:$0xff]
        %vm659 = vcmask 261120
        %660 = vst.msk [vmem:[#allocation2] sm:$0xff] %vm659, %v657
        %661 = vst.msk [vmem:[#allocation2 + $0x8] sm:$0xff] %vm659, %v658
      $region76: #{mamba_forward.4} parent=71 // pred_fallthru
        _
      %v662 = vld [vmem:[#allocation2] sm:$0xff]
      %v663 = vld [vmem:[#allocation2 + $0x8] sm:$0xff]
      %vm664 = vcmask 261120
      %v665 = vsel %vm664, %v662, 0.0
      %666 = vadd.xlane.f32.xlu0 %v665
      %v667 = vpop.xlane.xlu0 %666
      %v668 = vsel %vm664, %v663, 0.0
      %669 = vadd.xlane.f32.xlu0 %v668
      %v670 = vpop.xlane.xlu0 %669
      %v671 = vrcp.pop 32.0
      %v672 = vmul.f32 %v667, %v671
      %v673 = vmul.f32 %v670, %v671
      %v674 = vsub.f32 %v662, %v672
      %v675 = vsub.f32 %v663, %v673
      %v676 = vmul.f32 %v674, %v674
      %v677 = vmul.f32 %v675, %v675
      %v678 = vsel %vm664, %v676, 0.0
      %679 = vadd.xlane.f32.xlu0 %v678
      %v680 = vpop.xlane.xlu0 %679
      %v681 = vsel %vm664, %v677, 0.0
      %682 = vadd.xlane.f32.xlu0 %v681
      %v683 = vpop.xlane.xlu0 %682
      %v684 = vmul.f32 %v680, %v671
      %v685 = vmul.f32 %v683, %v671
      %v686 = vadd.f32 %v684, 1e-05
      %v687 = vadd.f32 %v685, 1e-05
      %v688 = vrsqrt.pop %v686
      %v689 = vrsqrt.pop %v687
      %v690 = vmul.f32 %v674, %v688
      %v691 = vmul.f32 %v675, %v689
      %v692 = vld [vmem:[%s603] sm:$0x1]
      %v694 = vlaneseq
      %v695 = vshrl.u32 %v694, 7
      %v696 = vsub.s32 0, %v695
      %v697 = vrot.slane %v692, %v696
      %v699 = vmul.f32 %v690, %v697
      %v700 = vmul.f32 %v691, %v697
      %v701 = vld [vmem:[%s606] sm:$0x1]
      %v703 = vlaneseq
      %v704 = vshrl.u32 %v703, 7
      %v705 = vsub.s32 0, %v704
      %v706 = vrot.slane %v701, %v705
      %v708 = vadd.f32 %v699, %v706
      %v709 = vadd.f32 %v700, %v706
      %v710 = vpack.c.bf16 %v709, %v708
      %v711 = vld [vmem:[%s611] sm:$0xf]
      %v712 = vld [vmem:[%s611 + $0x4] sm:$0xf]
      %v713 = vld [vmem:[%s611 + $0x8] sm:$0xf]
      %v714 = vld [vmem:[%s611 + $0xc] sm:$0xf]
      %v719 = vunpack.c.l.b16 %v711
      %v720 = vunpack.c.l.b16 %v712
      %v721 = vunpack.c.l.b16 %v713
      %v722 = vunpack.c.l.b16 %v714
      %v723 = vpack.c.b16 %v720, %v719
      %v724 = vpack.c.b16 %v722, %v721
      %v728 = vsel %vm664, %v710, 0
      %730 = vmatprep.subr.bf16.mxu0 0
      %731 = vmatpush1.bf16.msra.mxu0 0
      %732 = vmatprep.subr.bf16.mxu0 0
      %733 = vmatpush1.bf16.msra.mxu0 0
      %734 = vmatprep.subr.bf16.mxu0 0
      %735 = vmatpush1.bf16.msra.mxu0 0
      %736 = vmatprep.subr.bf16.mxu0 0
      %737 = vmatpush1.bf16.msra.mxu0 0
      %738 = vmatprep.subr.bf16.mxu0 0
      %739 = vmatpush1.bf16.msra.mxu0 0
      %740 = vmatprep.subr.bf16.mxu0 0
      %741 = vmatpush1.bf16.msra.mxu0 0
      %742 = vmatprep.subr.bf16.mxu0 0
      %743 = vmatpush1.bf16.msra.mxu0 %v724
      %744 = vmatprep.subr.bf16.mxu0 0
      %745 = vmatpush1.bf16.msra.mxu0 %v723
      %746 = vmatprep.subr.bf16.mxu0 0
      %747 = vmatpush2.bf16.msra.mxu0 0
      %748 = vmatprep.subr.bf16.mxu0 0
      %749 = vmatpush2.bf16.msra.mxu0 0
      %750 = vmatprep.subr.bf16.mxu0 0
      %751 = vmatpush2.bf16.msra.mxu0 0
      %752 = vmatprep.subr.bf16.mxu0 0
      %753 = vmatpush2.bf16.msra.mxu0 0
      %754 = vmatprep.subr.bf16.mxu0 0
      %755 = vmatpush2.bf16.msra.mxu0 0
      %756 = vmatprep.subr.bf16.mxu0 0
      %757 = vmatpush2.bf16.msra.mxu0 0
      %758 = vmatprep.subr.bf16.mxu0 0
      %759 = vmatpush2.bf16.msra.mxu0 0
      %760 = vmatprep.subr.bf16.mxu0 0
      %761 = vmatpush2.bf16.msra.mxu0 0
      %762 = vmatprep.mubr.bf16.mxu0 0
      %763 = vmatmul.mubr.bf16.gmra.mxu0 %v728
      %v764 = vpop.f32.mrf.mxu0
      %v765 = vadd.f32 0.0, %v764
      %v766 = vpop.f32.mrf.mxu0
      %v767 = vpop.f32.mrf.mxu0
      %v768 = vadd.f32 0.0, %v767
      %v769 = vpop.f32.mrf.mxu0
      %770 = vdwg.mxu0
      %v771 = vsub.f32 0.0, %v765
      %v772 = vsub.f32 0.0, %v768
      %v773 = vmul.f32 %v771, 1.442695
      %v774 = vpow.pop %v773
      %v775 = vmul.f32 %v772, 1.442695
      %v776 = vpow.pop %v775
      %v777 = vadd.f32 %v774, 1.0
      %v778 = vadd.f32 %v776, 1.0
      %v779 = vrcp.pop %v777
      %v780 = vmul.f32 1.0, %v779
      %v781 = vrcp.pop %v778
      %v782 = vmul.f32 1.0, %v781
      %v783 = vmul.f32 %v765, %v780
      %v784 = vmul.f32 %v768, %v782
      %v785 = vld [vmem:[%s615] sm:$0xf]
      %v786 = vlaneseq
      %v787 = vshrl.u32 %v786, 7
      %v788 = vlaneseq
      %v789 = vshrl.u32 %v788, 7
      %v790 = vsub.s32 3, %v789
      %v791 = vrot.slane %v785, %v790
      %v792 = vmul.f32 %v765, %v791
      %v793 = vmul.f32 %v768, %v791
      %v794 = vrot.slane %v765, 5
      %v795 = vrot.slane %v768, 5
      %vm796 = vcmp.lt.s32.totalorder %v787, 3
      %v797 = vsel %vm796, %v794, %v795
      %v798 = vsel %vm796, %v795, %v794
      %vm799 = vcmp.ge.s32.totalorder %v787, 3
      %v800 = vsel %vm799, %v798, 0.0
      %v801 = vsel %vm799, %v797, 0.0
      %v802 = vlaneseq
      %v803 = vshrl.u32 %v802, 7
      %v804 = vsub.s32 0, %v803
      %v805 = vrot.slane %v785, %v804
      %v806 = vmul.f32 %v800, %v805
      %v807 = vmul.f32 %v801, %v805
      %v808 = vadd.f32 %v792, %v806
      %v809 = vadd.f32 %v793, %v807
      %v810 = vrot.slane %v765, 6
      %v811 = vrot.slane %v768, 6
      %vm812 = vcmp.lt.s32.totalorder %v787, 2
      %v813 = vsel %vm812, %v810, %v811
      %v814 = vsel %vm812, %v811, %v810
      %vm815 = vcmp.ge.s32.totalorder %v787, 2
      %v816 = vsel %vm815, %v814, 0.0
      %v817 = vsel %vm815, %v813, 0.0
      %v818 = vlaneseq
      %v819 = vshrl.u32 %v818, 7
      %v820 = vsub.s32 1, %v819
      %v821 = vrot.slane %v785, %v820
      %v822 = vmul.f32 %v816, %v821
      %v823 = vmul.f32 %v817, %v821
      %v824 = vadd.f32 %v808, %v822
      %v825 = vadd.f32 %v809, %v823
      %v826 = vrot.slane %v765, 7
      %v827 = vrot.slane %v768, 7
      %vm828 = vcmp.lt.s32.totalorder %v787, 1
      %v829 = vsel %vm828, %v826, %v827
      %v830 = vsel %vm828, %v827, %v826
      %vm831 = vcmp.ge.s32.totalorder %v787, 1
      %v832 = vsel %vm831, %v830, 0.0
      %v833 = vsel %vm831, %v829, 0.0
      %v834 = vlaneseq
      %v835 = vshrl.u32 %v834, 7
      %v836 = vsub.s32 2, %v835
      %v837 = vrot.slane %v785, %v836
      %v838 = vmul.f32 %v832, %v837
      %v839 = vmul.f32 %v833, %v837
      %v840 = vadd.f32 %v824, %v838
      %v841 = vadd.f32 %v825, %v839
      %v842 = vld [vmem:[%s618] sm:$0x1]
      %v844 = vlaneseq
      %v845 = vshrl.u32 %v844, 7
      %v846 = vsub.s32 0, %v845
      %v847 = vrot.slane %v842, %v846
      %v849 = vadd.f32 %v840, %v847
      %v850 = vadd.f32 %v841, %v847
      %v851 = vsub.f32 0.0, %v849
      %v852 = vsub.f32 0.0, %v850
      %v853 = vmul.f32 %v851, 1.442695
      %v854 = vpow.pop %v853
      %v855 = vmul.f32 %v852, 1.442695
      %v856 = vpow.pop %v855
      %v857 = vadd.f32 %v854, 1.0
      %v858 = vadd.f32 %v856, 1.0
      %v859 = vrcp.pop %v857
      %v860 = vmul.f32 1.0, %v859
      %v861 = vrcp.pop %v858
      %v862 = vmul.f32 1.0, %v861
      %v863 = vmul.f32 %v849, %v860
      %v864 = vmul.f32 %v850, %v862
      %v865 = vpack.c.bf16 %v864, %v863
      %v866 = vld [vmem:[%s623] sm:$0xf]
      %v867 = vld [vmem:[%s623 + $0x4] sm:$0xf]
      %v868 = vld [vmem:[%s623 + $0x8] sm:$0xf]
      %v869 = vld [vmem:[%s623 + $0xc] sm:$0xf]
      %v870 = vld [vmem:[%s623 + $0x10] sm:$0xf]
      %v871 = vld [vmem:[%s623 + $0x14] sm:$0xf]
      %v872 = vld [vmem:[%s623 + $0x18] sm:$0xf]
      %v873 = vld [vmem:[%s623 + $0x1c] sm:$0xf]
      %v882 = vunpack.c.l.b16 %v866
      %v883 = vunpack.c.l.b16 %v867
      %v884 = vunpack.c.l.b16 %v868
      %v885 = vunpack.c.l.b16 %v869
      %v886 = vunpack.c.l.b16 %v870
      %v887 = vunpack.c.l.b16 %v871
      %v888 = vunpack.c.l.b16 %v872
      %v889 = vunpack.c.l.b16 %v873
      %v890 = vpack.c.b16 %v883, %v882
      %v891 = vpack.c.b16 %v885, %v884
      %v892 = vpack.c.b16 %v887, %v886
      %v893 = vpack.c.b16 %v889, %v888
      %vm898 = vcmask 523264
      %v900 = vsel %vm898, %v865, 0
      %902 = vmatprep.subr.bf16.mxu0 0
      %903 = vmatpush1.bf16.msra.mxu0 0
      %904 = vmatprep.subr.bf16.mxu0 0
      %905 = vmatpush1.bf16.msra.mxu0 0
      %906 = vmatprep.subr.bf16.mxu0 0
      %907 = vmatpush1.bf16.msra.mxu0 0
      %908 = vmatprep.subr.bf16.mxu0 0
      %909 = vmatpush1.bf16.msra.mxu0 0
      %910 = vmatprep.subr.bf16.mxu0 0
      %911 = vmatpush1.bf16.msra.mxu0 %v893
      %912 = vmatprep.subr.bf16.mxu0 0
      %913 = vmatpush1.bf16.msra.mxu0 %v892
      %914 = vmatprep.subr.bf16.mxu0 0
      %915 = vmatpush1.bf16.msra.mxu0 %v891
      %916 = vmatprep.subr.bf16.mxu0 0
      %917 = vmatpush1.bf16.msra.mxu0 %v890
      %918 = vmatprep.subr.bf16.mxu0 0
      %919 = vmatpush2.bf16.msra.mxu0 0
      %920 = vmatprep.subr.bf16.mxu0 0
      %921 = vmatpush2.bf16.msra.mxu0 0
      %922 = vmatprep.subr.bf16.mxu0 0
      %923 = vmatpush2.bf16.msra.mxu0 0
      %924 = vmatprep.subr.bf16.mxu0 0
      %925 = vmatpush2.bf16.msra.mxu0 0
      %926 = vmatprep.subr.bf16.mxu0 0
      %927 = vmatpush2.bf16.msra.mxu0 0
      %928 = vmatprep.subr.bf16.mxu0 0
      %929 = vmatpush2.bf16.msra.mxu0 0
      %930 = vmatprep.subr.bf16.mxu0 0
      %931 = vmatpush2.bf16.msra.mxu0 0
      %932 = vmatprep.subr.bf16.mxu0 0
      %933 = vmatpush2.bf16.msra.mxu0 0
      %934 = vmatprep.mubr.bf16.mxu0 0
      %935 = vmatmul.mubr.bf16.gmra.mxu0 %v900
      %v936 = vpop.f32.mrf.mxu0
      %v937 = vadd.f32 0.0, %v936
      %v938 = vpop.f32.mrf.mxu0
      %v939 = vpop.f32.mrf.mxu0
      %v940 = vadd.f32 0.0, %v939
      %v941 = vpop.f32.mrf.mxu0
      %942 = vdwg.mxu0
      %v943 = vld [vmem:[%s626] sm:$0x1]
      %v945 = vlaneseq
      %v946 = vshrl.u32 %v945, 7
      %v947 = vsub.s32 0, %v946
      %v948 = vrot.slane %v943, %v947
      %v950 = vadd.f32 %v937, %v948
      %v951 = vadd.f32 %v940, %v948
      %v952 = vmax.f32 %v950, 0.0
      %v953 = vmax.f32 %v951, 0.0
      %v954 = vand.u32 2147483647, %v950
      %v955 = vand.u32 2147483647, %v951
      %v956 = vsub.f32 0.0, %v954
      %v957 = vsub.f32 0.0, %v955
      %v958 = vmul.f32 %v956, 1.442695
      %v959 = vpow.pop %v958
      %v960 = vmul.f32 %v957, 1.442695
      %v961 = vpow.pop %v960
      %v962 = vadd.f32 %v959, 1.0
      %v963 = vadd.f32 %v961, 1.0
      %v964 = vlog2.pop %v962
      %v965 = vmul.f32 %v964, 0.6931472
      %v966 = vlog2.pop %v963
      %v967 = vmul.f32 %v966, 0.6931472
      %v968 = vadd.f32 %v952, %v965
      %v969 = vadd.f32 %v953, %v967
      %v970 = vld [vmem:[%s630] sm:$0xf]
      %v971 = vlaneseq
      %v972 = vand.u32 %v971, 127
      %vm973 = vcmp.eq.s32.totalorder %v787, %v972
      %v974 = vsel %vm973, 1, 0
      %v975 = vcvt.s32.f32 %v974
      %v978 = vcombine.high %v937, %v937
      %v980 = vunpack.c.l.s4 1966171168
      %v981 = vunpack.c.0.s8 %v980
      %v982 = vlaneseq
      %v983 = vshrl.u32 %v982, 7
      %v984 = vsub.s32 %v981, %v983
      %v985 = vrot.slane %v937, %v984
      %v987 = vunpack.c.l.s4 1966171168
      %v988 = vunpack.c.0.s8 %v987
      %v989 = vlaneseq
      %v990 = vshrl.u32 %v989, 7
      %v991 = vsub.s32 %v988, %v990
      %v992 = vrot.slane %v978, %v991
      %v993 = vcombine.high %v985, %v985
      %v994 = vcombine.high %v992, %v992
      %v996 = vunpack.c.l.s4 1966171168
      %v997 = vunpack.c.0.s8 %v996
      %v998 = vlaneseq
      %v999 = vshrl.u32 %v998, 7
      %v1000 = vsub.s32 %v997, %v999
      %v1001 = vrot.slane %v985, %v1000
      %v1003 = vunpack.c.l.s4 1966171168
      %v1004 = vunpack.c.0.s8 %v1003
      %v1005 = vlaneseq
      %v1006 = vshrl.u32 %v1005, 7
      %v1007 = vsub.s32 %v1004, %v1006
      %v1008 = vrot.slane %v992, %v1007
      %v1010 = vunpack.c.l.s4 1966171168
      %v1011 = vunpack.c.0.s8 %v1010
      %v1012 = vlaneseq
      %v1013 = vshrl.u32 %v1012, 7
      %v1014 = vsub.s32 %v1011, %v1013
      %v1015 = vrot.slane %v993, %v1014
      %v1017 = vunpack.c.l.s4 1966171168
      %v1018 = vunpack.c.0.s8 %v1017
      %v1019 = vlaneseq
      %v1020 = vshrl.u32 %v1019, 7
      %v1021 = vsub.s32 %v1018, %v1020
      %v1022 = vrot.slane %v994, %v1021
      %v1023 = vcombine.high %v1001, %v1001
      %v1024 = vcombine.high %v1008, %v1008
      %v1025 = vcombine.high %v1015, %v1015
      %v1026 = vcombine.high %v1022, %v1022
      %v1027 = vcombine.high %v940, %v940
      %v1029 = vunpack.c.l.s4 1966171168
      %v1030 = vunpack.c.0.s8 %v1029
      %v1031 = vlaneseq
      %v1032 = vshrl.u32 %v1031, 7
      %v1033 = vsub.s32 %v1030, %v1032
      %v1034 = vrot.slane %v940, %v1033
      %v1036 = vunpack.c.l.s4 1966171168
      %v1037 = vunpack.c.0.s8 %v1036
      %v1038 = vlaneseq
      %v1039 = vshrl.u32 %v1038, 7
      %v1040 = vsub.s32 %v1037, %v1039
      %v1041 = vrot.slane %v1027, %v1040
      %v1042 = vcombine.high %v1034, %v1034
      %v1043 = vcombine.high %v1041, %v1041
      %v1045 = vunpack.c.l.s4 1966171168
      %v1046 = vunpack.c.0.s8 %v1045
      %v1047 = vlaneseq
      %v1048 = vshrl.u32 %v1047, 7
      %v1049 = vsub.s32 %v1046, %v1048
      %v1050 = vrot.slane %v1034, %v1049
      %v1052 = vunpack.c.l.s4 1966171168
      %v1053 = vunpack.c.0.s8 %v1052
      %v1054 = vlaneseq
      %v1055 = vshrl.u32 %v1054, 7
      %v1056 = vsub.s32 %v1053, %v1055
      %v1057 = vrot.slane %v1041, %v1056
      %v1059 = vunpack.c.l.s4 1966171168
      %v1060 = vunpack.c.0.s8 %v1059
      %v1061 = vlaneseq
      %v1062 = vshrl.u32 %v1061, 7
      %v1063 = vsub.s32 %v1060, %v1062
      %v1064 = vrot.slane %v1042, %v1063
      %v1066 = vunpack.c.l.s4 1966171168
      %v1067 = vunpack.c.0.s8 %v1066
      %v1068 = vlaneseq
      %v1069 = vshrl.u32 %v1068, 7
      %v1070 = vsub.s32 %v1067, %v1069
      %v1071 = vrot.slane %v1043, %v1070
      %v1072 = vcombine.high %v1050, %v1050
      %v1073 = vcombine.high %v1057, %v1057
      %v1074 = vcombine.high %v1064, %v1064
      %v1075 = vcombine.high %v1071, %v1071
      %v1076 = vlaneseq
      %v1077 = vshrl.u32 %v1076, 7
      %v1078 = vsub.s32 0, %v1077
      %v1079 = vrot.slane %v1001, %v1078
      %v1080 = vlaneseq
      %v1081 = vshrl.u32 %v1080, 7
      %v1082 = vsub.s32 0, %v1081
      %v1083 = vrot.slane %v1015, %v1082
      %v1084 = vlaneseq
      %v1085 = vshrl.u32 %v1084, 7
      %v1086 = vsub.s32 0, %v1085
      %v1087 = vrot.slane %v1023, %v1086
      %v1088 = vlaneseq
      %v1089 = vshrl.u32 %v1088, 7
      %v1090 = vsub.s32 0, %v1089
      %v1091 = vrot.slane %v1025, %v1090
      %v1092 = vlaneseq
      %v1093 = vshrl.u32 %v1092, 7
      %v1094 = vsub.s32 0, %v1093
      %v1095 = vrot.slane %v1008, %v1094
      %v1096 = vlaneseq
      %v1097 = vshrl.u32 %v1096, 7
      %v1098 = vsub.s32 0, %v1097
      %v1099 = vrot.slane %v1022, %v1098
      %v1100 = vlaneseq
      %v1101 = vshrl.u32 %v1100, 7
      %v1102 = vsub.s32 0, %v1101
      %v1103 = vrot.slane %v1024, %v1102
      %v1104 = vlaneseq
      %v1105 = vshrl.u32 %v1104, 7
      %v1106 = vsub.s32 0, %v1105
      %v1107 = vrot.slane %v1026, %v1106
      %v1108 = vlaneseq
      %v1109 = vshrl.u32 %v1108, 7
      %v1110 = vsub.s32 0, %v1109
      %v1111 = vrot.slane %v1050, %v1110
      %v1112 = vlaneseq
      %v1113 = vshrl.u32 %v1112, 7
      %v1114 = vsub.s32 0, %v1113
      %v1115 = vrot.slane %v1064, %v1114
      %v1116 = vlaneseq
      %v1117 = vshrl.u32 %v1116, 7
      %v1118 = vsub.s32 0, %v1117
      %v1119 = vrot.slane %v1072, %v1118
      %v1120 = vlaneseq
      %v1121 = vshrl.u32 %v1120, 7
      %v1122 = vsub.s32 0, %v1121
      %v1123 = vrot.slane %v1074, %v1122
      %v1124 = vlaneseq
      %v1125 = vshrl.u32 %v1124, 7
      %v1126 = vsub.s32 0, %v1125
      %v1127 = vrot.slane %v1057, %v1126
      %v1128 = vlaneseq
      %v1129 = vshrl.u32 %v1128, 7
      %v1130 = vsub.s32 0, %v1129
      %v1131 = vrot.slane %v1071, %v1130
      %v1132 = vlaneseq
      %v1133 = vshrl.u32 %v1132, 7
      %v1134 = vsub.s32 0, %v1133
      %v1135 = vrot.slane %v1073, %v1134
      %v1136 = vlaneseq
      %v1137 = vshrl.u32 %v1136, 7
      %v1138 = vsub.s32 0, %v1137
      %v1139 = vrot.slane %v1075, %v1138
      %1157 = vrot.lane.b32.xlu0 %v975, 64
      %v1158 = vpop.permute.xlu0 %1157
      %v1160 = vmul.f32 %v1079, %v1158
      %v1161 = vmul.f32 %v1083, %v1158
      %v1162 = vmul.f32 %v1087, %v1158
      %v1163 = vmul.f32 %v1091, %v1158
      %v1164 = vmul.f32 %v1095, %v1158
      %v1165 = vmul.f32 %v1099, %v1158
      %v1166 = vmul.f32 %v1103, %v1158
      %v1167 = vmul.f32 %v1107, %v1158
      %v1168 = vmul.f32 %v1111, %v1158
      %v1169 = vmul.f32 %v1115, %v1158
      %v1170 = vmul.f32 %v1119, %v1158
      %v1171 = vmul.f32 %v1123, %v1158
      %v1172 = vmul.f32 %v1127, %v1158
      %v1173 = vmul.f32 %v1131, %v1158
      %v1174 = vmul.f32 %v1135, %v1158
      %v1175 = vmul.f32 %v1139, %v1158
      %1192 = vrot.lane.b32.xlu0 %v1160, 64
      %v1193 = vpop.permute.xlu0 %1192
      %1194 = vrot.lane.b32.xlu0 %v1161, 64
      %v1195 = vpop.permute.xlu0 %1194
      %1196 = vrot.lane.b32.xlu0 %v1162, 64
      %v1197 = vpop.permute.xlu0 %1196
      %1198 = vrot.lane.b32.xlu0 %v1163, 64
      %v1199 = vpop.permute.xlu0 %1198
      %1200 = vrot.lane.b32.xlu0 %v1164, 64
      %v1201 = vpop.permute.xlu0 %1200
      %1202 = vrot.lane.b32.xlu0 %v1165, 64
      %v1203 = vpop.permute.xlu0 %1202
      %1204 = vrot.lane.b32.xlu0 %v1166, 64
      %v1205 = vpop.permute.xlu0 %1204
      %1206 = vrot.lane.b32.xlu0 %v1167, 64
      %v1207 = vpop.permute.xlu0 %1206
      %1208 = vrot.lane.b32.xlu0 %v1168, 64
      %v1209 = vpop.permute.xlu0 %1208
      %1210 = vrot.lane.b32.xlu0 %v1169, 64
      %v1211 = vpop.permute.xlu0 %1210
      %1212 = vrot.lane.b32.xlu0 %v1170, 64
      %v1213 = vpop.permute.xlu0 %1212
      %1214 = vrot.lane.b32.xlu0 %v1171, 64
      %v1215 = vpop.permute.xlu0 %1214
      %1216 = vrot.lane.b32.xlu0 %v1172, 64
      %v1217 = vpop.permute.xlu0 %1216
      %1218 = vrot.lane.b32.xlu0 %v1173, 64
      %v1219 = vpop.permute.xlu0 %1218
      %1220 = vrot.lane.b32.xlu0 %v1174, 64
      %v1221 = vpop.permute.xlu0 %1220
      %1222 = vrot.lane.b32.xlu0 %v1175, 64
      %v1223 = vpop.permute.xlu0 %1222
      %vm1240 = vcmask 27648
      %v1241 = vsel %vm1240, %v1193, 0.0
      %1242 = vadd.xlane.f32.xlu0 %v1241
      %v1243 = vpop.xlane.xlu0 %1242
      %v1244 = vsel %vm1240, %v1195, 0.0
      %1245 = vadd.xlane.f32.xlu0 %v1244
      %v1246 = vpop.xlane.xlu0 %1245
      %v1247 = vsel %vm1240, %v1197, 0.0
      %1248 = vadd.xlane.f32.xlu0 %v1247
      %v1249 = vpop.xlane.xlu0 %1248
      %v1250 = vsel %vm1240, %v1199, 0.0
      %1251 = vadd.xlane.f32.xlu0 %v1250
      %v1252 = vpop.xlane.xlu0 %1251
      %v1253 = vsel %vm1240, %v1201, 0.0
      %1254 = vadd.xlane.f32.xlu0 %v1253
      %v1255 = vpop.xlane.xlu0 %1254
      %v1256 = vsel %vm1240, %v1203, 0.0
      %1257 = vadd.xlane.f32.xlu0 %v1256
      %v1258 = vpop.xlane.xlu0 %1257
      %v1259 = vsel %vm1240, %v1205, 0.0
      %1260 = vadd.xlane.f32.xlu0 %v1259
      %v1261 = vpop.xlane.xlu0 %1260
      %v1262 = vsel %vm1240, %v1207, 0.0
      %1263 = vadd.xlane.f32.xlu0 %v1262
      %v1264 = vpop.xlane.xlu0 %1263
      %v1265 = vsel %vm1240, %v1209, 0.0
      %1266 = vadd.xlane.f32.xlu0 %v1265
      %v1267 = vpop.xlane.xlu0 %1266
      %v1268 = vsel %vm1240, %v1211, 0.0
      %1269 = vadd.xlane.f32.xlu0 %v1268
      %v1270 = vpop.xlane.xlu0 %1269
      %v1271 = vsel %vm1240, %v1213, 0.0
      %1272 = vadd.xlane.f32.xlu0 %v1271
      %v1273 = vpop.xlane.xlu0 %1272
      %v1274 = vsel %vm1240, %v1215, 0.0
      %1275 = vadd.xlane.f32.xlu0 %v1274
      %v1276 = vpop.xlane.xlu0 %1275
      %v1277 = vsel %vm1240, %v1217, 0.0
      %1278 = vadd.xlane.f32.xlu0 %v1277
      %v1279 = vpop.xlane.xlu0 %1278
      %v1280 = vsel %vm1240, %v1219, 0.0
      %1281 = vadd.xlane.f32.xlu0 %v1280
      %v1282 = vpop.xlane.xlu0 %1281
      %v1283 = vsel %vm1240, %v1221, 0.0
      %1284 = vadd.xlane.f32.xlu0 %v1283
      %v1285 = vpop.xlane.xlu0 %1284
      %v1286 = vsel %vm1240, %v1223, 0.0
      %1287 = vadd.xlane.f32.xlu0 %v1286
      %v1288 = vpop.xlane.xlu0 %1287
      %1289 = vrot.lane.b32.xlu0 %v975, 68
      %v1290 = vpop.permute.xlu0 %1289
      %v1292 = vmul.f32 %v1079, %v1290
      %v1293 = vmul.f32 %v1083, %v1290
      %v1294 = vmul.f32 %v1087, %v1290
      %v1295 = vmul.f32 %v1091, %v1290
      %v1296 = vmul.f32 %v1095, %v1290
      %v1297 = vmul.f32 %v1099, %v1290
      %v1298 = vmul.f32 %v1103, %v1290
      %v1299 = vmul.f32 %v1107, %v1290
      %v1300 = vmul.f32 %v1111, %v1290
      %v1301 = vmul.f32 %v1115, %v1290
      %v1302 = vmul.f32 %v1119, %v1290
      %v1303 = vmul.f32 %v1123, %v1290
      %v1304 = vmul.f32 %v1127, %v1290
      %v1305 = vmul.f32 %v1131, %v1290
      %v1306 = vmul.f32 %v1135, %v1290
      %v1307 = vmul.f32 %v1139, %v1290
      %1324 = vrot.lane.b32.xlu0 %v1292, 60
      %v1325 = vpop.permute.xlu0 %1324
      %1326 = vrot.lane.b32.xlu0 %v1293, 60
      %v1327 = vpop.permute.xlu0 %1326
      %1328 = vrot.lane.b32.xlu0 %v1294, 60
      %v1329 = vpop.permute.xlu0 %1328
      %1330 = vrot.lane.b32.xlu0 %v1295, 60
      %v1331 = vpop.permute.xlu0 %1330
      %1332 = vrot.lane.b32.xlu0 %v1296, 60
      %v1333 = vpop.permute.xlu0 %1332
      %1334 = vrot.lane.b32.xlu0 %v1297, 60
      %v1335 = vpop.permute.xlu0 %1334
      %1336 = vrot.lane.b32.xlu0 %v1298, 60
      %v1337 = vpop.permute.xlu0 %1336
      %1338 = vrot.lane.b32.xlu0 %v1299, 60
      %v1339 = vpop.permute.xlu0 %1338
      %1340 = vrot.lane.b32.xlu0 %v1300, 60
      %v1341 = vpop.permute.xlu0 %1340
      %1342 = vrot.lane.b32.xlu0 %v1301, 60
      %v1343 = vpop.permute.xlu0 %1342
      %1344 = vrot.lane.b32.xlu0 %v1302, 60
      %v1345 = vpop.permute.xlu0 %1344
      %1346 = vrot.lane.b32.xlu0 %v1303, 60
      %v1347 = vpop.permute.xlu0 %1346
      %1348 = vrot.lane.b32.xlu0 %v1304, 60
      %v1349 = vpop.permute.xlu0 %1348
      %1350 = vrot.lane.b32.xlu0 %v1305, 60
      %v1351 = vpop.permute.xlu0 %1350
      %1352 = vrot.lane.b32.xlu0 %v1306, 60
      %v1353 = vpop.permute.xlu0 %1352
      %1354 = vrot.lane.b32.xlu0 %v1307, 60
      %v1355 = vpop.permute.xlu0 %1354
      %v1372 = vsel %vm1240, %v1325, 0.0
      %1373 = vadd.xlane.f32.xlu0 %v1372
      %v1374 = vpop.xlane.xlu0 %1373
      %v1375 = vsel %vm1240, %v1327, 0.0
      %1376 = vadd.xlane.f32.xlu0 %v1375
      %v1377 = vpop.xlane.xlu0 %1376
      %v1378 = vsel %vm1240, %v1329, 0.0
      %1379 = vadd.xlane.f32.xlu0 %v1378
      %v1380 = vpop.xlane.xlu0 %1379
      %v1381 = vsel %vm1240, %v1331, 0.0
      %1382 = vadd.xlane.f32.xlu0 %v1381
      %v1383 = vpop.xlane.xlu0 %1382
      %v1384 = vsel %vm1240, %v1333, 0.0
      %1385 = vadd.xlane.f32.xlu0 %v1384
      %v1386 = vpop.xlane.xlu0 %1385
      %v1387 = vsel %vm1240, %v1335, 0.0
      %1388 = vadd.xlane.f32.xlu0 %v1387
      %v1389 = vpop.xlane.xlu0 %1388
      %v1390 = vsel %vm1240, %v1337, 0.0
      %1391 = vadd.xlane.f32.xlu0 %v1390
      %v1392 = vpop.xlane.xlu0 %1391
      %v1393 = vsel %vm1240, %v1339, 0.0
      %1394 = vadd.xlane.f32.xlu0 %v1393
      %v1395 = vpop.xlane.xlu0 %1394
      %v1396 = vsel %vm1240, %v1341, 0.0
      %1397 = vadd.xlane.f32.xlu0 %v1396
      %v1398 = vpop.xlane.xlu0 %1397
      %v1399 = vsel %vm1240, %v1343, 0.0
      %1400 = vadd.xlane.f32.xlu0 %v1399
      %v1401 = vpop.xlane.xlu0 %1400
      %v1402 = vsel %vm1240, %v1345, 0.0
      %1403 = vadd.xlane.f32.xlu0 %v1402
      %v1404 = vpop.xlane.xlu0 %1403
      %v1405 = vsel %vm1240, %v1347, 0.0
      %1406 = vadd.xlane.f32.xlu0 %v1405
      %v1407 = vpop.xlane.xlu0 %1406
      %v1408 = vsel %vm1240, %v1349, 0.0
      %1409 = vadd.xlane.f32.xlu0 %v1408
      %v1410 = vpop.xlane.xlu0 %1409
      %v1411 = vsel %vm1240, %v1351, 0.0
      %1412 = vadd.xlane.f32.xlu0 %v1411
      %v1413 = vpop.xlane.xlu0 %1412
      %v1414 = vsel %vm1240, %v1353, 0.0
      %1415 = vadd.xlane.f32.xlu0 %v1414
      %v1416 = vpop.xlane.xlu0 %1415
      %v1417 = vsel %vm1240, %v1355, 0.0
      %1418 = vadd.xlane.f32.xlu0 %v1417
      %v1419 = vpop.xlane.xlu0 %1418
      %v1422 = vcombine.high %v968, %v968
      %v1424 = vunpack.c.l.s4 1966171168
      %v1425 = vunpack.c.0.s8 %v1424
      %v1426 = vlaneseq
      %v1427 = vshrl.u32 %v1426, 7
      %v1428 = vsub.s32 %v1425, %v1427
      %v1429 = vrot.slane %v968, %v1428
      %v1431 = vunpack.c.l.s4 1966171168
      %v1432 = vunpack.c.0.s8 %v1431
      %v1433 = vlaneseq
      %v1434 = vshrl.u32 %v1433, 7
      %v1435 = vsub.s32 %v1432, %v1434
      %v1436 = vrot.slane %v1422, %v1435
      %v1437 = vcombine.high %v1429, %v1429
      %v1438 = vcombine.high %v1436, %v1436
      %v1440 = vunpack.c.l.s4 1966171168
      %v1441 = vunpack.c.0.s8 %v1440
      %v1442 = vlaneseq
      %v1443 = vshrl.u32 %v1442, 7
      %v1444 = vsub.s32 %v1441, %v1443
      %v1445 = vrot.slane %v1429, %v1444
      %v1447 = vunpack.c.l.s4 1966171168
      %v1448 = vunpack.c.0.s8 %v1447
      %v1449 = vlaneseq
      %v1450 = vshrl.u32 %v1449, 7
      %v1451 = vsub.s32 %v1448, %v1450
      %v1452 = vrot.slane %v1436, %v1451
      %v1454 = vunpack.c.l.s4 1966171168
      %v1455 = vunpack.c.0.s8 %v1454
      %v1456 = vlaneseq
      %v1457 = vshrl.u32 %v1456, 7
      %v1458 = vsub.s32 %v1455, %v1457
      %v1459 = vrot.slane %v1437, %v1458
      %v1461 = vunpack.c.l.s4 1966171168
      %v1462 = vunpack.c.0.s8 %v1461
      %v1463 = vlaneseq
      %v1464 = vshrl.u32 %v1463, 7
      %v1465 = vsub.s32 %v1462, %v1464
      %v1466 = vrot.slane %v1438, %v1465
      %v1467 = vcombine.high %v1445, %v1445
      %v1468 = vcombine.high %v1452, %v1452
      %v1469 = vcombine.high %v1459, %v1459
      %v1470 = vcombine.high %v1466, %v1466
      %v1471 = vcombine.high %v969, %v969
      %v1473 = vunpack.c.l.s4 1966171168
      %v1474 = vunpack.c.0.s8 %v1473
      %v1475 = vlaneseq
      %v1476 = vshrl.u32 %v1475, 7
      %v1477 = vsub.s32 %v1474, %v1476
      %v1478 = vrot.slane %v969, %v1477
      %v1480 = vunpack.c.l.s4 1966171168
      %v1481 = vunpack.c.0.s8 %v1480
      %v1482 = vlaneseq
      %v1483 = vshrl.u32 %v1482, 7
      %v1484 = vsub.s32 %v1481, %v1483
      %v1485 = vrot.slane %v1471, %v1484
      %v1486 = vcombine.high %v1478, %v1478
      %v1487 = vcombine.high %v1485, %v1485
      %v1489 = vunpack.c.l.s4 1966171168
      %v1490 = vunpack.c.0.s8 %v1489
      %v1491 = vlaneseq
      %v1492 = vshrl.u32 %v1491, 7
      %v1493 = vsub.s32 %v1490, %v1492
      %v1494 = vrot.slane %v1478, %v1493
      %v1496 = vunpack.c.l.s4 1966171168
      %v1497 = vunpack.c.0.s8 %v1496
      %v1498 = vlaneseq
      %v1499 = vshrl.u32 %v1498, 7
      %v1500 = vsub.s32 %v1497, %v1499
      %v1501 = vrot.slane %v1485, %v1500
      %v1503 = vunpack.c.l.s4 1966171168
      %v1504 = vunpack.c.0.s8 %v1503
      %v1505 = vlaneseq
      %v1506 = vshrl.u32 %v1505, 7
      %v1507 = vsub.s32 %v1504, %v1506
      %v1508 = vrot.slane %v1486, %v1507
      %v1510 = vunpack.c.l.s4 1966171168
      %v1511 = vunpack.c.0.s8 %v1510
      %v1512 = vlaneseq
      %v1513 = vshrl.u32 %v1512, 7
      %v1514 = vsub.s32 %v1511, %v1513
      %v1515 = vrot.slane %v1487, %v1514
      %v1516 = vcombine.high %v1494, %v1494
      %v1517 = vcombine.high %v1501, %v1501
      %v1518 = vcombine.high %v1508, %v1508
      %v1519 = vcombine.high %v1515, %v1515
      %v1520 = vlaneseq
      %v1521 = vshrl.u32 %v1520, 7
      %v1522 = vsub.s32 0, %v1521
      %v1523 = vrot.slane %v1445, %v1522
      %v1524 = vlaneseq
      %v1525 = vshrl.u32 %v1524, 7
      %v1526 = vsub.s32 0, %v1525
      %v1527 = vrot.slane %v1459, %v1526
      %v1528 = vlaneseq
      %v1529 = vshrl.u32 %v1528, 7
      %v1530 = vsub.s32 0, %v1529
      %v1531 = vrot.slane %v1467, %v1530
      %v1532 = vlaneseq
      %v1533 = vshrl.u32 %v1532, 7
      %v1534 = vsub.s32 0, %v1533
      %v1535 = vrot.slane %v1469, %v1534
      %v1536 = vlaneseq
      %v1537 = vshrl.u32 %v1536, 7
      %v1538 = vsub.s32 0, %v1537
      %v1539 = vrot.slane %v1452, %v1538
      %v1540 = vlaneseq
      %v1541 = vshrl.u32 %v1540, 7
      %v1542 = vsub.s32 0, %v1541
      %v1543 = vrot.slane %v1466, %v1542
      %v1544 = vlaneseq
      %v1545 = vshrl.u32 %v1544, 7
      %v1546 = vsub.s32 0, %v1545
      %v1547 = vrot.slane %v1468, %v1546
      %v1548 = vlaneseq
      %v1549 = vshrl.u32 %v1548, 7
      %v1550 = vsub.s32 0, %v1549
      %v1551 = vrot.slane %v1470, %v1550
      %v1552 = vlaneseq
      %v1553 = vshrl.u32 %v1552, 7
      %v1554 = vsub.s32 0, %v1553
      %v1555 = vrot.slane %v1494, %v1554
      %v1556 = vlaneseq
      %v1557 = vshrl.u32 %v1556, 7
      %v1558 = vsub.s32 0, %v1557
      %v1559 = vrot.slane %v1508, %v1558
      %v1560 = vlaneseq
      %v1561 = vshrl.u32 %v1560, 7
      %v1562 = vsub.s32 0, %v1561
      %v1563 = vrot.slane %v1516, %v1562
      %v1564 = vlaneseq
      %v1565 = vshrl.u32 %v1564, 7
      %v1566 = vsub.s32 0, %v1565
      %v1567 = vrot.slane %v1518, %v1566
      %v1568 = vlaneseq
      %v1569 = vshrl.u32 %v1568, 7
      %v1570 = vsub.s32 0, %v1569
      %v1571 = vrot.slane %v1501, %v1570
      %v1572 = vlaneseq
      %v1573 = vshrl.u32 %v1572, 7
      %v1574 = vsub.s32 0, %v1573
      %v1575 = vrot.slane %v1515, %v1574
      %v1576 = vlaneseq
      %v1577 = vshrl.u32 %v1576, 7
      %v1578 = vsub.s32 0, %v1577
      %v1579 = vrot.slane %v1517, %v1578
      %v1580 = vlaneseq
      %v1581 = vshrl.u32 %v1580, 7
      %v1582 = vsub.s32 0, %v1581
      %v1583 = vrot.slane %v1519, %v1582
      %v1600 = vmul.f32 %v1523, %v970
      %v1601 = vmul.f32 %v1527, %v970
      %v1602 = vmul.f32 %v1531, %v970
      %v1603 = vmul.f32 %v1535, %v970
      %v1604 = vmul.f32 %v1539, %v970
      %v1605 = vmul.f32 %v1543, %v970
      %v1606 = vmul.f32 %v1547, %v970
      %v1607 = vmul.f32 %v1551, %v970
      %v1608 = vmul.f32 %v1555, %v970
      %v1609 = vmul.f32 %v1559, %v970
      %v1610 = vmul.f32 %v1563, %v970
      %v1611 = vmul.f32 %v1567, %v970
      %v1612 = vmul.f32 %v1571, %v970
      %v1613 = vmul.f32 %v1575, %v970
      %v1614 = vmul.f32 %v1579, %v970
      %v1615 = vmul.f32 %v1583, %v970
      %v1616 = vmul.f32 %v1600, 1.442695
      %v1617 = vpow.pop %v1616
      %v1618 = vmul.f32 %v1601, 1.442695
      %v1619 = vpow.pop %v1618
      %v1620 = vmul.f32 %v1602, 1.442695
      %v1621 = vpow.pop %v1620
      %v1622 = vmul.f32 %v1603, 1.442695
      %v1623 = vpow.pop %v1622
      %v1624 = vmul.f32 %v1604, 1.442695
      %v1625 = vpow.pop %v1624
      %v1626 = vmul.f32 %v1605, 1.442695
      %v1627 = vpow.pop %v1626
      %v1628 = vmul.f32 %v1606, 1.442695
      %v1629 = vpow.pop %v1628
      %v1630 = vmul.f32 %v1607, 1.442695
      %v1631 = vpow.pop %v1630
      %v1632 = vmul.f32 %v1608, 1.442695
      %v1633 = vpow.pop %v1632
      %v1634 = vmul.f32 %v1609, 1.442695
      %v1635 = vpow.pop %v1634
      %v1636 = vmul.f32 %v1610, 1.442695
      %v1637 = vpow.pop %v1636
      %v1638 = vmul.f32 %v1611, 1.442695
      %v1639 = vpow.pop %v1638
      %v1640 = vmul.f32 %v1612, 1.442695
      %v1641 = vpow.pop %v1640
      %v1642 = vmul.f32 %v1613, 1.442695
      %v1643 = vpow.pop %v1642
      %v1644 = vmul.f32 %v1614, 1.442695
      %v1645 = vpow.pop %v1644
      %v1646 = vmul.f32 %v1615, 1.442695
      %v1647 = vpow.pop %v1646
      %vm1648 = vcmask 519168
      %1649 = vst.msk [vmem:[#allocation3] sm:$0xf] %vm1648, %v1617
      %1650 = vst.msk [vmem:[#allocation3 + $0x4] sm:$0xf] %vm1648, %v1619
      %1651 = vst.msk [vmem:[#allocation3 + $0x8] sm:$0xf] %vm1648, %v1621
      %1652 = vst.msk [vmem:[#allocation3 + $0xc] sm:$0xf] %vm1648, %v1623
      %1653 = vst.msk [vmem:[#allocation3 + $0x10] sm:$0xf] %vm1648, %v1625
      %1654 = vst.msk [vmem:[#allocation3 + $0x14] sm:$0xf] %vm1648, %v1627
      %1655 = vst.msk [vmem:[#allocation3 + $0x18] sm:$0xf] %vm1648, %v1629
      %1656 = vst.msk [vmem:[#allocation3 + $0x1c] sm:$0xf] %vm1648, %v1631
      %1657 = vst.msk [vmem:[#allocation3 + $0x20] sm:$0xf] %vm1648, %v1633
      %1658 = vst.msk [vmem:[#allocation3 + $0x24] sm:$0xf] %vm1648, %v1635
      %1659 = vst.msk [vmem:[#allocation3 + $0x28] sm:$0xf] %vm1648, %v1637
      %1660 = vst.msk [vmem:[#allocation3 + $0x2c] sm:$0xf] %vm1648, %v1639
      %1661 = vst.msk [vmem:[#allocation3 + $0x30] sm:$0xf] %vm1648, %v1641
      %1662 = vst.msk [vmem:[#allocation3 + $0x34] sm:$0xf] %vm1648, %v1643
      %1663 = vst.msk [vmem:[#allocation3 + $0x38] sm:$0xf] %vm1648, %v1645
      %1664 = vst.msk [vmem:[#allocation3 + $0x3c] sm:$0xf] %vm1648, %v1647
      %v1665 = vmul.f32 %v968, %v863
      %v1666 = vmul.f32 %v969, %v864
      %v1669 = vcombine.high %v1665, %v1665
      %v1671 = vunpack.c.l.s4 1966171168
      %v1672 = vunpack.c.0.s8 %v1671
      %v1673 = vlaneseq
      %v1674 = vshrl.u32 %v1673, 7
      %v1675 = vsub.s32 %v1672, %v1674
      %v1676 = vrot.slane %v1665, %v1675
      %v1678 = vunpack.c.l.s4 1966171168
      %v1679 = vunpack.c.0.s8 %v1678
      %v1680 = vlaneseq
      %v1681 = vshrl.u32 %v1680, 7
      %v1682 = vsub.s32 %v1679, %v1681
      %v1683 = vrot.slane %v1669, %v1682
      %v1684 = vcombine.high %v1676, %v1676
      %v1685 = vcombine.high %v1683, %v1683
      %v1687 = vunpack.c.l.s4 1966171168
      %v1688 = vunpack.c.0.s8 %v1687
      %v1689 = vlaneseq
      %v1690 = vshrl.u32 %v1689, 7
      %v1691 = vsub.s32 %v1688, %v1690
      %v1692 = vrot.slane %v1676, %v1691
      %v1694 = vunpack.c.l.s4 1966171168
      %v1695 = vunpack.c.0.s8 %v1694
      %v1696 = vlaneseq
      %v1697 = vshrl.u32 %v1696, 7
      %v1698 = vsub.s32 %v1695, %v1697
      %v1699 = vrot.slane %v1683, %v1698
      %v1701 = vunpack.c.l.s4 1966171168
      %v1702 = vunpack.c.0.s8 %v1701
      %v1703 = vlaneseq
      %v1704 = vshrl.u32 %v1703, 7
      %v1705 = vsub.s32 %v1702, %v1704
      %v1706 = vrot.slane %v1684, %v1705
      %v1708 = vunpack.c.l.s4 1966171168
      %v1709 = vunpack.c.0.s8 %v1708
      %v1710 = vlaneseq
      %v1711 = vshrl.u32 %v1710, 7
      %v1712 = vsub.s32 %v1709, %v1711
      %v1713 = vrot.slane %v1685, %v1712
      %v1714 = vcombine.high %v1692, %v1692
      %v1715 = vcombine.high %v1699, %v1699
      %v1716 = vcombine.high %v1706, %v1706
      %v1717 = vcombine.high %v1713, %v1713
      %v1718 = vcombine.high %v1666, %v1666
      %v1720 = vunpack.c.l.s4 1966171168
      %v1721 = vunpack.c.0.s8 %v1720
      %v1722 = vlaneseq
      %v1723 = vshrl.u32 %v1722, 7
      %v1724 = vsub.s32 %v1721, %v1723
      %v1725 = vrot.slane %v1666, %v1724
      %v1727 = vunpack.c.l.s4 1966171168
      %v1728 = vunpack.c.0.s8 %v1727
      %v1729 = vlaneseq
      %v1730 = vshrl.u32 %v1729, 7
      %v1731 = vsub.s32 %v1728, %v1730
      %v1732 = vrot.slane %v1718, %v1731
      %v1733 = vcombine.high %v1725, %v1725
      %v1734 = vcombine.high %v1732, %v1732
      %v1736 = vunpack.c.l.s4 1966171168
      %v1737 = vunpack.c.0.s8 %v1736
      %v1738 = vlaneseq
      %v1739 = vshrl.u32 %v1738, 7
      %v1740 = vsub.s32 %v1737, %v1739
      %v1741 = vrot.slane %v1725, %v1740
      %v1743 = vunpack.c.l.s4 1966171168
      %v1744 = vunpack.c.0.s8 %v1743
      %v1745 = vlaneseq
      %v1746 = vshrl.u32 %v1745, 7
      %v1747 = vsub.s32 %v1744, %v1746
      %v1748 = vrot.slane %v1732, %v1747
      %v1750 = vunpack.c.l.s4 1966171168
      %v1751 = vunpack.c.0.s8 %v1750
      %v1752 = vlaneseq
      %v1753 = vshrl.u32 %v1752, 7
      %v1754 = vsub.s32 %v1751, %v1753
      %v1755 = vrot.slane %v1733, %v1754
      %v1757 = vunpack.c.l.s4 1966171168
      %v1758 = vunpack.c.0.s8 %v1757
      %v1759 = vlaneseq
      %v1760 = vshrl.u32 %v1759, 7
      %v1761 = vsub.s32 %v1758, %v1760
      %v1762 = vrot.slane %v1734, %v1761
      %v1763 = vcombine.high %v1741, %v1741
      %v1764 = vcombine.high %v1748, %v1748
      %v1765 = vcombine.high %v1755, %v1755
      %v1766 = vcombine.high %v1762, %v1762
      %v1767 = vlaneseq
      %v1768 = vshrl.u32 %v1767, 7
      %v1769 = vsub.s32 0, %v1768
      %v1770 = vrot.slane %v1692, %v1769
      %v1771 = vlaneseq
      %v1772 = vshrl.u32 %v1771, 7
      %v1773 = vsub.s32 0, %v1772
      %v1774 = vrot.slane %v1706, %v1773
      %v1775 = vlaneseq
      %v1776 = vshrl.u32 %v1775, 7
      %v1777 = vsub.s32 0, %v1776
      %v1778 = vrot.slane %v1714, %v1777
      %v1779 = vlaneseq
      %v1780 = vshrl.u32 %v1779, 7
      %v1781 = vsub.s32 0, %v1780
      %v1782 = vrot.slane %v1716, %v1781
      %v1783 = vlaneseq
      %v1784 = vshrl.u32 %v1783, 7
      %v1785 = vsub.s32 0, %v1784
      %v1786 = vrot.slane %v1699, %v1785
      %v1787 = vlaneseq
      %v1788 = vshrl.u32 %v1787, 7
      %v1789 = vsub.s32 0, %v1788
      %v1790 = vrot.slane %v1713, %v1789
      %v1791 = vlaneseq
      %v1792 = vshrl.u32 %v1791, 7
      %v1793 = vsub.s32 0, %v1792
      %v1794 = vrot.slane %v1715, %v1793
      %v1795 = vlaneseq
      %v1796 = vshrl.u32 %v1795, 7
      %v1797 = vsub.s32 0, %v1796
      %v1798 = vrot.slane %v1717, %v1797
      %v1799 = vlaneseq
      %v1800 = vshrl.u32 %v1799, 7
      %v1801 = vsub.s32 0, %v1800
      %v1802 = vrot.slane %v1741, %v1801
      %v1803 = vlaneseq
      %v1804 = vshrl.u32 %v1803, 7
      %v1805 = vsub.s32 0, %v1804
      %v1806 = vrot.slane %v1755, %v1805
      %v1807 = vlaneseq
      %v1808 = vshrl.u32 %v1807, 7
      %v1809 = vsub.s32 0, %v1808
      %v1810 = vrot.slane %v1763, %v1809
      %v1811 = vlaneseq
      %v1812 = vshrl.u32 %v1811, 7
      %v1813 = vsub.s32 0, %v1812
      %v1814 = vrot.slane %v1765, %v1813
      %v1815 = vlaneseq
      %v1816 = vshrl.u32 %v1815, 7
      %v1817 = vsub.s32 0, %v1816
      %v1818 = vrot.slane %v1748, %v1817
      %v1819 = vlaneseq
      %v1820 = vshrl.u32 %v1819, 7
      %v1821 = vsub.s32 0, %v1820
      %v1822 = vrot.slane %v1762, %v1821
      %v1823 = vlaneseq
      %v1824 = vshrl.u32 %v1823, 7
      %v1825 = vsub.s32 0, %v1824
      %v1826 = vrot.slane %v1764, %v1825
      %v1827 = vlaneseq
      %v1828 = vshrl.u32 %v1827, 7
      %v1829 = vsub.s32 0, %v1828
      %v1830 = vrot.slane %v1766, %v1829
      %v1847 = vmul.f32 %v1770, %v1243
      %v1848 = vmul.f32 %v1774, %v1246
      %v1849 = vmul.f32 %v1778, %v1249
      %v1850 = vmul.f32 %v1782, %v1252
      %v1851 = vmul.f32 %v1786, %v1255
      %v1852 = vmul.f32 %v1790, %v1258
      %v1853 = vmul.f32 %v1794, %v1261
      %v1854 = vmul.f32 %v1798, %v1264
      %v1855 = vmul.f32 %v1802, %v1267
      %v1856 = vmul.f32 %v1806, %v1270
      %v1857 = vmul.f32 %v1810, %v1273
      %v1858 = vmul.f32 %v1814, %v1276
      %v1859 = vmul.f32 %v1818, %v1279
      %v1860 = vmul.f32 %v1822, %v1282
      %v1861 = vmul.f32 %v1826, %v1285
      %v1862 = vmul.f32 %v1830, %v1288
      %1863 = vst.msk [vmem:[#allocation4] sm:$0xf] %vm1648, %v1847
      %1864 = vst.msk [vmem:[#allocation4 + $0x4] sm:$0xf] %vm1648, %v1848
      %1865 = vst.msk [vmem:[#allocation4 + $0x8] sm:$0xf] %vm1648, %v1849
      %1866 = vst.msk [vmem:[#allocation4 + $0xc] sm:$0xf] %vm1648, %v1850
      %1867 = vst.msk [vmem:[#allocation4 + $0x10] sm:$0xf] %vm1648, %v1851
      %1868 = vst.msk [vmem:[#allocation4 + $0x14] sm:$0xf] %vm1648, %v1852
      %1869 = vst.msk [vmem:[#allocation4 + $0x18] sm:$0xf] %vm1648, %v1853
      %1870 = vst.msk [vmem:[#allocation4 + $0x1c] sm:$0xf] %vm1648, %v1854
      %1871 = vst.msk [vmem:[#allocation4 + $0x20] sm:$0xf] %vm1648, %v1855
      %1872 = vst.msk [vmem:[#allocation4 + $0x24] sm:$0xf] %vm1648, %v1856
      %1873 = vst.msk [vmem:[#allocation4 + $0x28] sm:$0xf] %vm1648, %v1857
      %1874 = vst.msk [vmem:[#allocation4 + $0x2c] sm:$0xf] %vm1648, %v1858
      %1875 = vst.msk [vmem:[#allocation4 + $0x30] sm:$0xf] %vm1648, %v1859
      %1876 = vst.msk [vmem:[#allocation4 + $0x34] sm:$0xf] %vm1648, %v1860
      %1877 = vst.msk [vmem:[#allocation4 + $0x38] sm:$0xf] %vm1648, %v1861
      %1878 = vst.msk [vmem:[#allocation4 + $0x3c] sm:$0xf] %vm1648, %v1862
      %vm1879 = vcmask 3072
      %1880 = vst.msk [vmem:[#allocation5] sm:$0xf] %vm1879, %v1374
      %1881 = vst.msk [vmem:[#allocation5 + $0x4] sm:$0xf] %vm1879, %v1377
      %1882 = vst.msk [vmem:[#allocation5 + $0x8] sm:$0xf] %vm1879, %v1380
      %1883 = vst.msk [vmem:[#allocation5 + $0xc] sm:$0xf] %vm1879, %v1383
      %1884 = vst.msk [vmem:[#allocation5 + $0x10] sm:$0xf] %vm1879, %v1386
      %1885 = vst.msk [vmem:[#allocation5 + $0x14] sm:$0xf] %vm1879, %v1389
      %1886 = vst.msk [vmem:[#allocation5 + $0x18] sm:$0xf] %vm1879, %v1392
      %1887 = vst.msk [vmem:[#allocation5 + $0x1c] sm:$0xf] %vm1879, %v1395
      %1888 = vst.msk [vmem:[#allocation5 + $0x20] sm:$0xf] %vm1879, %v1398
      %1889 = vst.msk [vmem:[#allocation5 + $0x24] sm:$0xf] %vm1879, %v1401
      %1890 = vst.msk [vmem:[#allocation5 + $0x28] sm:$0xf] %vm1879, %v1404
      %1891 = vst.msk [vmem:[#allocation5 + $0x2c] sm:$0xf] %vm1879, %v1407
      %1892 = vst.msk [vmem:[#allocation5 + $0x30] sm:$0xf] %vm1879, %v1410
      %1893 = vst.msk [vmem:[#allocation5 + $0x34] sm:$0xf] %vm1879, %v1413
      %1894 = vst.msk [vmem:[#allocation5 + $0x38] sm:$0xf] %vm1879, %v1416
      %1895 = vst.msk [vmem:[#allocation5 + $0x3c] sm:$0xf] %vm1879, %v1419
      %v1896 = vld [vmem:[#allocation3] sm:$0xf]
      %v1897 = vld [vmem:[#allocation3 + $0x20] sm:$0xf]
      %v1898 = vld [vmem:[#allocation4] sm:$0xf]
      %v1899 = vld [vmem:[#allocation4 + $0x20] sm:$0xf]
      %v1900 = vmul.f32 %v1896, 0.0
      %v1901 = vmul.f32 %v1897, 0.0
      %v1902 = vadd.f32 %v1900, %v1898
      %v1903 = vadd.f32 %v1901, %v1899
      %v1904 = vld [vmem:[#allocation5] sm:$0xf]
      %v1905 = vld [vmem:[#allocation5 + $0x20] sm:$0xf]
      %1907 = vset.pattern.permute.xlu0 0
      %1908 = vperm.xlu0 %1907, %v1904
      %v1909 = vpop.permute.xlu0 %1908
      %1912 = vset.pattern.permute.xlu0 0
      %1913 = vperm.xlu0 %1912, %v1905
      %v1914 = vpop.permute.xlu0 %1913
      %v1916 = vmul.f32 %v1902, %v1909
      %v1917 = vmul.f32 %v1903, %v1914
      %v1918 = vsel %vm1648, %v1916, 0.0
      %v1919 = vrot.slane %v1918, 4
      %v1920 = vadd.f32 %v1918, %v1919
      %v1921 = vrot.slane %v1920, 2
      %v1922 = vadd.f32 %v1920, %v1921
      %v1923 = vrot.slane %v1922, 1
      %v1924 = vadd.f32 %v1922, %v1923
      %v1925 = vsel %vm1648, %v1917, 0.0
      %v1926 = vrot.slane %v1925, 4
      %v1927 = vadd.f32 %v1925, %v1926
      %v1928 = vrot.slane %v1927, 2
      %v1929 = vadd.f32 %v1927, %v1928
      %v1930 = vrot.slane %v1929, 1
      %v1931 = vadd.f32 %v1929, %v1930
      %vm1932 = vcmask 516096
      %1933 = vst.msk [vmem:[#allocation6] sm:$0x1] %vm1932, %v1924
      %1934 = vst.msk [vmem:[#allocation6 + $0x8] sm:$0x1] %vm1932, %v1931
      %s1935 = scalar_lea.vmem [#allocation3], 4
      %v1936 = vld [vmem:[%s1935] sm:$0xf]
      %v1937 = vld [vmem:[%s1935 + $0x20] sm:$0xf]
      %s1938 = scalar_lea.vmem [#allocation4], 4
      %v1939 = vld [vmem:[%s1938] sm:$0xf]
      %v1940 = vld [vmem:[%s1938 + $0x20] sm:$0xf]
      %v1941 = vmul.f32 %v1936, %v1902
      %v1942 = vmul.f32 %v1937, %v1903
      %v1943 = vadd.f32 %v1941, %v1939
      %v1944 = vadd.f32 %v1942, %v1940
      %s1945 = scalar_lea.vmem [#allocation5], 4
      %v1946 = vld [vmem:[%s1945] sm:$0xf]
      %v1947 = vld [vmem:[%s1945 + $0x20] sm:$0xf]
      %1949 = vset.pattern.permute.xlu0 0
      %1950 = vperm.xlu0 %1949, %v1946
      %v1951 = vpop.permute.xlu0 %1950
      %1954 = vset.pattern.permute.xlu0 0
      %1955 = vperm.xlu0 %1954, %v1947
      %v1956 = vpop.permute.xlu0 %1955
      %v1958 = vmul.f32 %v1943, %v1951
      %v1959 = vmul.f32 %v1944, %v1956
      %v1960 = vsel %vm1648, %v1958, 0.0
      %v1961 = vrot.slane %v1960, 4
      %v1962 = vadd.f32 %v1960, %v1961
      %v1963 = vrot.slane %v1962, 2
      %v1964 = vadd.f32 %v1962, %v1963
      %v1965 = vrot.slane %v1964, 1
      %v1966 = vadd.f32 %v1964, %v1965
      %v1967 = vsel %vm1648, %v1959, 0.0
      %v1968 = vrot.slane %v1967, 4
      %v1969 = vadd.f32 %v1967, %v1968
      %v1970 = vrot.slane %v1969, 2
      %v1971 = vadd.f32 %v1969, %v1970
      %v1972 = vrot.slane %v1971, 1
      %v1973 = vadd.f32 %v1971, %v1972
      %1974 = vst.msk [vmem:[#allocation6 + $0x1] sm:$0x1] %vm1932, %v1966
      %1975 = vst.msk [vmem:[#allocation6 + $0x9] sm:$0x1] %vm1932, %v1973
      %s1976 = scalar_lea.vmem [#allocation3], 8
      %v1977 = vld [vmem:[%s1976] sm:$0xf]
      %v1978 = vld [vmem:[%s1976 + $0x20] sm:$0xf]
      %s1979 = scalar_lea.vmem [#allocation4], 8
      %v1980 = vld [vmem:[%s1979] sm:$0xf]
      %v1981 = vld [vmem:[%s1979 + $0x20] sm:$0xf]
      %v1982 = vmul.f32 %v1977, %v1943
      %v1983 = vmul.f32 %v1978, %v1944
      %v1984 = vadd.f32 %v1982, %v1980
      %v1985 = vadd.f32 %v1983, %v1981
      %s1986 = scalar_lea.vmem [#allocation5], 8
      %v1987 = vld [vmem:[%s1986] sm:$0xf]
      %v1988 = vld [vmem:[%s1986 + $0x20] sm:$0xf]
      %1990 = vset.pattern.permute.xlu0 0
      %1991 = vperm.xlu0 %1990, %v1987
      %v1992 = vpop.permute.xlu0 %1991
      %1995 = vset.pattern.permute.xlu0 0
      %1996 = vperm.xlu0 %1995, %v1988
      %v1997 = vpop.permute.xlu0 %1996
      %v1999 = vmul.f32 %v1984, %v1992
      %v2000 = vmul.f32 %v1985, %v1997
      %v2001 = vsel %vm1648, %v1999, 0.0
      %v2002 = vrot.slane %v2001, 4
      %v2003 = vadd.f32 %v2001, %v2002
      %v2004 = vrot.slane %v2003, 2
      %v2005 = vadd.f32 %v2003, %v2004
      %v2006 = vrot.slane %v2005, 1
      %v2007 = vadd.f32 %v2005, %v2006
      %v2008 = vsel %vm1648, %v2000, 0.0
      %v2009 = vrot.slane %v2008, 4
      %v2010 = vadd.f32 %v2008, %v2009
      %v2011 = vrot.slane %v2010, 2
      %v2012 = vadd.f32 %v2010, %v2011
      %v2013 = vrot.slane %v2012, 1
      %v2014 = vadd.f32 %v2012, %v2013
      %2015 = vst.msk [vmem:[#allocation6 + $0x2] sm:$0x1] %vm1932, %v2007
      %2016 = vst.msk [vmem:[#allocation6 + $0xa] sm:$0x1] %vm1932, %v2014
      %s2017 = scalar_lea.vmem [#allocation3], 12
      %v2018 = vld [vmem:[%s2017] sm:$0xf]
      %v2019 = vld [vmem:[%s2017 + $0x20] sm:$0xf]
      %s2020 = scalar_lea.vmem [#allocation4], 12
      %v2021 = vld [vmem:[%s2020] sm:$0xf]
      %v2022 = vld [vmem:[%s2020 + $0x20] sm:$0xf]
      %v2023 = vmul.f32 %v2018, %v1984
      %v2024 = vmul.f32 %v2019, %v1985
      %v2025 = vadd.f32 %v2023, %v2021
      %v2026 = vadd.f32 %v2024, %v2022
      %s2027 = scalar_lea.vmem [#allocation5], 12
      %v2028 = vld [vmem:[%s2027] sm:$0xf]
      %v2029 = vld [vmem:[%s2027 + $0x20] sm:$0xf]
      %2031 = vset.pattern.permute.xlu0 0
      %2032 = vperm.xlu0 %2031, %v2028
      %v2033 = vpop.permute.xlu0 %2032
      %2036 = vset.pattern.permute.xlu0 0
      %2037 = vperm.xlu0 %2036, %v2029
      %v2038 = vpop.permute.xlu0 %2037
      %v2040 = vmul.f32 %v2025, %v2033
      %v2041 = vmul.f32 %v2026, %v2038
      %v2042 = vsel %vm1648, %v2040, 0.0
      %v2043 = vrot.slane %v2042, 4
      %v2044 = vadd.f32 %v2042, %v2043
      %v2045 = vrot.slane %v2044, 2
      %v2046 = vadd.f32 %v2044, %v2045
      %v2047 = vrot.slane %v2046, 1
      %v2048 = vadd.f32 %v2046, %v2047
      %v2049 = vsel %vm1648, %v2041, 0.0
      %v2050 = vrot.slane %v2049, 4
      %v2051 = vadd.f32 %v2049, %v2050
      %v2052 = vrot.slane %v2051, 2
      %v2053 = vadd.f32 %v2051, %v2052
      %v2054 = vrot.slane %v2053, 1
      %v2055 = vadd.f32 %v2053, %v2054
      %2056 = vst.msk [vmem:[#allocation6 + $0x3] sm:$0x1] %vm1932, %v2048
      %2057 = vst.msk [vmem:[#allocation6 + $0xb] sm:$0x1] %vm1932, %v2055
      %s2058 = scalar_lea.vmem [#allocation3], 16
      %v2059 = vld [vmem:[%s2058] sm:$0xf]
      %v2060 = vld [vmem:[%s2058 + $0x20] sm:$0xf]
      %s2061 = scalar_lea.vmem [#allocation4], 16
      %v2062 = vld [vmem:[%s2061] sm:$0xf]
      %v2063 = vld [vmem:[%s2061 + $0x20] sm:$0xf]
      %v2064 = vmul.f32 %v2059, %v2025
      %v2065 = vmul.f32 %v2060, %v2026
      %v2066 = vadd.f32 %v2064, %v2062
      %v2067 = vadd.f32 %v2065, %v2063
      %s2068 = scalar_lea.vmem [#allocation5], 16
      %v2069 = vld [vmem:[%s2068] sm:$0xf]
      %v2070 = vld [vmem:[%s2068 + $0x20] sm:$0xf]
      %2072 = vset.pattern.permute.xlu0 0
      %2073 = vperm.xlu0 %2072, %v2069
      %v2074 = vpop.permute.xlu0 %2073
      %2077 = vset.pattern.permute.xlu0 0
      %2078 = vperm.xlu0 %2077, %v2070
      %v2079 = vpop.permute.xlu0 %2078
      %v2081 = vmul.f32 %v2066, %v2074
      %v2082 = vmul.f32 %v2067, %v2079
      %v2083 = vsel %vm1648, %v2081, 0.0
      %v2084 = vrot.slane %v2083, 4
      %v2085 = vadd.f32 %v2083, %v2084
      %v2086 = vrot.slane %v2085, 2
      %v2087 = vadd.f32 %v2085, %v2086
      %v2088 = vrot.slane %v2087, 1
      %v2089 = vadd.f32 %v2087, %v2088
      %v2090 = vsel %vm1648, %v2082, 0.0
      %v2091 = vrot.slane %v2090, 4
      %v2092 = vadd.f32 %v2090, %v2091
      %v2093 = vrot.slane %v2092, 2
      %v2094 = vadd.f32 %v2092, %v2093
      %v2095 = vrot.slane %v2094, 1
      %v2096 = vadd.f32 %v2094, %v2095
      %2097 = vst.msk [vmem:[#allocation6 + $0x4] sm:$0x1] %vm1932, %v2089
      %2098 = vst.msk [vmem:[#allocation6 + $0xc] sm:$0x1] %vm1932, %v2096
      %s2099 = scalar_lea.vmem [#allocation3], 20
      %v2100 = vld [vmem:[%s2099] sm:$0xf]
      %v2101 = vld [vmem:[%s2099 + $0x20] sm:$0xf]
      %s2102 = scalar_lea.vmem [#allocation4], 20
      %v2103 = vld [vmem:[%s2102] sm:$0xf]
      %v2104 = vld [vmem:[%s2102 + $0x20] sm:$0xf]
      %v2105 = vmul.f32 %v2100, %v2066
      %v2106 = vmul.f32 %v2101, %v2067
      %v2107 = vadd.f32 %v2105, %v2103
      %v2108 = vadd.f32 %v2106, %v2104
      %s2109 = scalar_lea.vmem [#allocation5], 20
      %v2110 = vld [vmem:[%s2109] sm:$0xf]
      %v2111 = vld [vmem:[%s2109 + $0x20] sm:$0xf]
      %2113 = vset.pattern.permute.xlu0 0
      %2114 = vperm.xlu0 %2113, %v2110
      %v2115 = vpop.permute.xlu0 %2114
      %2118 = vset.pattern.permute.xlu0 0
      %2119 = vperm.xlu0 %2118, %v2111
      %v2120 = vpop.permute.xlu0 %2119
      %v2122 = vmul.f32 %v2107, %v2115
      %v2123 = vmul.f32 %v2108, %v2120
      %v2124 = vsel %vm1648, %v2122, 0.0
      %v2125 = vrot.slane %v2124, 4
      %v2126 = vadd.f32 %v2124, %v2125
      %v2127 = vrot.slane %v2126, 2
      %v2128 = vadd.f32 %v2126, %v2127
      %v2129 = vrot.slane %v2128, 1
      %v2130 = vadd.f32 %v2128, %v2129
      %v2131 = vsel %vm1648, %v2123, 0.0
      %v2132 = vrot.slane %v2131, 4
      %v2133 = vadd.f32 %v2131, %v2132
      %v2134 = vrot.slane %v2133, 2
      %v2135 = vadd.f32 %v2133, %v2134
      %v2136 = vrot.slane %v2135, 1
      %v2137 = vadd.f32 %v2135, %v2136
      %2138 = vst.msk [vmem:[#allocation6 + $0x5] sm:$0x1] %vm1932, %v2130
      %2139 = vst.msk [vmem:[#allocation6 + $0xd] sm:$0x1] %vm1932, %v2137
      %s2140 = scalar_lea.vmem [#allocation3], 24
      %v2141 = vld [vmem:[%s2140] sm:$0xf]
      %v2142 = vld [vmem:[%s2140 + $0x20] sm:$0xf]
      %s2143 = scalar_lea.vmem [#allocation4], 24
      %v2144 = vld [vmem:[%s2143] sm:$0xf]
      %v2145 = vld [vmem:[%s2143 + $0x20] sm:$0xf]
      %v2146 = vmul.f32 %v2141, %v2107
      %v2147 = vmul.f32 %v2142, %v2108
      %v2148 = vadd.f32 %v2146, %v2144
      %v2149 = vadd.f32 %v2147, %v2145
      %s2150 = scalar_lea.vmem [#allocation5], 24
      %v2151 = vld [vmem:[%s2150] sm:$0xf]
      %v2152 = vld [vmem:[%s2150 + $0x20] sm:$0xf]
      %2154 = vset.pattern.permute.xlu0 0
      %2155 = vperm.xlu0 %2154, %v2151
      %v2156 = vpop.permute.xlu0 %2155
      %2159 = vset.pattern.permute.xlu0 0
      %2160 = vperm.xlu0 %2159, %v2152
      %v2161 = vpop.permute.xlu0 %2160
      %v2163 = vmul.f32 %v2148, %v2156
      %v2164 = vmul.f32 %v2149, %v2161
      %v2165 = vsel %vm1648, %v2163, 0.0
      %v2166 = vrot.slane %v2165, 4
      %v2167 = vadd.f32 %v2165, %v2166
      %v2168 = vrot.slane %v2167, 2
      %v2169 = vadd.f32 %v2167, %v2168
      %v2170 = vrot.slane %v2169, 1
      %v2171 = vadd.f32 %v2169, %v2170
      %v2172 = vsel %vm1648, %v2164, 0.0
      %v2173 = vrot.slane %v2172, 4
      %v2174 = vadd.f32 %v2172, %v2173
      %v2175 = vrot.slane %v2174, 2
      %v2176 = vadd.f32 %v2174, %v2175
      %v2177 = vrot.slane %v2176, 1
      %v2178 = vadd.f32 %v2176, %v2177
      %2179 = vst.msk [vmem:[#allocation6 + $0x6] sm:$0x1] %vm1932, %v2171
      %2180 = vst.msk [vmem:[#allocation6 + $0xe] sm:$0x1] %vm1932, %v2178
      %s2181 = scalar_lea.vmem [#allocation3], 28
      %v2182 = vld [vmem:[%s2181] sm:$0xf]
      %v2183 = vld [vmem:[%s2181 + $0x20] sm:$0xf]
      %s2184 = scalar_lea.vmem [#allocation4], 28
      %v2185 = vld [vmem:[%s2184] sm:$0xf]
      %v2186 = vld [vmem:[%s2184 + $0x20] sm:$0xf]
      %v2187 = vmul.f32 %v2182, %v2148
      %v2188 = vmul.f32 %v2183, %v2149
      %v2189 = vadd.f32 %v2187, %v2185
      %v2190 = vadd.f32 %v2188, %v2186
      %s2191 = scalar_lea.vmem [#allocation5], 28
      %v2192 = vld [vmem:[%s2191] sm:$0xf]
      %v2193 = vld [vmem:[%s2191 + $0x20] sm:$0xf]
      %2195 = vset.pattern.permute.xlu0 0
      %2196 = vperm.xlu0 %2195, %v2192
      %v2197 = vpop.permute.xlu0 %2196
      %2200 = vset.pattern.permute.xlu0 0
      %2201 = vperm.xlu0 %2200, %v2193
      %v2202 = vpop.permute.xlu0 %2201
      %v2204 = vmul.f32 %v2189, %v2197
      %v2205 = vmul.f32 %v2190, %v2202
      %v2206 = vsel %vm1648, %v2204, 0.0
      %v2207 = vrot.slane %v2206, 4
      %v2208 = vadd.f32 %v2206, %v2207
      %v2209 = vrot.slane %v2208, 2
      %v2210 = vadd.f32 %v2208, %v2209
      %v2211 = vrot.slane %v2210, 1
      %v2212 = vadd.f32 %v2210, %v2211
      %v2213 = vsel %vm1648, %v2205, 0.0
      %v2214 = vrot.slane %v2213, 4
      %v2215 = vadd.f32 %v2213, %v2214
      %v2216 = vrot.slane %v2215, 2
      %v2217 = vadd.f32 %v2215, %v2216
      %v2218 = vrot.slane %v2217, 1
      %v2219 = vadd.f32 %v2217, %v2218
      %2220 = vst.msk [vmem:[#allocation6 + $0x7] sm:$0x1] %vm1932, %v2212
      %2221 = vst.msk [vmem:[#allocation6 + $0xf] sm:$0x1] %vm1932, %v2219
      %v2222 = vld [vmem:[#allocation6] sm:$0xff]
      %v2223 = vld [vmem:[#allocation6 + $0x8] sm:$0xff]
      %v2224 = vld [vmem:[%s633] sm:$0x1]
      %v2226 = vlaneseq
      %v2227 = vshrl.u32 %v2226, 7
      %v2228 = vsub.s32 0, %v2227
      %v2229 = vrot.slane %v2224, %v2228
      %v2231 = vmul.f32 %v863, %v2229
      %v2232 = vmul.f32 %v864, %v2229
      %v2233 = vadd.f32 %v2222, %v2231
      %v2234 = vadd.f32 %v2223, %v2232
      %2237 = vrot.lane.b32.xlu0 %v783, 64
      %v2238 = vpop.permute.xlu0 %2237
      %2239 = vrot.lane.b32.xlu0 %v784, 64
      %v2240 = vpop.permute.xlu0 %2239
      %v2243 = vmul.f32 %v2233, %v2238
      %v2244 = vmul.f32 %v2234, %v2240
      %v2245 = vpack.c.bf16 %v2244, %v2243
      %v2246 = vld [vmem:[%s638] sm:$0xf]
      %v2247 = vld [vmem:[%s638 + $0x4] sm:$0xf]
      %v2248 = vld [vmem:[%s638 + $0x8] sm:$0xf]
      %v2249 = vld [vmem:[%s638 + $0xc] sm:$0xf]
      %v2250 = vld [vmem:[%s638 + $0x10] sm:$0xf]
      %v2251 = vld [vmem:[%s638 + $0x14] sm:$0xf]
      %v2252 = vld [vmem:[%s638 + $0x18] sm:$0xf]
      %v2253 = vld [vmem:[%s638 + $0x1c] sm:$0xf]
      %v2262 = vunpack.c.l.b16 %v2246
      %v2263 = vunpack.c.l.b16 %v2247
      %v2264 = vunpack.c.l.b16 %v2248
      %v2265 = vunpack.c.l.b16 %v2249
      %v2266 = vunpack.c.l.b16 %v2250
      %v2267 = vunpack.c.l.b16 %v2251
      %v2268 = vunpack.c.l.b16 %v2252
      %v2269 = vunpack.c.l.b16 %v2253
      %v2270 = vpack.c.b16 %v2263, %v2262
      %v2271 = vpack.c.b16 %v2265, %v2264
      %v2272 = vpack.c.b16 %v2267, %v2266
      %v2273 = vpack.c.b16 %v2269, %v2268
      %v2279 = vsel %vm898, %v2245, 0
      %2281 = vmatprep.subr.bf16.mxu0 0
      %2282 = vmatpush1.bf16.msra.mxu0 0
      %2283 = vmatprep.subr.bf16.mxu0 0
      %2284 = vmatpush1.bf16.msra.mxu0 0
      %2285 = vmatprep.subr.bf16.mxu0 0
      %2286 = vmatpush1.bf16.msra.mxu0 0
      %2287 = vmatprep.subr.bf16.mxu0 0
      %2288 = vmatpush1.bf16.msra.mxu0 0
      %2289 = vmatprep.subr.bf16.mxu0 0
      %2290 = vmatpush1.bf16.msra.mxu0 %v2273
      %2291 = vmatprep.subr.bf16.mxu0 0
      %2292 = vmatpush1.bf16.msra.mxu0 %v2272
      %2293 = vmatprep.subr.bf16.mxu0 0
      %2294 = vmatpush1.bf16.msra.mxu0 %v2271
      %2295 = vmatprep.subr.bf16.mxu0 0
      %2296 = vmatpush1.bf16.msra.mxu0 %v2270
      %2297 = vmatprep.subr.bf16.mxu0 0
      %2298 = vmatpush2.bf16.msra.mxu0 0
      %2299 = vmatprep.subr.bf16.mxu0 0
      %2300 = vmatpush2.bf16.msra.mxu0 0
      %2301 = vmatprep.subr.bf16.mxu0 0
      %2302 = vmatpush2.bf16.msra.mxu0 0
      %2303 = vmatprep.subr.bf16.mxu0 0
      %2304 = vmatpush2.bf16.msra.mxu0 0
      %2305 = vmatprep.subr.bf16.mxu0 0
      %2306 = vmatpush2.bf16.msra.mxu0 0
      %2307 = vmatprep.subr.bf16.mxu0 0
      %2308 = vmatpush2.bf16.msra.mxu0 0
      %2309 = vmatprep.subr.bf16.mxu0 0
      %2310 = vmatpush2.bf16.msra.mxu0 0
      %2311 = vmatprep.subr.bf16.mxu0 0
      %2312 = vmatpush2.bf16.msra.mxu0 0
      %2313 = vmatprep.mubr.bf16.mxu0 0
      %2314 = vmatmul.mubr.bf16.gmra.mxu0 %v2279
      %v2315 = vpop.f32.mrf.mxu0
      %v2316 = vadd.f32 0.0, %v2315
      %v2317 = vpop.f32.mrf.mxu0
      %v2318 = vpop.f32.mrf.mxu0
      %v2319 = vadd.f32 0.0, %v2318
      %v2320 = vpop.f32.mrf.mxu0
      %2321 = vdwg.mxu0
      %v2322 = vmul.f32 %v2316, 0.5
      %v2323 = vmul.f32 %v2319, 0.5
      %v2324 = vmul.f32 %v2316, 0.044715
      %v2325 = vmul.f32 %v2319, 0.044715
      %v2326 = vmul.f32 %v2324, %v2316
      %v2327 = vmul.f32 %v2325, %v2319
      %v2328 = vmul.f32 %v2326, %v2316
      %v2329 = vmul.f32 %v2327, %v2319
      %v2330 = vadd.f32 %v2316, %v2328
      %v2331 = vadd.f32 %v2319, %v2329
      %v2332 = vmul.f32 %v2330, 0.7978846
      %v2333 = vmul.f32 %v2331, 0.7978846
      %v2334 = vtanh.pop %v2332
      %v2335 = vtanh.pop %v2333
      %v2336 = vadd.f32 %v2334, 1.0
      %v2337 = vadd.f32 %v2335, 1.0
      %v2338 = vmul.f32 %v2322, %v2336
      %v2339 = vmul.f32 %v2323, %v2337
      %v2340 = vpack.c.bf16 %v2339, %v2338
      %v2341 = vld [vmem:[%s643] sm:$0xf]
      %v2342 = vld [vmem:[%s643 + $0x4] sm:$0xf]
      %v2343 = vld [vmem:[%s643 + $0x8] sm:$0xf]
      %v2344 = vld [vmem:[%s643 + $0xc] sm:$0xf]
      %v2345 = vld [vmem:[%s646] sm:$0x1]
      %v2347 = vlaneseq
      %v2348 = vshrl.u32 %v2347, 7
      %v2349 = vsub.s32 0, %v2348
      %v2350 = vrot.slane %v2345, %v2349
      %v2356 = vunpack.c.l.b16 %v2341
      %v2357 = vunpack.c.l.b16 %v2342
      %v2358 = vunpack.c.l.b16 %v2343
      %v2359 = vunpack.c.l.b16 %v2344
      %v2360 = vpack.c.b16 %v2357, %v2356
      %v2361 = vpack.c.b16 %v2359, %v2358
      %v2365 = vsel %vm664, %v2340, 0
      %2367 = vmatprep.subr.bf16.mxu0 0
      %2368 = vmatpush1.bf16.msra.mxu0 0
      %2369 = vmatprep.subr.bf16.mxu0 0
      %2370 = vmatpush1.bf16.msra.mxu0 0
      %2371 = vmatprep.subr.bf16.mxu0 0
      %2372 = vmatpush1.bf16.msra.mxu0 0
      %2373 = vmatprep.subr.bf16.mxu0 0
      %2374 = vmatpush1.bf16.msra.mxu0 0
      %2375 = vmatprep.subr.bf16.mxu0 0
      %2376 = vmatpush1.bf16.msra.mxu0 0
      %2377 = vmatprep.subr.bf16.mxu0 0
      %2378 = vmatpush1.bf16.msra.mxu0 0
      %2379 = vmatprep.subr.bf16.mxu0 0
      %2380 = vmatpush1.bf16.msra.mxu0 %v2361
      %2381 = vmatprep.subr.bf16.mxu0 0
      %2382 = vmatpush1.bf16.msra.mxu0 %v2360
      %2383 = vmatprep.subr.bf16.mxu0 0
      %2384 = vmatpush2.bf16.msra.mxu0 0
      %2385 = vmatprep.subr.bf16.mxu0 0
      %2386 = vmatpush2.bf16.msra.mxu0 0
      %2387 = vmatprep.subr.bf16.mxu0 0
      %2388 = vmatpush2.bf16.msra.mxu0 0
      %2389 = vmatprep.subr.bf16.mxu0 0
      %2390 = vmatpush2.bf16.msra.mxu0 0
      %2391 = vmatprep.subr.bf16.mxu0 0
      %2392 = vmatpush2.bf16.msra.mxu0 0
      %2393 = vmatprep.subr.bf16.mxu0 0
      %2394 = vmatpush2.bf16.msra.mxu0 0
      %2395 = vmatprep.subr.bf16.mxu0 0
      %2396 = vmatpush2.bf16.msra.mxu0 0
      %2397 = vmatprep.subr.bf16.mxu0 0
      %2398 = vmatpush2.bf16.msra.mxu0 0
      %2399 = vmatprep.mubr.bf16.mxu0 0
      %2400 = vmatmul.mubr.bf16.gmra.mxu0 %v2365
      %v2401 = vpop.f32.mrf.mxu0
      %v2402 = vadd.f32 %v2350, %v2401
      %v2403 = vpop.f32.mrf.mxu0
      %v2404 = vpop.f32.mrf.mxu0
      %v2405 = vadd.f32 %v2350, %v2404
      %v2406 = vpop.f32.mrf.mxu0
      %2407 = vdwg.mxu0
      %v2408 = vsub.f32 0.0, %v2402
      %v2409 = vsub.f32 0.0, %v2405
      %v2410 = vmul.f32 %v2408, 1.442695
      %v2411 = vpow.pop %v2410
      %v2412 = vmul.f32 %v2409, 1.442695
      %v2413 = vpow.pop %v2412
      %v2414 = vadd.f32 %v2411, 1.0
      %v2415 = vadd.f32 %v2413, 1.0
      %v2416 = vrcp.pop %v2414
      %v2417 = vmul.f32 1.0, %v2416
      %v2418 = vrcp.pop %v2415
      %v2419 = vmul.f32 1.0, %v2418
      %2422 = vrot.lane.b32.xlu0 %v2417, 96
      %v2423 = vpop.permute.xlu0 %2422
      %2424 = vrot.lane.b32.xlu0 %v2419, 96
      %v2425 = vpop.permute.xlu0 %2424
      %v2428 = vmul.f32 %v2402, %v2423
      %v2429 = vmul.f32 %v2405, %v2425
      %v2430 = vadd.f32 %v2428, %v662
      %v2431 = vadd.f32 %v2429, %v663
      %2432 = vst.msk [vmem:[#allocation2] sm:$0xff] %vm664, %v2430
      %2433 = vst.msk [vmem:[#allocation2 + $0x8] sm:$0xff] %vm664, %v2431
      %p2434 = scmp.eq.s32.totalorder %s29, 1
      // Predicated region
      $region77: #{mamba_forward.4} parent=71 // pred_check
        %p2435 = pneg %p2434
      $region78: #{mamba_forward.4} parent=71 // pred_check_branch
        %2437 = sbr.rel (%p2435) target = $region80
      $region79: #{mamba_forward.4} parent=71 // pred_region
        %v2438 = vsel %vm664, %v2430, 0.0
        %v2439 = vrot.slane %v2438, 4
        %v2440 = vadd.f32 %v2438, %v2439
        %v2441 = vrot.slane %v2440, 2
        %v2442 = vadd.f32 %v2440, %v2441
        %v2443 = vrot.slane %v2442, 1
        %v2444 = vadd.f32 %v2442, %v2443
        %v2445 = vsel %vm664, %v2431, 0.0
        %v2446 = vrot.slane %v2445, 4
        %v2447 = vadd.f32 %v2445, %v2446
        %v2448 = vrot.slane %v2447, 2
        %v2449 = vadd.f32 %v2447, %v2448
        %v2450 = vrot.slane %v2449, 1
        %v2451 = vadd.f32 %v2449, %v2450
        %v2452 = vrcp.pop 8.0
        %v2453 = vmul.f32 %v2444, %v2452
        %v2454 = vmul.f32 %v2451, %v2452
        %vm2455 = vcmask 253952
        %2456 = vst.msk [vmem:[%s650] sm:$0x1] %vm2455, %v2453
        %2457 = vst.msk [vmem:[%s650 + $0x1] sm:$0x1] %vm2455, %v2454
      $region80: #{mamba_forward.4} parent=71 // pred_fallthru
        _
      %s2458 = smul.u32 2, %s28
      %p2459 = scmp.lt.s32.totalorder %s2458, 1
      %s2460 = scalar_select %p2459, %s2458, 1
      %s2461 = scalar_lea.vmem %s13, %s2460
      // Predicated region
      $region81: #{mamba_forward.4} parent=71 // pred_check
        %p2462 = pneg %p392
      $region82: #{mamba_forward.4} parent=71 // pred_check_branch
        %2464 = sbr.rel (%p2462) target = $region84
      $region83: #{mamba_forward.4} parent=71 // pred_region
        %s2465 = smul.u32 2, %s28
      $region84: #{mamba_forward.4} parent=71 // pred_fallthru
        _
      // Predicated region
      $region85: #{mamba_forward.4} parent=71 // pred_check
        %p2466 = pneg %p392
      $region86: #{mamba_forward.4} parent=71 // pred_check_branch
        %2468 = sbr.rel (%p2466) target = $region88
      $region87: #{mamba_forward.4} parent=71 // pred_region
        %s2469 = smul.u32 2, %s28
        %p2470 = scmp.lt.s32.totalorder %s2469, 1
        %s2471 = scalar_select %p2470, %s2469, 1
        %s2472 = scalar_lea.vmem %s13, %s2471
      $region88: #{mamba_forward.4} parent=71 // pred_fallthru
        _
    $region72: #{mamba_forward.4} parent=5 // pred_fallthru
      _
    %p2473 = scmp.le.s32.totalorder 2, %s19
    // Predicated region
    $region89: #{mamba_forward.4} parent=5 // pred_check
      %p2474 = pneg %p2473
    $region90: #{mamba_forward.4} parent=5 // pred_check_branch
      %2476 = sbr.rel (%p2474) target = $region92
    $region91: #{mamba_forward.4} parent=5 // pred_region
      %s2477 = ssub.s32 %s19, 2
    $region92: #{mamba_forward.4} parent=5 // pred_fallthru
      _
  $region6: #{mamba_forward.4} parent=0 // loop_footer
    %s23 = sadd.s32 1, %s19
  $region7: #{mamba_forward.4} parent=0 // loop_footer_branch
    %18 = sbr.rel target = $region3
  $region8: #{mamba_forward.4} parent=0 // loop_exit
    _

</llo_original>
